<compile_context>
chip_gen: v6e
topology: v6e:2x2x1
jax: 0.10.0
libtpu: 0.0.40
codegen_flags: <defaults>
</compile_context>

<pallas_src>
import functools

import jax
import jax.numpy as jnp
from jax.experimental import pallas as pl
from jax.experimental.pallas import tpu as pltpu


def _linear_add_kernel(x_ref, w_ref, add_ref, bias_ref, o_ref):
    # x_ref: (B, K), w_ref: (N, K), add_ref: (B, N), bias_ref: (1, N), o_ref: (B, N)
    acc = jax.lax.dot_general(
        x_ref[...], w_ref[...],
        dimension_numbers=(((1,), (1,)), ((), ())),   # contract over K (lane dim of both)
        preferred_element_type=jnp.float32,
    )
    # Epilogue adds are free: VALU slots idle while the kernel is MXU/DMA bound.
    o_ref[...] = (acc + add_ref[...] + bias_ref[...]).astype(o_ref.dtype)


@functools.partial(jax.jit, static_argnames=())
def linear_add(x_nchw, weight, bias, add):
    """x_nchw: (B, C, H, W) f32; weight: (N_out, K); bias: (N_out,); add: (B, N_out)."""
    B = x_nchw.shape[0]
    K = x_nchw.shape[1] * x_nchw.shape[2] * x_nchw.shape[3]
    N = weight.shape[0]

    x2d = x_nchw.reshape(B, K)        # torch-style row-major flatten of NCHW
    bias2d = bias.reshape(1, N)       # 2-D, lane-dense; broadcast inside the kernel

    itemsize = jnp.dtype(x_nchw.dtype).itemsize
    bytes_accessed = (B * K + N * K + B * N + N + B * N) * itemsize
    cost = pl.CostEstimate(
        flops=2 * B * K * N,
        transcendentals=0,
        bytes_accessed=bytes_accessed,
    )

    return pl.pallas_call(
        _linear_add_kernel,
        out_shape=jax.ShapeDtypeStruct((B, N), x_nchw.dtype),
        # grid=() (single invocation): whole arrays live in VMEM, no pipeline loop.
        in_specs=[
            pl.BlockSpec(memory_space=pltpu.MemorySpace.VMEM),   # x2d    (B, K)
            pl.BlockSpec(memory_space=pltpu.MemorySpace.VMEM),   # weight (N, K)
            pl.BlockSpec(memory_space=pltpu.MemorySpace.VMEM),   # add    (B, N)
            pl.BlockSpec(memory_space=pltpu.MemorySpace.VMEM),   # bias   (1, N)
        ],
        out_specs=pl.BlockSpec(memory_space=pltpu.MemorySpace.VMEM),
        cost_estimate=cost,
    )(x2d, weight, add, bias2d)


if __name__ == "__main__":
    # Shapes consistent with the module: Linear(3*64*64 = 12288 -> 8), small batch.
    B, C, H, W = 2, 3, 64, 64
    K = C * H * W
    N_OUT = 8

    key = jax.random.PRNGKey(0)
    kx, ka, kw, kb = jax.random.split(key, 4)

    x1 = jax.random.normal(kx, (B, C, H, W), dtype=jnp.float32)
    add = jax.random.normal(ka, (B, N_OUT), dtype=jnp.float32)

    # Deterministic parameter init (nn.Linear-style uniform bound 1/sqrt(K))
    bound = 1.0 / jnp.sqrt(jnp.float32(K))
    weight = jax.random.uniform(kw, (N_OUT, K), jnp.float32, -bound, bound)
    bias = jax.random.uniform(kb, (N_OUT,), jnp.float32, -bound, bound)

    out = linear_add(x1, weight, bias, add)
    out = jax.block_until_ready(out)

    # Reference check in plain JAX
    ref = x1.reshape(B, K) @ weight.T + bias + add
    assert out.shape == (B, N_OUT)
    assert jnp.allclose(out, ref, atol=1e-4, rtol=1e-4)

    print("KERNEL_OK")
</pallas_src>

<mosaic_0001>
module attributes {stable_mosaic.version = 11 : i64} {
  func.func @_linear_add_kernel(%arg0: memref<2x12288xf32, #tpu.memory_space<vmem>>, %arg1: memref<8x12288xf32, #tpu.memory_space<vmem>>, %arg2: memref<2x8xf32, #tpu.memory_space<vmem>>, %arg3: memref<1x8xf32, #tpu.memory_space<vmem>>, %arg4: memref<2x8xf32, #tpu.memory_space<vmem>>) attributes {dimension_semantics = [], scalar_prefetch = 0 : i64, scratch_operands = 0 : i64, tpu.core_type = #tpu.core_type<tc>} {
    %c0 = arith.constant 0 : index
    %c0_0 = arith.constant 0 : index
    %0 = vector.load %arg0[%c0, %c0_0] : memref<2x12288xf32, #tpu.memory_space<vmem>>, vector<2x12288xf32>
    %c0_1 = arith.constant 0 : index
    %c0_2 = arith.constant 0 : index
    %1 = vector.load %arg1[%c0_1, %c0_2] : memref<8x12288xf32, #tpu.memory_space<vmem>>, vector<8x12288xf32>
    %cst = arith.constant dense<0.000000e+00> : vector<2x8xf32>
    %2 = tpu.matmul %0, %1, %cst {dimension_numbers = #tpu.dot_dimension_numbers<[1], [1], [0], [0], [0, 0, 1, 0], [], []>} : vector<2x12288xf32>, vector<8x12288xf32>, vector<2x8xf32> -> vector<2x8xf32>
    %c0_3 = arith.constant 0 : index
    %c0_4 = arith.constant 0 : index
    %3 = vector.load %arg2[%c0_3, %c0_4] : memref<2x8xf32, #tpu.memory_space<vmem>>, vector<2x8xf32>
    %4 = arith.addf %2, %3 : vector<2x8xf32>
    %c0_5 = arith.constant 0 : index
    %c0_6 = arith.constant 0 : index
    %5 = vector.load %arg3[%c0_5, %c0_6] : memref<1x8xf32, #tpu.memory_space<vmem>>, vector<1x8xf32>
    %6 = vector.broadcast %5 : vector<1x8xf32> to vector<2x8xf32>
    %7 = arith.addf %4, %6 : vector<2x8xf32>
    %c0_7 = arith.constant 0 : index
    %c0_8 = arith.constant 0 : index
    %8 = vector.load %arg4[%c0_7, %c0_8] : memref<2x8xf32, #tpu.memory_space<vmem>>, vector<2x8xf32>
    tpu.vector_store %arg4[%c0_7, %c0_8], %7 {strides = array<i32>} : memref<2x8xf32, #tpu.memory_space<vmem>>, vector<2x8xf32>,
    return
  }
}

</mosaic_0001>

<llo_original>
// kernel: linear_add.1
$region0: #{linear_add.1}
  #allocation0 [shape = 'u32[]', space=smem, size = 0x4, offset = 0x4, fixed_abs, tag = 'smem constant byte address 0x4 - core index']
  #allocation1 [shape = 'u32[144,128]{1,0:T(1,128)}', space=vmem, size = 0x12000, scoped, tag = 'internal scratch']
  %s0 = inlined_call_operand.vmem [shape: f32[2,12288], index: 0, kind: input, shape index: {}]
  %s1 = inlined_call_operand.hbm [shape: f32[8,12288], index: 1, kind: input, shape index: {}]
  %s2 = inlined_call_operand.vmem [shape: f32[2,8], index: 2, kind: input, shape index: {}]
  %s3 = inlined_call_operand.vmem [shape: f32[1,8], index: 3, kind: input, shape index: {}]
  %s4 = inlined_call_operand.hbm [shape: f32[2,8], index: 4, kind: output, shape index: {}]
  %s5 = sld [smem:[#allocation0]]
  $region30: #{linear_add.1} parent=0
    _
  %s7 = ssub.s32 1, %s5
  %s8 = scalar_select 0, %s7, %s5
  $region1: #{linear_add.1} parent=0
    #allocation2 [shape = 'u8[393216]{0}', space=vmem, size = 0x60000, scoped, tag = 'input window, operand 1, single buffered']
    #allocation3 [shape = 's32[1]{0}', space=sflag, size = 0x4, scoped, tag = 'scoped memory for linear_add.1']
    #allocation4 [shape = 's32[1]{0}', space=sflag, size = 0x4, scoped, tag = 'scoped memory for linear_add.1']
    #allocation5 [shape = 'u8[1024]{0}', space=vmem, size = 0x400, scoped, tag = 'output window, operand 0, single buffered']
    %9 = vsyncpa [#allocation3], 0
    %10 = vsyncpa [#allocation4], 0
    // Predicated region
    $region2: #{linear_add.1} parent=1 // pred_check
      _
    $region3: #{linear_add.1} parent=1 // pred_check_branch
      %12 = sbr.rel (0) target = $region5
    $region4: #{linear_add.1} parent=1 // pred_region
      _
    $region5: #{linear_add.1} parent=1 // pred_fallthru
      _
    // Predicated region
    $region6: #{linear_add.1} parent=1 // pred_check
      _
    $region7: #{linear_add.1} parent=1 // pred_check_branch
      %14 = sbr.rel (0) target = $region9
    $region8: #{linear_add.1} parent=1 // pred_region
      %s16 = ssub.s32 12288, 12288
      %17 = vsyncadd [#allocation3], %s16
      %s19 = sshll.u32 [#allocation2], 4
      %s20 = int_to_ptr.vmem [resolvable:$true] %s19
      %22 = dma.hbm_to_vmem [thread:$0]  %s1, 12288, %s20, [#allocation3]
    $region9: #{linear_add.1} parent=1 // pred_fallthru
      _
    // Predicated region
    $region10: #{linear_add.1} parent=1 // pred_check
      _
    $region11: #{linear_add.1} parent=1 // pred_check_branch
      %24 = sbr.rel (0) target = $region13
    $region12: #{linear_add.1} parent=1 // pred_region
      _
    $region13: #{linear_add.1} parent=1 // pred_fallthru
      _
    // Predicated region
    $region14: #{linear_add.1} parent=1 // pred_check
      _
    $region15: #{linear_add.1} parent=1 // pred_check_branch
      %26 = sbr.rel (0) target = $region17
    $region16: #{linear_add.1} parent=1 // pred_region
      _
    $region17: #{linear_add.1} parent=1 // pred_fallthru
      _
    // Predicated region
    $region18: #{linear_add.1} parent=1 // pred_check
      _
    $region19: #{linear_add.1} parent=1 // pred_check_branch
      %28 = sbr.rel (0) target = $region21
    $region20: #{linear_add.1} parent=1 // pred_region
      %29 = dma.done [#allocation3], 12288
    $region21: #{linear_add.1} parent=1 // pred_fallthru
      _
    %v30 = vld [vmem:[%s0] sm:$0xff]
    %v31 = vld [vmem:[%s0 + $0x8] sm:$0xff]
    %v32 = vld [vmem:[%s0 + $0x10] sm:$0xff]
    %v33 = vld [vmem:[%s0 + $0x18] sm:$0xff]
    %v34 = vld [vmem:[%s0 + $0x20] sm:$0xff]
    %v35 = vld [vmem:[%s0 + $0x28] sm:$0xff]
    %v36 = vld [vmem:[%s0 + $0x30] sm:$0xff]
    %v37 = vld [vmem:[%s0 + $0x38] sm:$0xff]
    %v38 = vld [vmem:[%s0 + $0x40] sm:$0xff]
    %v39 = vld [vmem:[%s0 + $0x48] sm:$0xff]
    %v40 = vld [vmem:[%s0 + $0x50] sm:$0xff]
    %v41 = vld [vmem:[%s0 + $0x58] sm:$0xff]
    %v42 = vld [vmem:[%s0 + $0x60] sm:$0xff]
    %v43 = vld [vmem:[%s0 + $0x68] sm:$0xff]
    %v44 = vld [vmem:[%s0 + $0x70] sm:$0xff]
    %v45 = vld [vmem:[%s0 + $0x78] sm:$0xff]
    %v46 = vld [vmem:[%s0 + $0x80] sm:$0xff]
    %v47 = vld [vmem:[%s0 + $0x88] sm:$0xff]
    %v48 = vld [vmem:[%s0 + $0x90] sm:$0xff]
    %v49 = vld [vmem:[%s0 + $0x98] sm:$0xff]
    %v50 = vld [vmem:[%s0 + $0xa0] sm:$0xff]
    %v51 = vld [vmem:[%s0 + $0xa8] sm:$0xff]
    %v52 = vld [vmem:[%s0 + $0xb0] sm:$0xff]
    %v53 = vld [vmem:[%s0 + $0xb8] sm:$0xff]
    %v54 = vld [vmem:[#allocation2] sm:$0xff]
    %v55 = vld [vmem:[#allocation2 + $0x8] sm:$0xff]
    %v56 = vld [vmem:[#allocation2 + $0x10] sm:$0xff]
    %v57 = vld [vmem:[#allocation2 + $0x18] sm:$0xff]
    %v58 = vld [vmem:[#allocation2 + $0x20] sm:$0xff]
    %v59 = vld [vmem:[#allocation2 + $0x28] sm:$0xff]
    %v60 = vld [vmem:[#allocation2 + $0x30] sm:$0xff]
    %v61 = vld [vmem:[#allocation2 + $0x38] sm:$0xff]
    %v62 = vld [vmem:[#allocation2 + $0x40] sm:$0xff]
    %v63 = vld [vmem:[#allocation2 + $0x48] sm:$0xff]
    %v64 = vld [vmem:[#allocation2 + $0x50] sm:$0xff]
    %v65 = vld [vmem:[#allocation2 + $0x58] sm:$0xff]
    %v66 = vld [vmem:[#allocation2 + $0x60] sm:$0xff]
    %v67 = vld [vmem:[#allocation2 + $0x68] sm:$0xff]
    %v68 = vld [vmem:[#allocation2 + $0x70] sm:$0xff]
    %v69 = vld [vmem:[#allocation2 + $0x78] sm:$0xff]
    %v70 = vld [vmem:[#allocation2 + $0x80] sm:$0xff]
    %v71 = vld [vmem:[#allocation2 + $0x88] sm:$0xff]
    %v72 = vld [vmem:[#allocation2 + $0x90] sm:$0xff]
    %v73 = vld [vmem:[#allocation2 + $0x98] sm:$0xff]
    %v74 = vld [vmem:[#allocation2 + $0xa0] sm:$0xff]
    %v75 = vld [vmem:[#allocation2 + $0xa8] sm:$0xff]
    %v76 = vld [vmem:[#allocation2 + $0xb0] sm:$0xff]
    %v77 = vld [vmem:[#allocation2 + $0xb8] sm:$0xff]
    %v78 = vld [vmem:[#allocation2 + $0xc0] sm:$0xff]
    %v79 = vld [vmem:[#allocation2 + $0xc8] sm:$0xff]
    %v80 = vld [vmem:[#allocation2 + $0xd0] sm:$0xff]
    %v81 = vld [vmem:[#allocation2 + $0xd8] sm:$0xff]
    %v82 = vld [vmem:[#allocation2 + $0xe0] sm:$0xff]
    %v83 = vld [vmem:[#allocation2 + $0xe8] sm:$0xff]
    %v84 = vld [vmem:[#allocation2 + $0xf0] sm:$0xff]
    %v85 = vld [vmem:[#allocation2 + $0xf8] sm:$0xff]
    %v86 = vld [vmem:[#allocation2 + $0x100] sm:$0xff]
    %v87 = vld [vmem:[#allocation2 + $0x108] sm:$0xff]
    %v88 = vld [vmem:[#allocation2 + $0x110] sm:$0xff]
    %v89 = vld [vmem:[#allocation2 + $0x118] sm:$0xff]
    %v90 = vld [vmem:[#allocation2 + $0x120] sm:$0xff]
    %v91 = vld [vmem:[#allocation2 + $0x128] sm:$0xff]
    %v92 = vld [vmem:[#allocation2 + $0x130] sm:$0xff]
    %v93 = vld [vmem:[#allocation2 + $0x138] sm:$0xff]
    %v94 = vld [vmem:[#allocation2 + $0x140] sm:$0xff]
    %v95 = vld [vmem:[#allocation2 + $0x148] sm:$0xff]
    %v96 = vld [vmem:[#allocation2 + $0x150] sm:$0xff]
    %v97 = vld [vmem:[#allocation2 + $0x158] sm:$0xff]
    %v98 = vld [vmem:[#allocation2 + $0x160] sm:$0xff]
    %v99 = vld [vmem:[#allocation2 + $0x168] sm:$0xff]
    %v100 = vld [vmem:[#allocation2 + $0x170] sm:$0xff]
    %v101 = vld [vmem:[#allocation2 + $0x178] sm:$0xff]
    %v102 = vld [vmem:[#allocation2 + $0x180] sm:$0xff]
    %v103 = vld [vmem:[#allocation2 + $0x188] sm:$0xff]
    %v104 = vld [vmem:[#allocation2 + $0x190] sm:$0xff]
    %v105 = vld [vmem:[#allocation2 + $0x198] sm:$0xff]
    %v106 = vld [vmem:[#allocation2 + $0x1a0] sm:$0xff]
    %v107 = vld [vmem:[#allocation2 + $0x1a8] sm:$0xff]
    %v108 = vld [vmem:[#allocation2 + $0x1b0] sm:$0xff]
    %v109 = vld [vmem:[#allocation2 + $0x1b8] sm:$0xff]
    %v110 = vld [vmem:[#allocation2 + $0x1c0] sm:$0xff]
    %v111 = vld [vmem:[#allocation2 + $0x1c8] sm:$0xff]
    %v112 = vld [vmem:[#allocation2 + $0x1d0] sm:$0xff]
    %v113 = vld [vmem:[#allocation2 + $0x1d8] sm:$0xff]
    %v114 = vld [vmem:[#allocation2 + $0x1e0] sm:$0xff]
    %v115 = vld [vmem:[#allocation2 + $0x1e8] sm:$0xff]
    %v116 = vld [vmem:[#allocation2 + $0x1f0] sm:$0xff]
    %v117 = vld [vmem:[#allocation2 + $0x1f8] sm:$0xff]
    %v118 = vld [vmem:[#allocation2 + $0x200] sm:$0xff]
    %v119 = vld [vmem:[#allocation2 + $0x208] sm:$0xff]
    %v120 = vld [vmem:[#allocation2 + $0x210] sm:$0xff]
    %v121 = vld [vmem:[#allocation2 + $0x218] sm:$0xff]
    %v122 = vld [vmem:[#allocation2 + $0x220] sm:$0xff]
    %v123 = vld [vmem:[#allocation2 + $0x228] sm:$0xff]
    %v124 = vld [vmem:[#allocation2 + $0x230] sm:$0xff]
    %v125 = vld [vmem:[#allocation2 + $0x238] sm:$0xff]
    %v126 = vld [vmem:[#allocation2 + $0x240] sm:$0xff]
    %v127 = vld [vmem:[#allocation2 + $0x248] sm:$0xff]
    %v128 = vld [vmem:[#allocation2 + $0x250] sm:$0xff]
    %v129 = vld [vmem:[#allocation2 + $0x258] sm:$0xff]
    %v130 = vld [vmem:[#allocation2 + $0x260] sm:$0xff]
    %v131 = vld [vmem:[#allocation2 + $0x268] sm:$0xff]
    %v132 = vld [vmem:[#allocation2 + $0x270] sm:$0xff]
    %v133 = vld [vmem:[#allocation2 + $0x278] sm:$0xff]
    %v134 = vld [vmem:[#allocation2 + $0x280] sm:$0xff]
    %v135 = vld [vmem:[#allocation2 + $0x288] sm:$0xff]
    %v136 = vld [vmem:[#allocation2 + $0x290] sm:$0xff]
    %v137 = vld [vmem:[#allocation2 + $0x298] sm:$0xff]
    %v138 = vld [vmem:[#allocation2 + $0x2a0] sm:$0xff]
    %v139 = vld [vmem:[#allocation2 + $0x2a8] sm:$0xff]
    %v140 = vld [vmem:[#allocation2 + $0x2b0] sm:$0xff]
    %v141 = vld [vmem:[#allocation2 + $0x2b8] sm:$0xff]
    %v142 = vld [vmem:[#allocation2 + $0x2c0] sm:$0xff]
    %v143 = vld [vmem:[#allocation2 + $0x2c8] sm:$0xff]
    %v144 = vld [vmem:[#allocation2 + $0x2d0] sm:$0xff]
    %v145 = vld [vmem:[#allocation2 + $0x2d8] sm:$0xff]
    %v146 = vld [vmem:[#allocation2 + $0x2e0] sm:$0xff]
    %v147 = vld [vmem:[#allocation2 + $0x2e8] sm:$0xff]
    %v148 = vld [vmem:[#allocation2 + $0x2f0] sm:$0xff]
    %v149 = vld [vmem:[#allocation2 + $0x2f8] sm:$0xff]
    %v150 = vld [vmem:[%s2] sm:$0x3]
    %v175 = vcombine.high %v30, %v30
    %v177 = vunpack.c.l.s4 1983009808
    %v178 = vunpack.c.0.s8 %v177
    %v179 = vlaneseq
    %v180 = vshrl.u32 %v179, 7
    %v181 = vsub.s32 %v178, %v180
    %v182 = vrot.slane %v30, %v181
    %v184 = vunpack.c.l.s4 1983009808
    %v185 = vunpack.c.0.s8 %v184
    %v186 = vlaneseq
    %v187 = vshrl.u32 %v186, 7
    %v188 = vsub.s32 %v185, %v187
    %v189 = vrot.slane %v175, %v188
    %v190 = vcombine.high %v182, %v182
    %v191 = vcombine.high %v189, %v189
    %v192 = vcombine.high %v31, %v31
    %v194 = vunpack.c.l.s4 1983009808
    %v195 = vunpack.c.0.s8 %v194
    %v196 = vlaneseq
    %v197 = vshrl.u32 %v196, 7
    %v198 = vsub.s32 %v195, %v197
    %v199 = vrot.slane %v31, %v198
    %v201 = vunpack.c.l.s4 1983009808
    %v202 = vunpack.c.0.s8 %v201
    %v203 = vlaneseq
    %v204 = vshrl.u32 %v203, 7
    %v205 = vsub.s32 %v202, %v204
    %v206 = vrot.slane %v192, %v205
    %v207 = vcombine.high %v199, %v199
    %v208 = vcombine.high %v206, %v206
    %v209 = vcombine.high %v32, %v32
    %v211 = vunpack.c.l.s4 1983009808
    %v212 = vunpack.c.0.s8 %v211
    %v213 = vlaneseq
    %v214 = vshrl.u32 %v213, 7
    %v215 = vsub.s32 %v212, %v214
    %v216 = vrot.slane %v32, %v215
    %v218 = vunpack.c.l.s4 1983009808
    %v219 = vunpack.c.0.s8 %v218
    %v220 = vlaneseq
    %v221 = vshrl.u32 %v220, 7
    %v222 = vsub.s32 %v219, %v221
    %v223 = vrot.slane %v209, %v222
    %v224 = vcombine.high %v216, %v216
    %v225 = vcombine.high %v223, %v223
    %v226 = vcombine.high %v33, %v33
    %v228 = vunpack.c.l.s4 1983009808
    %v229 = vunpack.c.0.s8 %v228
    %v230 = vlaneseq
    %v231 = vshrl.u32 %v230, 7
    %v232 = vsub.s32 %v229, %v231
    %v233 = vrot.slane %v33, %v232
    %v235 = vunpack.c.l.s4 1983009808
    %v236 = vunpack.c.0.s8 %v235
    %v237 = vlaneseq
    %v238 = vshrl.u32 %v237, 7
    %v239 = vsub.s32 %v236, %v238
    %v240 = vrot.slane %v226, %v239
    %v241 = vcombine.high %v233, %v233
    %v242 = vcombine.high %v240, %v240
    %v243 = vcombine.high %v34, %v34
    %v245 = vunpack.c.l.s4 1983009808
    %v246 = vunpack.c.0.s8 %v245
    %v247 = vlaneseq
    %v248 = vshrl.u32 %v247, 7
    %v249 = vsub.s32 %v246, %v248
    %v250 = vrot.slane %v34, %v249
    %v252 = vunpack.c.l.s4 1983009808
    %v253 = vunpack.c.0.s8 %v252
    %v254 = vlaneseq
    %v255 = vshrl.u32 %v254, 7
    %v256 = vsub.s32 %v253, %v255
    %v257 = vrot.slane %v243, %v256
    %v258 = vcombine.high %v250, %v250
    %v259 = vcombine.high %v257, %v257
    %v260 = vcombine.high %v35, %v35
    %v262 = vunpack.c.l.s4 1983009808
    %v263 = vunpack.c.0.s8 %v262
    %v264 = vlaneseq
    %v265 = vshrl.u32 %v264, 7
    %v266 = vsub.s32 %v263, %v265
    %v267 = vrot.slane %v35, %v266
    %v269 = vunpack.c.l.s4 1983009808
    %v270 = vunpack.c.0.s8 %v269
    %v271 = vlaneseq
    %v272 = vshrl.u32 %v271, 7
    %v273 = vsub.s32 %v270, %v272
    %v274 = vrot.slane %v260, %v273
    %v275 = vcombine.high %v267, %v267
    %v276 = vcombine.high %v274, %v274
    %v277 = vcombine.high %v36, %v36
    %v279 = vunpack.c.l.s4 1983009808
    %v280 = vunpack.c.0.s8 %v279
    %v281 = vlaneseq
    %v282 = vshrl.u32 %v281, 7
    %v283 = vsub.s32 %v280, %v282
    %v284 = vrot.slane %v36, %v283
    %v286 = vunpack.c.l.s4 1983009808
    %v287 = vunpack.c.0.s8 %v286
    %v288 = vlaneseq
    %v289 = vshrl.u32 %v288, 7
    %v290 = vsub.s32 %v287, %v289
    %v291 = vrot.slane %v277, %v290
    %v292 = vcombine.high %v284, %v284
    %v293 = vcombine.high %v291, %v291
    %v294 = vcombine.high %v37, %v37
    %v296 = vunpack.c.l.s4 1983009808
    %v297 = vunpack.c.0.s8 %v296
    %v298 = vlaneseq
    %v299 = vshrl.u32 %v298, 7
    %v300 = vsub.s32 %v297, %v299
    %v301 = vrot.slane %v37, %v300
    %v303 = vunpack.c.l.s4 1983009808
    %v304 = vunpack.c.0.s8 %v303
    %v305 = vlaneseq
    %v306 = vshrl.u32 %v305, 7
    %v307 = vsub.s32 %v304, %v306
    %v308 = vrot.slane %v294, %v307
    %v309 = vcombine.high %v301, %v301
    %v310 = vcombine.high %v308, %v308
    %v311 = vcombine.high %v38, %v38
    %v313 = vunpack.c.l.s4 1983009808
    %v314 = vunpack.c.0.s8 %v313
    %v315 = vlaneseq
    %v316 = vshrl.u32 %v315, 7
    %v317 = vsub.s32 %v314, %v316
    %v318 = vrot.slane %v38, %v317
    %v320 = vunpack.c.l.s4 1983009808
    %v321 = vunpack.c.0.s8 %v320
    %v322 = vlaneseq
    %v323 = vshrl.u32 %v322, 7
    %v324 = vsub.s32 %v321, %v323
    %v325 = vrot.slane %v311, %v324
    %v326 = vcombine.high %v318, %v318
    %v327 = vcombine.high %v325, %v325
    %v328 = vcombine.high %v39, %v39
    %v330 = vunpack.c.l.s4 1983009808
    %v331 = vunpack.c.0.s8 %v330
    %v332 = vlaneseq
    %v333 = vshrl.u32 %v332, 7
    %v334 = vsub.s32 %v331, %v333
    %v335 = vrot.slane %v39, %v334
    %v337 = vunpack.c.l.s4 1983009808
    %v338 = vunpack.c.0.s8 %v337
    %v339 = vlaneseq
    %v340 = vshrl.u32 %v339, 7
    %v341 = vsub.s32 %v338, %v340
    %v342 = vrot.slane %v328, %v341
    %v343 = vcombine.high %v335, %v335
    %v344 = vcombine.high %v342, %v342
    %v345 = vcombine.high %v40, %v40
    %v347 = vunpack.c.l.s4 1983009808
    %v348 = vunpack.c.0.s8 %v347
    %v349 = vlaneseq
    %v350 = vshrl.u32 %v349, 7
    %v351 = vsub.s32 %v348, %v350
    %v352 = vrot.slane %v40, %v351
    %v354 = vunpack.c.l.s4 1983009808
    %v355 = vunpack.c.0.s8 %v354
    %v356 = vlaneseq
    %v357 = vshrl.u32 %v356, 7
    %v358 = vsub.s32 %v355, %v357
    %v359 = vrot.slane %v345, %v358
    %v360 = vcombine.high %v352, %v352
    %v361 = vcombine.high %v359, %v359
    %v362 = vcombine.high %v41, %v41
    %v364 = vunpack.c.l.s4 1983009808
    %v365 = vunpack.c.0.s8 %v364
    %v366 = vlaneseq
    %v367 = vshrl.u32 %v366, 7
    %v368 = vsub.s32 %v365, %v367
    %v369 = vrot.slane %v41, %v368
    %v371 = vunpack.c.l.s4 1983009808
    %v372 = vunpack.c.0.s8 %v371
    %v373 = vlaneseq
    %v374 = vshrl.u32 %v373, 7
    %v375 = vsub.s32 %v372, %v374
    %v376 = vrot.slane %v362, %v375
    %v377 = vcombine.high %v369, %v369
    %v378 = vcombine.high %v376, %v376
    %v379 = vcombine.high %v42, %v42
    %v381 = vunpack.c.l.s4 1983009808
    %v382 = vunpack.c.0.s8 %v381
    %v383 = vlaneseq
    %v384 = vshrl.u32 %v383, 7
    %v385 = vsub.s32 %v382, %v384
    %v386 = vrot.slane %v42, %v385
    %v388 = vunpack.c.l.s4 1983009808
    %v389 = vunpack.c.0.s8 %v388
    %v390 = vlaneseq
    %v391 = vshrl.u32 %v390, 7
    %v392 = vsub.s32 %v389, %v391
    %v393 = vrot.slane %v379, %v392
    %v394 = vcombine.high %v386, %v386
    %v395 = vcombine.high %v393, %v393
    %v396 = vcombine.high %v43, %v43
    %v398 = vunpack.c.l.s4 1983009808
    %v399 = vunpack.c.0.s8 %v398
    %v400 = vlaneseq
    %v401 = vshrl.u32 %v400, 7
    %v402 = vsub.s32 %v399, %v401
    %v403 = vrot.slane %v43, %v402
    %v405 = vunpack.c.l.s4 1983009808
    %v406 = vunpack.c.0.s8 %v405
    %v407 = vlaneseq
    %v408 = vshrl.u32 %v407, 7
    %v409 = vsub.s32 %v406, %v408
    %v410 = vrot.slane %v396, %v409
    %v411 = vcombine.high %v403, %v403
    %v412 = vcombine.high %v410, %v410
    %v413 = vcombine.high %v44, %v44
    %v415 = vunpack.c.l.s4 1983009808
    %v416 = vunpack.c.0.s8 %v415
    %v417 = vlaneseq
    %v418 = vshrl.u32 %v417, 7
    %v419 = vsub.s32 %v416, %v418
    %v420 = vrot.slane %v44, %v419
    %v422 = vunpack.c.l.s4 1983009808
    %v423 = vunpack.c.0.s8 %v422
    %v424 = vlaneseq
    %v425 = vshrl.u32 %v424, 7
    %v426 = vsub.s32 %v423, %v425
    %v427 = vrot.slane %v413, %v426
    %v428 = vcombine.high %v420, %v420
    %v429 = vcombine.high %v427, %v427
    %v430 = vcombine.high %v45, %v45
    %v432 = vunpack.c.l.s4 1983009808
    %v433 = vunpack.c.0.s8 %v432
    %v434 = vlaneseq
    %v435 = vshrl.u32 %v434, 7
    %v436 = vsub.s32 %v433, %v435
    %v437 = vrot.slane %v45, %v436
    %v439 = vunpack.c.l.s4 1983009808
    %v440 = vunpack.c.0.s8 %v439
    %v441 = vlaneseq
    %v442 = vshrl.u32 %v441, 7
    %v443 = vsub.s32 %v440, %v442
    %v444 = vrot.slane %v430, %v443
    %v445 = vcombine.high %v437, %v437
    %v446 = vcombine.high %v444, %v444
    %v447 = vcombine.high %v46, %v46
    %v449 = vunpack.c.l.s4 1983009808
    %v450 = vunpack.c.0.s8 %v449
    %v451 = vlaneseq
    %v452 = vshrl.u32 %v451, 7
    %v453 = vsub.s32 %v450, %v452
    %v454 = vrot.slane %v46, %v453
    %v456 = vunpack.c.l.s4 1983009808
    %v457 = vunpack.c.0.s8 %v456
    %v458 = vlaneseq
    %v459 = vshrl.u32 %v458, 7
    %v460 = vsub.s32 %v457, %v459
    %v461 = vrot.slane %v447, %v460
    %v462 = vcombine.high %v454, %v454
    %v463 = vcombine.high %v461, %v461
    %v464 = vcombine.high %v47, %v47
    %v466 = vunpack.c.l.s4 1983009808
    %v467 = vunpack.c.0.s8 %v466
    %v468 = vlaneseq
    %v469 = vshrl.u32 %v468, 7
    %v470 = vsub.s32 %v467, %v469
    %v471 = vrot.slane %v47, %v470
    %v473 = vunpack.c.l.s4 1983009808
    %v474 = vunpack.c.0.s8 %v473
    %v475 = vlaneseq
    %v476 = vshrl.u32 %v475, 7
    %v477 = vsub.s32 %v474, %v476
    %v478 = vrot.slane %v464, %v477
    %v479 = vcombine.high %v471, %v471
    %v480 = vcombine.high %v478, %v478
    %v481 = vcombine.high %v48, %v48
    %v483 = vunpack.c.l.s4 1983009808
    %v484 = vunpack.c.0.s8 %v483
    %v485 = vlaneseq
    %v486 = vshrl.u32 %v485, 7
    %v487 = vsub.s32 %v484, %v486
    %v488 = vrot.slane %v48, %v487
    %v490 = vunpack.c.l.s4 1983009808
    %v491 = vunpack.c.0.s8 %v490
    %v492 = vlaneseq
    %v493 = vshrl.u32 %v492, 7
    %v494 = vsub.s32 %v491, %v493
    %v495 = vrot.slane %v481, %v494
    %v496 = vcombine.high %v488, %v488
    %v497 = vcombine.high %v495, %v495
    %v498 = vcombine.high %v49, %v49
    %v500 = vunpack.c.l.s4 1983009808
    %v501 = vunpack.c.0.s8 %v500
    %v502 = vlaneseq
    %v503 = vshrl.u32 %v502, 7
    %v504 = vsub.s32 %v501, %v503
    %v505 = vrot.slane %v49, %v504
    %v507 = vunpack.c.l.s4 1983009808
    %v508 = vunpack.c.0.s8 %v507
    %v509 = vlaneseq
    %v510 = vshrl.u32 %v509, 7
    %v511 = vsub.s32 %v508, %v510
    %v512 = vrot.slane %v498, %v511
    %v513 = vcombine.high %v505, %v505
    %v514 = vcombine.high %v512, %v512
    %v515 = vcombine.high %v50, %v50
    %v517 = vunpack.c.l.s4 1983009808
    %v518 = vunpack.c.0.s8 %v517
    %v519 = vlaneseq
    %v520 = vshrl.u32 %v519, 7
    %v521 = vsub.s32 %v518, %v520
    %v522 = vrot.slane %v50, %v521
    %v524 = vunpack.c.l.s4 1983009808
    %v525 = vunpack.c.0.s8 %v524
    %v526 = vlaneseq
    %v527 = vshrl.u32 %v526, 7
    %v528 = vsub.s32 %v525, %v527
    %v529 = vrot.slane %v515, %v528
    %v530 = vcombine.high %v522, %v522
    %v531 = vcombine.high %v529, %v529
    %v532 = vcombine.high %v51, %v51
    %v534 = vunpack.c.l.s4 1983009808
    %v535 = vunpack.c.0.s8 %v534
    %v536 = vlaneseq
    %v537 = vshrl.u32 %v536, 7
    %v538 = vsub.s32 %v535, %v537
    %v539 = vrot.slane %v51, %v538
    %v541 = vunpack.c.l.s4 1983009808
    %v542 = vunpack.c.0.s8 %v541
    %v543 = vlaneseq
    %v544 = vshrl.u32 %v543, 7
    %v545 = vsub.s32 %v542, %v544
    %v546 = vrot.slane %v532, %v545
    %v547 = vcombine.high %v539, %v539
    %v548 = vcombine.high %v546, %v546
    %v549 = vcombine.high %v52, %v52
    %v551 = vunpack.c.l.s4 1983009808
    %v552 = vunpack.c.0.s8 %v551
    %v553 = vlaneseq
    %v554 = vshrl.u32 %v553, 7
    %v555 = vsub.s32 %v552, %v554
    %v556 = vrot.slane %v52, %v555
    %v558 = vunpack.c.l.s4 1983009808
    %v559 = vunpack.c.0.s8 %v558
    %v560 = vlaneseq
    %v561 = vshrl.u32 %v560, 7
    %v562 = vsub.s32 %v559, %v561
    %v563 = vrot.slane %v549, %v562
    %v564 = vcombine.high %v556, %v556
    %v565 = vcombine.high %v563, %v563
    %v566 = vcombine.high %v53, %v53
    %v568 = vunpack.c.l.s4 1983009808
    %v569 = vunpack.c.0.s8 %v568
    %v570 = vlaneseq
    %v571 = vshrl.u32 %v570, 7
    %v572 = vsub.s32 %v569, %v571
    %v573 = vrot.slane %v53, %v572
    %v575 = vunpack.c.l.s4 1983009808
    %v576 = vunpack.c.0.s8 %v575
    %v577 = vlaneseq
    %v578 = vshrl.u32 %v577, 7
    %v579 = vsub.s32 %v576, %v578
    %v580 = vrot.slane %v566, %v579
    %v581 = vcombine.high %v573, %v573
    %v582 = vcombine.high %v580, %v580
    %679 = vmatprep.subr.mxu0 0.0
    %680 = vmatpush1.xpose.msra.mxu0 0.0
    %681 = vmatprep.subr.mxu0 0.0
    %682 = vmatpush1.xpose.msra.mxu0 0.0
    %683 = vmatprep.subr.mxu0 0.0
    %684 = vmatpush1.xpose.msra.mxu0 0.0
    %685 = vmatprep.subr.mxu0 0.0
    %686 = vmatpush1.xpose.msra.mxu0 0.0
    %687 = vmatprep.subr.mxu0 0.0
    %688 = vmatpush1.xpose.msra.mxu0 0.0
    %689 = vmatprep.subr.mxu0 0.0
    %690 = vmatpush1.xpose.msra.mxu0 0.0
    %691 = vmatprep.subr.mxu0 0.0
    %692 = vmatpush1.xpose.msra.mxu0 0.0
    %693 = vmatprep.subr.mxu0 0.0
    %694 = vmatpush1.xpose.msra.mxu0 0.0
    %695 = vmatprep.subr.mxu0 0.0
    %696 = vmatpush1.xpose.msra.mxu0 0.0
    %697 = vmatprep.subr.mxu0 0.0
    %698 = vmatpush1.xpose.msra.mxu0 0.0
    %699 = vmatprep.subr.mxu0 0.0
    %700 = vmatpush1.xpose.msra.mxu0 0.0
    %701 = vmatprep.subr.mxu0 0.0
    %702 = vmatpush1.xpose.msra.mxu0 0.0
    %703 = vmatprep.subr.mxu0 0.0
    %704 = vmatpush1.xpose.msra.mxu0 0.0
    %705 = vmatprep.subr.mxu0 0.0
    %706 = vmatpush1.xpose.msra.mxu0 0.0
    %707 = vmatprep.subr.mxu0 0.0
    %708 = vmatpush1.xpose.msra.mxu0 0.0
    %709 = vmatprep.subr.mxu0 %v55
    %710 = vmatpush1.xpose.msra.mxu0 %v54
    %711 = vmatprep.subr.mxu0 0.0
    %712 = vmatpush2.xpose.msra.mxu0 0.0
    %713 = vmatprep.subr.mxu0 0.0
    %714 = vmatpush2.xpose.msra.mxu0 0.0
    %715 = vmatprep.subr.mxu0 0.0
    %716 = vmatpush2.xpose.msra.mxu0 0.0
    %717 = vmatprep.subr.mxu0 0.0
    %718 = vmatpush2.xpose.msra.mxu0 0.0
    %719 = vmatprep.subr.mxu0 0.0
    %720 = vmatpush2.xpose.msra.mxu0 0.0
    %721 = vmatprep.subr.mxu0 0.0
    %722 = vmatpush2.xpose.msra.mxu0 0.0
    %723 = vmatprep.subr.mxu0 0.0
    %724 = vmatpush2.xpose.msra.mxu0 0.0
    %725 = vmatprep.subr.mxu0 0.0
    %726 = vmatpush2.xpose.msra.mxu0 0.0
    %727 = vmatprep.subr.mxu0 0.0
    %728 = vmatpush2.xpose.msra.mxu0 0.0
    %729 = vmatprep.subr.mxu0 0.0
    %730 = vmatpush2.xpose.msra.mxu0 0.0
    %731 = vmatprep.subr.mxu0 0.0
    %732 = vmatpush2.xpose.msra.mxu0 0.0
    %733 = vmatprep.subr.mxu0 0.0
    %734 = vmatpush2.xpose.msra.mxu0 0.0
    %735 = vmatprep.subr.mxu0 0.0
    %736 = vmatpush2.xpose.msra.mxu0 0.0
    %737 = vmatprep.subr.mxu0 0.0
    %738 = vmatpush2.xpose.msra.mxu0 0.0
    %739 = vmatprep.subr.mxu0 0.0
    %740 = vmatpush2.xpose.msra.mxu0 0.0
    %741 = vmatprep.subr.mxu0 0.0
    %742 = vmatpush2.xpose.msra.mxu0 0.0
    %743 = vmatprep.mubr.f32.mxu0 %v190
    %744 = vmatmul.mubr.f32.gmra.mxu0 %v182
    %v745 = vpop.f32.mrf.mxu0
    %v746 = vadd.f32 %v150, %v745
    %v747 = vpop.f32.mrf.mxu0
    %748 = vdwg.mxu0
    %749 = vmatprep.subr.mxu0 0.0
    %750 = vmatpush1.xpose.msra.mxu0 0.0
    %751 = vmatprep.subr.mxu0 0.0
    %752 = vmatpush1.xpose.msra.mxu0 0.0
    %753 = vmatprep.subr.mxu0 0.0
    %754 = vmatpush1.xpose.msra.mxu0 0.0
    %755 = vmatprep.subr.mxu0 0.0
    %756 = vmatpush1.xpose.msra.mxu0 0.0
    %757 = vmatprep.subr.mxu0 0.0
    %758 = vmatpush1.xpose.msra.mxu0 0.0
    %759 = vmatprep.subr.mxu0 0.0
    %760 = vmatpush1.xpose.msra.mxu0 0.0
    %761 = vmatprep.subr.mxu0 0.0
    %762 = vmatpush1.xpose.msra.mxu0 0.0
    %763 = vmatprep.subr.mxu0 0.0
    %764 = vmatpush1.xpose.msra.mxu0 0.0
    %765 = vmatprep.subr.mxu0 0.0
    %766 = vmatpush1.xpose.msra.mxu0 0.0
    %767 = vmatprep.subr.mxu0 0.0
    %768 = vmatpush1.xpose.msra.mxu0 0.0
    %769 = vmatprep.subr.mxu0 0.0
    %770 = vmatpush1.xpose.msra.mxu0 0.0
    %771 = vmatprep.subr.mxu0 0.0
    %772 = vmatpush1.xpose.msra.mxu0 0.0
    %773 = vmatprep.subr.mxu0 0.0
    %774 = vmatpush1.xpose.msra.mxu0 0.0
    %775 = vmatprep.subr.mxu0 0.0
    %776 = vmatpush1.xpose.msra.mxu0 0.0
    %777 = vmatprep.subr.mxu0 0.0
    %778 = vmatpush1.xpose.msra.mxu0 0.0
    %779 = vmatprep.subr.mxu0 %v57
    %780 = vmatpush1.xpose.msra.mxu0 %v56
    %781 = vmatprep.subr.mxu0 0.0
    %782 = vmatpush2.xpose.msra.mxu0 0.0
    %783 = vmatprep.subr.mxu0 0.0
    %784 = vmatpush2.xpose.msra.mxu0 0.0
    %785 = vmatprep.subr.mxu0 0.0
    %786 = vmatpush2.xpose.msra.mxu0 0.0
    %787 = vmatprep.subr.mxu0 0.0
    %788 = vmatpush2.xpose.msra.mxu0 0.0
    %789 = vmatprep.subr.mxu0 0.0
    %790 = vmatpush2.xpose.msra.mxu0 0.0
    %791 = vmatprep.subr.mxu0 0.0
    %792 = vmatpush2.xpose.msra.mxu0 0.0
    %793 = vmatprep.subr.mxu0 0.0
    %794 = vmatpush2.xpose.msra.mxu0 0.0
    %795 = vmatprep.subr.mxu0 0.0
    %796 = vmatpush2.xpose.msra.mxu0 0.0
    %797 = vmatprep.subr.mxu0 0.0
    %798 = vmatpush2.xpose.msra.mxu0 0.0
    %799 = vmatprep.subr.mxu0 0.0
    %800 = vmatpush2.xpose.msra.mxu0 0.0
    %801 = vmatprep.subr.mxu0 0.0
    %802 = vmatpush2.xpose.msra.mxu0 0.0
    %803 = vmatprep.subr.mxu0 0.0
    %804 = vmatpush2.xpose.msra.mxu0 0.0
    %805 = vmatprep.subr.mxu0 0.0
    %806 = vmatpush2.xpose.msra.mxu0 0.0
    %807 = vmatprep.subr.mxu0 0.0
    %808 = vmatpush2.xpose.msra.mxu0 0.0
    %809 = vmatprep.subr.mxu0 0.0
    %810 = vmatpush2.xpose.msra.mxu0 0.0
    %811 = vmatprep.subr.mxu0 0.0
    %812 = vmatpush2.xpose.msra.mxu0 0.0
    %813 = vmatprep.mubr.f32.mxu0 %v191
    %814 = vmatmul.mubr.f32.gmra.mxu0 %v189
    %v815 = vpop.f32.mrf.mxu0
    %v816 = vadd.f32 %v746, %v815
    %v817 = vpop.f32.mrf.mxu0
    %818 = vdwg.mxu0
    %819 = vmatprep.subr.mxu0 0.0
    %820 = vmatpush1.xpose.msra.mxu0 0.0
    %821 = vmatprep.subr.mxu0 0.0
    %822 = vmatpush1.xpose.msra.mxu0 0.0
    %823 = vmatprep.subr.mxu0 0.0
    %824 = vmatpush1.xpose.msra.mxu0 0.0
    %825 = vmatprep.subr.mxu0 0.0
    %826 = vmatpush1.xpose.msra.mxu0 0.0
    %827 = vmatprep.subr.mxu0 0.0
    %828 = vmatpush1.xpose.msra.mxu0 0.0
    %829 = vmatprep.subr.mxu0 0.0
    %830 = vmatpush1.xpose.msra.mxu0 0.0
    %831 = vmatprep.subr.mxu0 0.0
    %832 = vmatpush1.xpose.msra.mxu0 0.0
    %833 = vmatprep.subr.mxu0 0.0
    %834 = vmatpush1.xpose.msra.mxu0 0.0
    %835 = vmatprep.subr.mxu0 0.0
    %836 = vmatpush1.xpose.msra.mxu0 0.0
    %837 = vmatprep.subr.mxu0 0.0
    %838 = vmatpush1.xpose.msra.mxu0 0.0
    %839 = vmatprep.subr.mxu0 0.0
    %840 = vmatpush1.xpose.msra.mxu0 0.0
    %841 = vmatprep.subr.mxu0 0.0
    %842 = vmatpush1.xpose.msra.mxu0 0.0
    %843 = vmatprep.subr.mxu0 0.0
    %844 = vmatpush1.xpose.msra.mxu0 0.0
    %845 = vmatprep.subr.mxu0 0.0
    %846 = vmatpush1.xpose.msra.mxu0 0.0
    %847 = vmatprep.subr.mxu0 0.0
    %848 = vmatpush1.xpose.msra.mxu0 0.0
    %849 = vmatprep.subr.mxu0 %v59
    %850 = vmatpush1.xpose.msra.mxu0 %v58
    %851 = vmatprep.subr.mxu0 0.0
    %852 = vmatpush2.xpose.msra.mxu0 0.0
    %853 = vmatprep.subr.mxu0 0.0
    %854 = vmatpush2.xpose.msra.mxu0 0.0
    %855 = vmatprep.subr.mxu0 0.0
    %856 = vmatpush2.xpose.msra.mxu0 0.0
    %857 = vmatprep.subr.mxu0 0.0
    %858 = vmatpush2.xpose.msra.mxu0 0.0
    %859 = vmatprep.subr.mxu0 0.0
    %860 = vmatpush2.xpose.msra.mxu0 0.0
    %861 = vmatprep.subr.mxu0 0.0
    %862 = vmatpush2.xpose.msra.mxu0 0.0
    %863 = vmatprep.subr.mxu0 0.0
    %864 = vmatpush2.xpose.msra.mxu0 0.0
    %865 = vmatprep.subr.mxu0 0.0
    %866 = vmatpush2.xpose.msra.mxu0 0.0
    %867 = vmatprep.subr.mxu0 0.0
    %868 = vmatpush2.xpose.msra.mxu0 0.0
    %869 = vmatprep.subr.mxu0 0.0
    %870 = vmatpush2.xpose.msra.mxu0 0.0
    %871 = vmatprep.subr.mxu0 0.0
    %872 = vmatpush2.xpose.msra.mxu0 0.0
    %873 = vmatprep.subr.mxu0 0.0
    %874 = vmatpush2.xpose.msra.mxu0 0.0
    %875 = vmatprep.subr.mxu0 0.0
    %876 = vmatpush2.xpose.msra.mxu0 0.0
    %877 = vmatprep.subr.mxu0 0.0
    %878 = vmatpush2.xpose.msra.mxu0 0.0
    %879 = vmatprep.subr.mxu0 0.0
    %880 = vmatpush2.xpose.msra.mxu0 0.0
    %881 = vmatprep.subr.mxu0 0.0
    %882 = vmatpush2.xpose.msra.mxu0 0.0
    %883 = vmatprep.mubr.f32.mxu0 %v207
    %884 = vmatmul.mubr.f32.gmra.mxu0 %v199
    %v885 = vpop.f32.mrf.mxu0
    %v886 = vadd.f32 %v816, %v885
    %v887 = vpop.f32.mrf.mxu0
    %888 = vdwg.mxu0
    %889 = vmatprep.subr.mxu0 0.0
    %890 = vmatpush1.xpose.msra.mxu0 0.0
    %891 = vmatprep.subr.mxu0 0.0
    %892 = vmatpush1.xpose.msra.mxu0 0.0
    %893 = vmatprep.subr.mxu0 0.0
    %894 = vmatpush1.xpose.msra.mxu0 0.0
    %895 = vmatprep.subr.mxu0 0.0
    %896 = vmatpush1.xpose.msra.mxu0 0.0
    %897 = vmatprep.subr.mxu0 0.0
    %898 = vmatpush1.xpose.msra.mxu0 0.0
    %899 = vmatprep.subr.mxu0 0.0
    %900 = vmatpush1.xpose.msra.mxu0 0.0
    %901 = vmatprep.subr.mxu0 0.0
    %902 = vmatpush1.xpose.msra.mxu0 0.0
    %903 = vmatprep.subr.mxu0 0.0
    %904 = vmatpush1.xpose.msra.mxu0 0.0
    %905 = vmatprep.subr.mxu0 0.0
    %906 = vmatpush1.xpose.msra.mxu0 0.0
    %907 = vmatprep.subr.mxu0 0.0
    %908 = vmatpush1.xpose.msra.mxu0 0.0
    %909 = vmatprep.subr.mxu0 0.0
    %910 = vmatpush1.xpose.msra.mxu0 0.0
    %911 = vmatprep.subr.mxu0 0.0
    %912 = vmatpush1.xpose.msra.mxu0 0.0
    %913 = vmatprep.subr.mxu0 0.0
    %914 = vmatpush1.xpose.msra.mxu0 0.0
    %915 = vmatprep.subr.mxu0 0.0
    %916 = vmatpush1.xpose.msra.mxu0 0.0
    %917 = vmatprep.subr.mxu0 0.0
    %918 = vmatpush1.xpose.msra.mxu0 0.0
    %919 = vmatprep.subr.mxu0 %v61
    %920 = vmatpush1.xpose.msra.mxu0 %v60
    %921 = vmatprep.subr.mxu0 0.0
    %922 = vmatpush2.xpose.msra.mxu0 0.0
    %923 = vmatprep.subr.mxu0 0.0
    %924 = vmatpush2.xpose.msra.mxu0 0.0
    %925 = vmatprep.subr.mxu0 0.0
    %926 = vmatpush2.xpose.msra.mxu0 0.0
    %927 = vmatprep.subr.mxu0 0.0
    %928 = vmatpush2.xpose.msra.mxu0 0.0
    %929 = vmatprep.subr.mxu0 0.0
    %930 = vmatpush2.xpose.msra.mxu0 0.0
    %931 = vmatprep.subr.mxu0 0.0
    %932 = vmatpush2.xpose.msra.mxu0 0.0
    %933 = vmatprep.subr.mxu0 0.0
    %934 = vmatpush2.xpose.msra.mxu0 0.0
    %935 = vmatprep.subr.mxu0 0.0
    %936 = vmatpush2.xpose.msra.mxu0 0.0
    %937 = vmatprep.subr.mxu0 0.0
    %938 = vmatpush2.xpose.msra.mxu0 0.0
    %939 = vmatprep.subr.mxu0 0.0
    %940 = vmatpush2.xpose.msra.mxu0 0.0
    %941 = vmatprep.subr.mxu0 0.0
    %942 = vmatpush2.xpose.msra.mxu0 0.0
    %943 = vmatprep.subr.mxu0 0.0
    %944 = vmatpush2.xpose.msra.mxu0 0.0
    %945 = vmatprep.subr.mxu0 0.0
    %946 = vmatpush2.xpose.msra.mxu0 0.0
    %947 = vmatprep.subr.mxu0 0.0
    %948 = vmatpush2.xpose.msra.mxu0 0.0
    %949 = vmatprep.subr.mxu0 0.0
    %950 = vmatpush2.xpose.msra.mxu0 0.0
    %951 = vmatprep.subr.mxu0 0.0
    %952 = vmatpush2.xpose.msra.mxu0 0.0
    %953 = vmatprep.mubr.f32.mxu0 %v208
    %954 = vmatmul.mubr.f32.gmra.mxu0 %v206
    %v955 = vpop.f32.mrf.mxu0
    %v956 = vadd.f32 %v886, %v955
    %v957 = vpop.f32.mrf.mxu0
    %958 = vdwg.mxu0
    %959 = vmatprep.subr.mxu0 0.0
    %960 = vmatpush1.xpose.msra.mxu0 0.0
    %961 = vmatprep.subr.mxu0 0.0
    %962 = vmatpush1.xpose.msra.mxu0 0.0
    %963 = vmatprep.subr.mxu0 0.0
    %964 = vmatpush1.xpose.msra.mxu0 0.0
    %965 = vmatprep.subr.mxu0 0.0
    %966 = vmatpush1.xpose.msra.mxu0 0.0
    %967 = vmatprep.subr.mxu0 0.0
    %968 = vmatpush1.xpose.msra.mxu0 0.0
    %969 = vmatprep.subr.mxu0 0.0
    %970 = vmatpush1.xpose.msra.mxu0 0.0
    %971 = vmatprep.subr.mxu0 0.0
    %972 = vmatpush1.xpose.msra.mxu0 0.0
    %973 = vmatprep.subr.mxu0 0.0
    %974 = vmatpush1.xpose.msra.mxu0 0.0
    %975 = vmatprep.subr.mxu0 0.0
    %976 = vmatpush1.xpose.msra.mxu0 0.0
    %977 = vmatprep.subr.mxu0 0.0
    %978 = vmatpush1.xpose.msra.mxu0 0.0
    %979 = vmatprep.subr.mxu0 0.0
    %980 = vmatpush1.xpose.msra.mxu0 0.0
    %981 = vmatprep.subr.mxu0 0.0
    %982 = vmatpush1.xpose.msra.mxu0 0.0
    %983 = vmatprep.subr.mxu0 0.0
    %984 = vmatpush1.xpose.msra.mxu0 0.0
    %985 = vmatprep.subr.mxu0 0.0
    %986 = vmatpush1.xpose.msra.mxu0 0.0
    %987 = vmatprep.subr.mxu0 0.0
    %988 = vmatpush1.xpose.msra.mxu0 0.0
    %989 = vmatprep.subr.mxu0 %v63
    %990 = vmatpush1.xpose.msra.mxu0 %v62
    %991 = vmatprep.subr.mxu0 0.0
    %992 = vmatpush2.xpose.msra.mxu0 0.0
    %993 = vmatprep.subr.mxu0 0.0
    %994 = vmatpush2.xpose.msra.mxu0 0.0
    %995 = vmatprep.subr.mxu0 0.0
    %996 = vmatpush2.xpose.msra.mxu0 0.0
    %997 = vmatprep.subr.mxu0 0.0
    %998 = vmatpush2.xpose.msra.mxu0 0.0
    %999 = vmatprep.subr.mxu0 0.0
    %1000 = vmatpush2.xpose.msra.mxu0 0.0
    %1001 = vmatprep.subr.mxu0 0.0
    %1002 = vmatpush2.xpose.msra.mxu0 0.0
    %1003 = vmatprep.subr.mxu0 0.0
    %1004 = vmatpush2.xpose.msra.mxu0 0.0
    %1005 = vmatprep.subr.mxu0 0.0
    %1006 = vmatpush2.xpose.msra.mxu0 0.0
    %1007 = vmatprep.subr.mxu0 0.0
    %1008 = vmatpush2.xpose.msra.mxu0 0.0
    %1009 = vmatprep.subr.mxu0 0.0
    %1010 = vmatpush2.xpose.msra.mxu0 0.0
    %1011 = vmatprep.subr.mxu0 0.0
    %1012 = vmatpush2.xpose.msra.mxu0 0.0
    %1013 = vmatprep.subr.mxu0 0.0
    %1014 = vmatpush2.xpose.msra.mxu0 0.0
    %1015 = vmatprep.subr.mxu0 0.0
    %1016 = vmatpush2.xpose.msra.mxu0 0.0
    %1017 = vmatprep.subr.mxu0 0.0
    %1018 = vmatpush2.xpose.msra.mxu0 0.0
    %1019 = vmatprep.subr.mxu0 0.0
    %1020 = vmatpush2.xpose.msra.mxu0 0.0
    %1021 = vmatprep.subr.mxu0 0.0
    %1022 = vmatpush2.xpose.msra.mxu0 0.0
    %1023 = vmatprep.mubr.f32.mxu0 %v224
    %1024 = vmatmul.mubr.f32.gmra.mxu0 %v216
    %v1025 = vpop.f32.mrf.mxu0
    %v1026 = vadd.f32 %v956, %v1025
    %v1027 = vpop.f32.mrf.mxu0
    %1028 = vdwg.mxu0
    %1029 = vmatprep.subr.mxu0 0.0
    %1030 = vmatpush1.xpose.msra.mxu0 0.0
    %1031 = vmatprep.subr.mxu0 0.0
    %1032 = vmatpush1.xpose.msra.mxu0 0.0
    %1033 = vmatprep.subr.mxu0 0.0
    %1034 = vmatpush1.xpose.msra.mxu0 0.0
    %1035 = vmatprep.subr.mxu0 0.0
    %1036 = vmatpush1.xpose.msra.mxu0 0.0
    %1037 = vmatprep.subr.mxu0 0.0
    %1038 = vmatpush1.xpose.msra.mxu0 0.0
    %1039 = vmatprep.subr.mxu0 0.0
    %1040 = vmatpush1.xpose.msra.mxu0 0.0
    %1041 = vmatprep.subr.mxu0 0.0
    %1042 = vmatpush1.xpose.msra.mxu0 0.0
    %1043 = vmatprep.subr.mxu0 0.0
    %1044 = vmatpush1.xpose.msra.mxu0 0.0
    %1045 = vmatprep.subr.mxu0 0.0
    %1046 = vmatpush1.xpose.msra.mxu0 0.0
    %1047 = vmatprep.subr.mxu0 0.0
    %1048 = vmatpush1.xpose.msra.mxu0 0.0
    %1049 = vmatprep.subr.mxu0 0.0
    %1050 = vmatpush1.xpose.msra.mxu0 0.0
    %1051 = vmatprep.subr.mxu0 0.0
    %1052 = vmatpush1.xpose.msra.mxu0 0.0
    %1053 = vmatprep.subr.mxu0 0.0
    %1054 = vmatpush1.xpose.msra.mxu0 0.0
    %1055 = vmatprep.subr.mxu0 0.0
    %1056 = vmatpush1.xpose.msra.mxu0 0.0
    %1057 = vmatprep.subr.mxu0 0.0
    %1058 = vmatpush1.xpose.msra.mxu0 0.0
    %1059 = vmatprep.subr.mxu0 %v65
    %1060 = vmatpush1.xpose.msra.mxu0 %v64
    %1061 = vmatprep.subr.mxu0 0.0
    %1062 = vmatpush2.xpose.msra.mxu0 0.0
    %1063 = vmatprep.subr.mxu0 0.0
    %1064 = vmatpush2.xpose.msra.mxu0 0.0
    %1065 = vmatprep.subr.mxu0 0.0
    %1066 = vmatpush2.xpose.msra.mxu0 0.0
    %1067 = vmatprep.subr.mxu0 0.0
    %1068 = vmatpush2.xpose.msra.mxu0 0.0
    %1069 = vmatprep.subr.mxu0 0.0
    %1070 = vmatpush2.xpose.msra.mxu0 0.0
    %1071 = vmatprep.subr.mxu0 0.0
    %1072 = vmatpush2.xpose.msra.mxu0 0.0
    %1073 = vmatprep.subr.mxu0 0.0
    %1074 = vmatpush2.xpose.msra.mxu0 0.0
    %1075 = vmatprep.subr.mxu0 0.0
    %1076 = vmatpush2.xpose.msra.mxu0 0.0
    %1077 = vmatprep.subr.mxu0 0.0
    %1078 = vmatpush2.xpose.msra.mxu0 0.0
    %1079 = vmatprep.subr.mxu0 0.0
    %1080 = vmatpush2.xpose.msra.mxu0 0.0
    %1081 = vmatprep.subr.mxu0 0.0
    %1082 = vmatpush2.xpose.msra.mxu0 0.0
    %1083 = vmatprep.subr.mxu0 0.0
    %1084 = vmatpush2.xpose.msra.mxu0 0.0
    %1085 = vmatprep.subr.mxu0 0.0
    %1086 = vmatpush2.xpose.msra.mxu0 0.0
    %1087 = vmatprep.subr.mxu0 0.0
    %1088 = vmatpush2.xpose.msra.mxu0 0.0
    %1089 = vmatprep.subr.mxu0 0.0
    %1090 = vmatpush2.xpose.msra.mxu0 0.0
    %1091 = vmatprep.subr.mxu0 0.0
    %1092 = vmatpush2.xpose.msra.mxu0 0.0
    %1093 = vmatprep.mubr.f32.mxu0 %v225
    %1094 = vmatmul.mubr.f32.gmra.mxu0 %v223
    %v1095 = vpop.f32.mrf.mxu0
    %v1096 = vadd.f32 %v1026, %v1095
    %v1097 = vpop.f32.mrf.mxu0
    %1098 = vdwg.mxu0
    %1099 = vmatprep.subr.mxu0 0.0
    %1100 = vmatpush1.xpose.msra.mxu0 0.0
    %1101 = vmatprep.subr.mxu0 0.0
    %1102 = vmatpush1.xpose.msra.mxu0 0.0
    %1103 = vmatprep.subr.mxu0 0.0
    %1104 = vmatpush1.xpose.msra.mxu0 0.0
    %1105 = vmatprep.subr.mxu0 0.0
    %1106 = vmatpush1.xpose.msra.mxu0 0.0
    %1107 = vmatprep.subr.mxu0 0.0
    %1108 = vmatpush1.xpose.msra.mxu0 0.0
    %1109 = vmatprep.subr.mxu0 0.0
    %1110 = vmatpush1.xpose.msra.mxu0 0.0
    %1111 = vmatprep.subr.mxu0 0.0
    %1112 = vmatpush1.xpose.msra.mxu0 0.0
    %1113 = vmatprep.subr.mxu0 0.0
    %1114 = vmatpush1.xpose.msra.mxu0 0.0
    %1115 = vmatprep.subr.mxu0 0.0
    %1116 = vmatpush1.xpose.msra.mxu0 0.0
    %1117 = vmatprep.subr.mxu0 0.0
    %1118 = vmatpush1.xpose.msra.mxu0 0.0
    %1119 = vmatprep.subr.mxu0 0.0
    %1120 = vmatpush1.xpose.msra.mxu0 0.0
    %1121 = vmatprep.subr.mxu0 0.0
    %1122 = vmatpush1.xpose.msra.mxu0 0.0
    %1123 = vmatprep.subr.mxu0 0.0
    %1124 = vmatpush1.xpose.msra.mxu0 0.0
    %1125 = vmatprep.subr.mxu0 0.0
    %1126 = vmatpush1.xpose.msra.mxu0 0.0
    %1127 = vmatprep.subr.mxu0 0.0
    %1128 = vmatpush1.xpose.msra.mxu0 0.0
    %1129 = vmatprep.subr.mxu0 %v67
    %1130 = vmatpush1.xpose.msra.mxu0 %v66
    %1131 = vmatprep.subr.mxu0 0.0
    %1132 = vmatpush2.xpose.msra.mxu0 0.0
    %1133 = vmatprep.subr.mxu0 0.0
    %1134 = vmatpush2.xpose.msra.mxu0 0.0
    %1135 = vmatprep.subr.mxu0 0.0
    %1136 = vmatpush2.xpose.msra.mxu0 0.0
    %1137 = vmatprep.subr.mxu0 0.0
    %1138 = vmatpush2.xpose.msra.mxu0 0.0
    %1139 = vmatprep.subr.mxu0 0.0
    %1140 = vmatpush2.xpose.msra.mxu0 0.0
    %1141 = vmatprep.subr.mxu0 0.0
    %1142 = vmatpush2.xpose.msra.mxu0 0.0
    %1143 = vmatprep.subr.mxu0 0.0
    %1144 = vmatpush2.xpose.msra.mxu0 0.0
    %1145 = vmatprep.subr.mxu0 0.0
    %1146 = vmatpush2.xpose.msra.mxu0 0.0
    %1147 = vmatprep.subr.mxu0 0.0
    %1148 = vmatpush2.xpose.msra.mxu0 0.0
    %1149 = vmatprep.subr.mxu0 0.0
    %1150 = vmatpush2.xpose.msra.mxu0 0.0
    %1151 = vmatprep.subr.mxu0 0.0
    %1152 = vmatpush2.xpose.msra.mxu0 0.0
    %1153 = vmatprep.subr.mxu0 0.0
    %1154 = vmatpush2.xpose.msra.mxu0 0.0
    %1155 = vmatprep.subr.mxu0 0.0
    %1156 = vmatpush2.xpose.msra.mxu0 0.0
    %1157 = vmatprep.subr.mxu0 0.0
    %1158 = vmatpush2.xpose.msra.mxu0 0.0
    %1159 = vmatprep.subr.mxu0 0.0
    %1160 = vmatpush2.xpose.msra.mxu0 0.0
    %1161 = vmatprep.subr.mxu0 0.0
    %1162 = vmatpush2.xpose.msra.mxu0 0.0
    %1163 = vmatprep.mubr.f32.mxu0 %v241
    %1164 = vmatmul.mubr.f32.gmra.mxu0 %v233
    %v1165 = vpop.f32.mrf.mxu0
    %v1166 = vadd.f32 %v1096, %v1165
    %v1167 = vpop.f32.mrf.mxu0
    %1168 = vdwg.mxu0
    %1169 = vmatprep.subr.mxu0 0.0
    %1170 = vmatpush1.xpose.msra.mxu0 0.0
    %1171 = vmatprep.subr.mxu0 0.0
    %1172 = vmatpush1.xpose.msra.mxu0 0.0
    %1173 = vmatprep.subr.mxu0 0.0
    %1174 = vmatpush1.xpose.msra.mxu0 0.0
    %1175 = vmatprep.subr.mxu0 0.0
    %1176 = vmatpush1.xpose.msra.mxu0 0.0
    %1177 = vmatprep.subr.mxu0 0.0
    %1178 = vmatpush1.xpose.msra.mxu0 0.0
    %1179 = vmatprep.subr.mxu0 0.0
    %1180 = vmatpush1.xpose.msra.mxu0 0.0
    %1181 = vmatprep.subr.mxu0 0.0
    %1182 = vmatpush1.xpose.msra.mxu0 0.0
    %1183 = vmatprep.subr.mxu0 0.0
    %1184 = vmatpush1.xpose.msra.mxu0 0.0
    %1185 = vmatprep.subr.mxu0 0.0
    %1186 = vmatpush1.xpose.msra.mxu0 0.0
    %1187 = vmatprep.subr.mxu0 0.0
    %1188 = vmatpush1.xpose.msra.mxu0 0.0
    %1189 = vmatprep.subr.mxu0 0.0
    %1190 = vmatpush1.xpose.msra.mxu0 0.0
    %1191 = vmatprep.subr.mxu0 0.0
    %1192 = vmatpush1.xpose.msra.mxu0 0.0
    %1193 = vmatprep.subr.mxu0 0.0
    %1194 = vmatpush1.xpose.msra.mxu0 0.0
    %1195 = vmatprep.subr.mxu0 0.0
    %1196 = vmatpush1.xpose.msra.mxu0 0.0
    %1197 = vmatprep.subr.mxu0 0.0
    %1198 = vmatpush1.xpose.msra.mxu0 0.0
    %1199 = vmatprep.subr.mxu0 %v69
    %1200 = vmatpush1.xpose.msra.mxu0 %v68
    %1201 = vmatprep.subr.mxu0 0.0
    %1202 = vmatpush2.xpose.msra.mxu0 0.0
    %1203 = vmatprep.subr.mxu0 0.0
    %1204 = vmatpush2.xpose.msra.mxu0 0.0
    %1205 = vmatprep.subr.mxu0 0.0
    %1206 = vmatpush2.xpose.msra.mxu0 0.0
    %1207 = vmatprep.subr.mxu0 0.0
    %1208 = vmatpush2.xpose.msra.mxu0 0.0
    %1209 = vmatprep.subr.mxu0 0.0
    %1210 = vmatpush2.xpose.msra.mxu0 0.0
    %1211 = vmatprep.subr.mxu0 0.0
    %1212 = vmatpush2.xpose.msra.mxu0 0.0
    %1213 = vmatprep.subr.mxu0 0.0
    %1214 = vmatpush2.xpose.msra.mxu0 0.0
    %1215 = vmatprep.subr.mxu0 0.0
    %1216 = vmatpush2.xpose.msra.mxu0 0.0
    %1217 = vmatprep.subr.mxu0 0.0
    %1218 = vmatpush2.xpose.msra.mxu0 0.0
    %1219 = vmatprep.subr.mxu0 0.0
    %1220 = vmatpush2.xpose.msra.mxu0 0.0
    %1221 = vmatprep.subr.mxu0 0.0
    %1222 = vmatpush2.xpose.msra.mxu0 0.0
    %1223 = vmatprep.subr.mxu0 0.0
    %1224 = vmatpush2.xpose.msra.mxu0 0.0
    %1225 = vmatprep.subr.mxu0 0.0
    %1226 = vmatpush2.xpose.msra.mxu0 0.0
    %1227 = vmatprep.subr.mxu0 0.0
    %1228 = vmatpush2.xpose.msra.mxu0 0.0
    %1229 = vmatprep.subr.mxu0 0.0
    %1230 = vmatpush2.xpose.msra.mxu0 0.0
    %1231 = vmatprep.subr.mxu0 0.0
    %1232 = vmatpush2.xpose.msra.mxu0 0.0
    %1233 = vmatprep.mubr.f32.mxu0 %v242
    %1234 = vmatmul.mubr.f32.gmra.mxu0 %v240
    %v1235 = vpop.f32.mrf.mxu0
    %v1236 = vadd.f32 %v1166, %v1235
    %v1237 = vpop.f32.mrf.mxu0
    %1238 = vdwg.mxu0
    %1239 = vmatprep.subr.mxu0 0.0
    %1240 = vmatpush1.xpose.msra.mxu0 0.0
    %1241 = vmatprep.subr.mxu0 0.0
    %1242 = vmatpush1.xpose.msra.mxu0 0.0
    %1243 = vmatprep.subr.mxu0 0.0
    %1244 = vmatpush1.xpose.msra.mxu0 0.0
    %1245 = vmatprep.subr.mxu0 0.0
    %1246 = vmatpush1.xpose.msra.mxu0 0.0
    %1247 = vmatprep.subr.mxu0 0.0
    %1248 = vmatpush1.xpose.msra.mxu0 0.0
    %1249 = vmatprep.subr.mxu0 0.0
    %1250 = vmatpush1.xpose.msra.mxu0 0.0
    %1251 = vmatprep.subr.mxu0 0.0
    %1252 = vmatpush1.xpose.msra.mxu0 0.0
    %1253 = vmatprep.subr.mxu0 0.0
    %1254 = vmatpush1.xpose.msra.mxu0 0.0
    %1255 = vmatprep.subr.mxu0 0.0
    %1256 = vmatpush1.xpose.msra.mxu0 0.0
    %1257 = vmatprep.subr.mxu0 0.0
    %1258 = vmatpush1.xpose.msra.mxu0 0.0
    %1259 = vmatprep.subr.mxu0 0.0
    %1260 = vmatpush1.xpose.msra.mxu0 0.0
    %1261 = vmatprep.subr.mxu0 0.0
    %1262 = vmatpush1.xpose.msra.mxu0 0.0
    %1263 = vmatprep.subr.mxu0 0.0
    %1264 = vmatpush1.xpose.msra.mxu0 0.0
    %1265 = vmatprep.subr.mxu0 0.0
    %1266 = vmatpush1.xpose.msra.mxu0 0.0
    %1267 = vmatprep.subr.mxu0 0.0
    %1268 = vmatpush1.xpose.msra.mxu0 0.0
    %1269 = vmatprep.subr.mxu0 %v71
    %1270 = vmatpush1.xpose.msra.mxu0 %v70
    %1271 = vmatprep.subr.mxu0 0.0
    %1272 = vmatpush2.xpose.msra.mxu0 0.0
    %1273 = vmatprep.subr.mxu0 0.0
    %1274 = vmatpush2.xpose.msra.mxu0 0.0
    %1275 = vmatprep.subr.mxu0 0.0
    %1276 = vmatpush2.xpose.msra.mxu0 0.0
    %1277 = vmatprep.subr.mxu0 0.0
    %1278 = vmatpush2.xpose.msra.mxu0 0.0
    %1279 = vmatprep.subr.mxu0 0.0
    %1280 = vmatpush2.xpose.msra.mxu0 0.0
    %1281 = vmatprep.subr.mxu0 0.0
    %1282 = vmatpush2.xpose.msra.mxu0 0.0
    %1283 = vmatprep.subr.mxu0 0.0
    %1284 = vmatpush2.xpose.msra.mxu0 0.0
    %1285 = vmatprep.subr.mxu0 0.0
    %1286 = vmatpush2.xpose.msra.mxu0 0.0
    %1287 = vmatprep.subr.mxu0 0.0
    %1288 = vmatpush2.xpose.msra.mxu0 0.0
    %1289 = vmatprep.subr.mxu0 0.0
    %1290 = vmatpush2.xpose.msra.mxu0 0.0
    %1291 = vmatprep.subr.mxu0 0.0
    %1292 = vmatpush2.xpose.msra.mxu0 0.0
    %1293 = vmatprep.subr.mxu0 0.0
    %1294 = vmatpush2.xpose.msra.mxu0 0.0
    %1295 = vmatprep.subr.mxu0 0.0
    %1296 = vmatpush2.xpose.msra.mxu0 0.0
    %1297 = vmatprep.subr.mxu0 0.0
    %1298 = vmatpush2.xpose.msra.mxu0 0.0
    %1299 = vmatprep.subr.mxu0 0.0
    %1300 = vmatpush2.xpose.msra.mxu0 0.0
    %1301 = vmatprep.subr.mxu0 0.0
    %1302 = vmatpush2.xpose.msra.mxu0 0.0
    %1303 = vmatprep.mubr.f32.mxu0 %v258
    %1304 = vmatmul.mubr.f32.gmra.mxu0 %v250
    %v1305 = vpop.f32.mrf.mxu0
    %v1306 = vadd.f32 %v1236, %v1305
    %v1307 = vpop.f32.mrf.mxu0
    %1308 = vdwg.mxu0
    %1309 = vmatprep.subr.mxu0 0.0
    %1310 = vmatpush1.xpose.msra.mxu0 0.0
    %1311 = vmatprep.subr.mxu0 0.0
    %1312 = vmatpush1.xpose.msra.mxu0 0.0
    %1313 = vmatprep.subr.mxu0 0.0
    %1314 = vmatpush1.xpose.msra.mxu0 0.0
    %1315 = vmatprep.subr.mxu0 0.0
    %1316 = vmatpush1.xpose.msra.mxu0 0.0
    %1317 = vmatprep.subr.mxu0 0.0
    %1318 = vmatpush1.xpose.msra.mxu0 0.0
    %1319 = vmatprep.subr.mxu0 0.0
    %1320 = vmatpush1.xpose.msra.mxu0 0.0
    %1321 = vmatprep.subr.mxu0 0.0
    %1322 = vmatpush1.xpose.msra.mxu0 0.0
    %1323 = vmatprep.subr.mxu0 0.0
    %1324 = vmatpush1.xpose.msra.mxu0 0.0
    %1325 = vmatprep.subr.mxu0 0.0
    %1326 = vmatpush1.xpose.msra.mxu0 0.0
    %1327 = vmatprep.subr.mxu0 0.0
    %1328 = vmatpush1.xpose.msra.mxu0 0.0
    %1329 = vmatprep.subr.mxu0 0.0
    %1330 = vmatpush1.xpose.msra.mxu0 0.0
    %1331 = vmatprep.subr.mxu0 0.0
    %1332 = vmatpush1.xpose.msra.mxu0 0.0
    %1333 = vmatprep.subr.mxu0 0.0
    %1334 = vmatpush1.xpose.msra.mxu0 0.0
    %1335 = vmatprep.subr.mxu0 0.0
    %1336 = vmatpush1.xpose.msra.mxu0 0.0
    %1337 = vmatprep.subr.mxu0 0.0
    %1338 = vmatpush1.xpose.msra.mxu0 0.0
    %1339 = vmatprep.subr.mxu0 %v73
    %1340 = vmatpush1.xpose.msra.mxu0 %v72
    %1341 = vmatprep.subr.mxu0 0.0
    %1342 = vmatpush2.xpose.msra.mxu0 0.0
    %1343 = vmatprep.subr.mxu0 0.0
    %1344 = vmatpush2.xpose.msra.mxu0 0.0
    %1345 = vmatprep.subr.mxu0 0.0
    %1346 = vmatpush2.xpose.msra.mxu0 0.0
    %1347 = vmatprep.subr.mxu0 0.0
    %1348 = vmatpush2.xpose.msra.mxu0 0.0
    %1349 = vmatprep.subr.mxu0 0.0
    %1350 = vmatpush2.xpose.msra.mxu0 0.0
    %1351 = vmatprep.subr.mxu0 0.0
    %1352 = vmatpush2.xpose.msra.mxu0 0.0
    %1353 = vmatprep.subr.mxu0 0.0
    %1354 = vmatpush2.xpose.msra.mxu0 0.0
    %1355 = vmatprep.subr.mxu0 0.0
    %1356 = vmatpush2.xpose.msra.mxu0 0.0
    %1357 = vmatprep.subr.mxu0 0.0
    %1358 = vmatpush2.xpose.msra.mxu0 0.0
    %1359 = vmatprep.subr.mxu0 0.0
    %1360 = vmatpush2.xpose.msra.mxu0 0.0
    %1361 = vmatprep.subr.mxu0 0.0
    %1362 = vmatpush2.xpose.msra.mxu0 0.0
    %1363 = vmatprep.subr.mxu0 0.0
    %1364 = vmatpush2.xpose.msra.mxu0 0.0
    %1365 = vmatprep.subr.mxu0 0.0
    %1366 = vmatpush2.xpose.msra.mxu0 0.0
    %1367 = vmatprep.subr.mxu0 0.0
    %1368 = vmatpush2.xpose.msra.mxu0 0.0
    %1369 = vmatprep.subr.mxu0 0.0
    %1370 = vmatpush2.xpose.msra.mxu0 0.0
    %1371 = vmatprep.subr.mxu0 0.0
    %1372 = vmatpush2.xpose.msra.mxu0 0.0
    %1373 = vmatprep.mubr.f32.mxu0 %v259
    %1374 = vmatmul.mubr.f32.gmra.mxu0 %v257
    %v1375 = vpop.f32.mrf.mxu0
    %v1376 = vadd.f32 %v1306, %v1375
    %v1377 = vpop.f32.mrf.mxu0
    %1378 = vdwg.mxu0
    %1379 = vmatprep.subr.mxu0 0.0
    %1380 = vmatpush1.xpose.msra.mxu0 0.0
    %1381 = vmatprep.subr.mxu0 0.0
    %1382 = vmatpush1.xpose.msra.mxu0 0.0
    %1383 = vmatprep.subr.mxu0 0.0
    %1384 = vmatpush1.xpose.msra.mxu0 0.0
    %1385 = vmatprep.subr.mxu0 0.0
    %1386 = vmatpush1.xpose.msra.mxu0 0.0
    %1387 = vmatprep.subr.mxu0 0.0
    %1388 = vmatpush1.xpose.msra.mxu0 0.0
    %1389 = vmatprep.subr.mxu0 0.0
    %1390 = vmatpush1.xpose.msra.mxu0 0.0
    %1391 = vmatprep.subr.mxu0 0.0
    %1392 = vmatpush1.xpose.msra.mxu0 0.0
    %1393 = vmatprep.subr.mxu0 0.0
    %1394 = vmatpush1.xpose.msra.mxu0 0.0
    %1395 = vmatprep.subr.mxu0 0.0
    %1396 = vmatpush1.xpose.msra.mxu0 0.0
    %1397 = vmatprep.subr.mxu0 0.0
    %1398 = vmatpush1.xpose.msra.mxu0 0.0
    %1399 = vmatprep.subr.mxu0 0.0
    %1400 = vmatpush1.xpose.msra.mxu0 0.0
    %1401 = vmatprep.subr.mxu0 0.0
    %1402 = vmatpush1.xpose.msra.mxu0 0.0
    %1403 = vmatprep.subr.mxu0 0.0
    %1404 = vmatpush1.xpose.msra.mxu0 0.0
    %1405 = vmatprep.subr.mxu0 0.0
    %1406 = vmatpush1.xpose.msra.mxu0 0.0
    %1407 = vmatprep.subr.mxu0 0.0
    %1408 = vmatpush1.xpose.msra.mxu0 0.0
    %1409 = vmatprep.subr.mxu0 %v75
    %1410 = vmatpush1.xpose.msra.mxu0 %v74
    %1411 = vmatprep.subr.mxu0 0.0
    %1412 = vmatpush2.xpose.msra.mxu0 0.0
    %1413 = vmatprep.subr.mxu0 0.0
    %1414 = vmatpush2.xpose.msra.mxu0 0.0
    %1415 = vmatprep.subr.mxu0 0.0
    %1416 = vmatpush2.xpose.msra.mxu0 0.0
    %1417 = vmatprep.subr.mxu0 0.0
    %1418 = vmatpush2.xpose.msra.mxu0 0.0
    %1419 = vmatprep.subr.mxu0 0.0
    %1420 = vmatpush2.xpose.msra.mxu0 0.0
    %1421 = vmatprep.subr.mxu0 0.0
    %1422 = vmatpush2.xpose.msra.mxu0 0.0
    %1423 = vmatprep.subr.mxu0 0.0
    %1424 = vmatpush2.xpose.msra.mxu0 0.0
    %1425 = vmatprep.subr.mxu0 0.0
    %1426 = vmatpush2.xpose.msra.mxu0 0.0
    %1427 = vmatprep.subr.mxu0 0.0
    %1428 = vmatpush2.xpose.msra.mxu0 0.0
    %1429 = vmatprep.subr.mxu0 0.0
    %1430 = vmatpush2.xpose.msra.mxu0 0.0
    %1431 = vmatprep.subr.mxu0 0.0
    %1432 = vmatpush2.xpose.msra.mxu0 0.0
    %1433 = vmatprep.subr.mxu0 0.0
    %1434 = vmatpush2.xpose.msra.mxu0 0.0
    %1435 = vmatprep.subr.mxu0 0.0
    %1436 = vmatpush2.xpose.msra.mxu0 0.0
    %1437 = vmatprep.subr.mxu0 0.0
    %1438 = vmatpush2.xpose.msra.mxu0 0.0
    %1439 = vmatprep.subr.mxu0 0.0
    %1440 = vmatpush2.xpose.msra.mxu0 0.0
    %1441 = vmatprep.subr.mxu0 0.0
    %1442 = vmatpush2.xpose.msra.mxu0 0.0
    %1443 = vmatprep.mubr.f32.mxu0 %v275
    %1444 = vmatmul.mubr.f32.gmra.mxu0 %v267
    %v1445 = vpop.f32.mrf.mxu0
    %v1446 = vadd.f32 %v1376, %v1445
    %v1447 = vpop.f32.mrf.mxu0
    %1448 = vdwg.mxu0
    %1449 = vmatprep.subr.mxu0 0.0
    %1450 = vmatpush1.xpose.msra.mxu0 0.0
    %1451 = vmatprep.subr.mxu0 0.0
    %1452 = vmatpush1.xpose.msra.mxu0 0.0
    %1453 = vmatprep.subr.mxu0 0.0
    %1454 = vmatpush1.xpose.msra.mxu0 0.0
    %1455 = vmatprep.subr.mxu0 0.0
    %1456 = vmatpush1.xpose.msra.mxu0 0.0
    %1457 = vmatprep.subr.mxu0 0.0
    %1458 = vmatpush1.xpose.msra.mxu0 0.0
    %1459 = vmatprep.subr.mxu0 0.0
    %1460 = vmatpush1.xpose.msra.mxu0 0.0
    %1461 = vmatprep.subr.mxu0 0.0
    %1462 = vmatpush1.xpose.msra.mxu0 0.0
    %1463 = vmatprep.subr.mxu0 0.0
    %1464 = vmatpush1.xpose.msra.mxu0 0.0
    %1465 = vmatprep.subr.mxu0 0.0
    %1466 = vmatpush1.xpose.msra.mxu0 0.0
    %1467 = vmatprep.subr.mxu0 0.0
    %1468 = vmatpush1.xpose.msra.mxu0 0.0
    %1469 = vmatprep.subr.mxu0 0.0
    %1470 = vmatpush1.xpose.msra.mxu0 0.0
    %1471 = vmatprep.subr.mxu0 0.0
    %1472 = vmatpush1.xpose.msra.mxu0 0.0
    %1473 = vmatprep.subr.mxu0 0.0
    %1474 = vmatpush1.xpose.msra.mxu0 0.0
    %1475 = vmatprep.subr.mxu0 0.0
    %1476 = vmatpush1.xpose.msra.mxu0 0.0
    %1477 = vmatprep.subr.mxu0 0.0
    %1478 = vmatpush1.xpose.msra.mxu0 0.0
    %1479 = vmatprep.subr.mxu0 %v77
    %1480 = vmatpush1.xpose.msra.mxu0 %v76
    %1481 = vmatprep.subr.mxu0 0.0
    %1482 = vmatpush2.xpose.msra.mxu0 0.0
    %1483 = vmatprep.subr.mxu0 0.0
    %1484 = vmatpush2.xpose.msra.mxu0 0.0
    %1485 = vmatprep.subr.mxu0 0.0
    %1486 = vmatpush2.xpose.msra.mxu0 0.0
    %1487 = vmatprep.subr.mxu0 0.0
    %1488 = vmatpush2.xpose.msra.mxu0 0.0
    %1489 = vmatprep.subr.mxu0 0.0
    %1490 = vmatpush2.xpose.msra.mxu0 0.0
    %1491 = vmatprep.subr.mxu0 0.0
    %1492 = vmatpush2.xpose.msra.mxu0 0.0
    %1493 = vmatprep.subr.mxu0 0.0
    %1494 = vmatpush2.xpose.msra.mxu0 0.0
    %1495 = vmatprep.subr.mxu0 0.0
    %1496 = vmatpush2.xpose.msra.mxu0 0.0
    %1497 = vmatprep.subr.mxu0 0.0
    %1498 = vmatpush2.xpose.msra.mxu0 0.0
    %1499 = vmatprep.subr.mxu0 0.0
    %1500 = vmatpush2.xpose.msra.mxu0 0.0
    %1501 = vmatprep.subr.mxu0 0.0
    %1502 = vmatpush2.xpose.msra.mxu0 0.0
    %1503 = vmatprep.subr.mxu0 0.0
    %1504 = vmatpush2.xpose.msra.mxu0 0.0
    %1505 = vmatprep.subr.mxu0 0.0
    %1506 = vmatpush2.xpose.msra.mxu0 0.0
    %1507 = vmatprep.subr.mxu0 0.0
    %1508 = vmatpush2.xpose.msra.mxu0 0.0
    %1509 = vmatprep.subr.mxu0 0.0
    %1510 = vmatpush2.xpose.msra.mxu0 0.0
    %1511 = vmatprep.subr.mxu0 0.0
    %1512 = vmatpush2.xpose.msra.mxu0 0.0
    %1513 = vmatprep.mubr.f32.mxu0 %v276
    %1514 = vmatmul.mubr.f32.gmra.mxu0 %v274
    %v1515 = vpop.f32.mrf.mxu0
    %v1516 = vadd.f32 %v1446, %v1515
    %v1517 = vpop.f32.mrf.mxu0
    %1518 = vdwg.mxu0
    %1519 = vmatprep.subr.mxu0 0.0
    %1520 = vmatpush1.xpose.msra.mxu0 0.0
    %1521 = vmatprep.subr.mxu0 0.0
    %1522 = vmatpush1.xpose.msra.mxu0 0.0
    %1523 = vmatprep.subr.mxu0 0.0
    %1524 = vmatpush1.xpose.msra.mxu0 0.0
    %1525 = vmatprep.subr.mxu0 0.0
    %1526 = vmatpush1.xpose.msra.mxu0 0.0
    %1527 = vmatprep.subr.mxu0 0.0
    %1528 = vmatpush1.xpose.msra.mxu0 0.0
    %1529 = vmatprep.subr.mxu0 0.0
    %1530 = vmatpush1.xpose.msra.mxu0 0.0
    %1531 = vmatprep.subr.mxu0 0.0
    %1532 = vmatpush1.xpose.msra.mxu0 0.0
    %1533 = vmatprep.subr.mxu0 0.0
    %1534 = vmatpush1.xpose.msra.mxu0 0.0
    %1535 = vmatprep.subr.mxu0 0.0
    %1536 = vmatpush1.xpose.msra.mxu0 0.0
    %1537 = vmatprep.subr.mxu0 0.0
    %1538 = vmatpush1.xpose.msra.mxu0 0.0
    %1539 = vmatprep.subr.mxu0 0.0
    %1540 = vmatpush1.xpose.msra.mxu0 0.0
    %1541 = vmatprep.subr.mxu0 0.0
    %1542 = vmatpush1.xpose.msra.mxu0 0.0
    %1543 = vmatprep.subr.mxu0 0.0
    %1544 = vmatpush1.xpose.msra.mxu0 0.0
    %1545 = vmatprep.subr.mxu0 0.0
    %1546 = vmatpush1.xpose.msra.mxu0 0.0
    %1547 = vmatprep.subr.mxu0 0.0
    %1548 = vmatpush1.xpose.msra.mxu0 0.0
    %1549 = vmatprep.subr.mxu0 %v79
    %1550 = vmatpush1.xpose.msra.mxu0 %v78
    %1551 = vmatprep.subr.mxu0 0.0
    %1552 = vmatpush2.xpose.msra.mxu0 0.0
    %1553 = vmatprep.subr.mxu0 0.0
    %1554 = vmatpush2.xpose.msra.mxu0 0.0
    %1555 = vmatprep.subr.mxu0 0.0
    %1556 = vmatpush2.xpose.msra.mxu0 0.0
    %1557 = vmatprep.subr.mxu0 0.0
    %1558 = vmatpush2.xpose.msra.mxu0 0.0
    %1559 = vmatprep.subr.mxu0 0.0
    %1560 = vmatpush2.xpose.msra.mxu0 0.0
    %1561 = vmatprep.subr.mxu0 0.0
    %1562 = vmatpush2.xpose.msra.mxu0 0.0
    %1563 = vmatprep.subr.mxu0 0.0
    %1564 = vmatpush2.xpose.msra.mxu0 0.0
    %1565 = vmatprep.subr.mxu0 0.0
    %1566 = vmatpush2.xpose.msra.mxu0 0.0
    %1567 = vmatprep.subr.mxu0 0.0
    %1568 = vmatpush2.xpose.msra.mxu0 0.0
    %1569 = vmatprep.subr.mxu0 0.0
    %1570 = vmatpush2.xpose.msra.mxu0 0.0
    %1571 = vmatprep.subr.mxu0 0.0
    %1572 = vmatpush2.xpose.msra.mxu0 0.0
    %1573 = vmatprep.subr.mxu0 0.0
    %1574 = vmatpush2.xpose.msra.mxu0 0.0
    %1575 = vmatprep.subr.mxu0 0.0
    %1576 = vmatpush2.xpose.msra.mxu0 0.0
    %1577 = vmatprep.subr.mxu0 0.0
    %1578 = vmatpush2.xpose.msra.mxu0 0.0
    %1579 = vmatprep.subr.mxu0 0.0
    %1580 = vmatpush2.xpose.msra.mxu0 0.0
    %1581 = vmatprep.subr.mxu0 0.0
    %1582 = vmatpush2.xpose.msra.mxu0 0.0
    %1583 = vmatprep.mubr.f32.mxu0 %v292
    %1584 = vmatmul.mubr.f32.gmra.mxu0 %v284
    %v1585 = vpop.f32.mrf.mxu0
    %v1586 = vadd.f32 %v1516, %v1585
    %v1587 = vpop.f32.mrf.mxu0
    %1588 = vdwg.mxu0
    %1589 = vmatprep.subr.mxu0 0.0
    %1590 = vmatpush1.xpose.msra.mxu0 0.0
    %1591 = vmatprep.subr.mxu0 0.0
    %1592 = vmatpush1.xpose.msra.mxu0 0.0
    %1593 = vmatprep.subr.mxu0 0.0
    %1594 = vmatpush1.xpose.msra.mxu0 0.0
    %1595 = vmatprep.subr.mxu0 0.0
    %1596 = vmatpush1.xpose.msra.mxu0 0.0
    %1597 = vmatprep.subr.mxu0 0.0
    %1598 = vmatpush1.xpose.msra.mxu0 0.0
    %1599 = vmatprep.subr.mxu0 0.0
    %1600 = vmatpush1.xpose.msra.mxu0 0.0
    %1601 = vmatprep.subr.mxu0 0.0
    %1602 = vmatpush1.xpose.msra.mxu0 0.0
    %1603 = vmatprep.subr.mxu0 0.0
    %1604 = vmatpush1.xpose.msra.mxu0 0.0
    %1605 = vmatprep.subr.mxu0 0.0
    %1606 = vmatpush1.xpose.msra.mxu0 0.0
    %1607 = vmatprep.subr.mxu0 0.0
    %1608 = vmatpush1.xpose.msra.mxu0 0.0
    %1609 = vmatprep.subr.mxu0 0.0
    %1610 = vmatpush1.xpose.msra.mxu0 0.0
    %1611 = vmatprep.subr.mxu0 0.0
    %1612 = vmatpush1.xpose.msra.mxu0 0.0
    %1613 = vmatprep.subr.mxu0 0.0
    %1614 = vmatpush1.xpose.msra.mxu0 0.0
    %1615 = vmatprep.subr.mxu0 0.0
    %1616 = vmatpush1.xpose.msra.mxu0 0.0
    %1617 = vmatprep.subr.mxu0 0.0
    %1618 = vmatpush1.xpose.msra.mxu0 0.0
    %1619 = vmatprep.subr.mxu0 %v81
    %1620 = vmatpush1.xpose.msra.mxu0 %v80
    %1621 = vmatprep.subr.mxu0 0.0
    %1622 = vmatpush2.xpose.msra.mxu0 0.0
    %1623 = vmatprep.subr.mxu0 0.0
    %1624 = vmatpush2.xpose.msra.mxu0 0.0
    %1625 = vmatprep.subr.mxu0 0.0
    %1626 = vmatpush2.xpose.msra.mxu0 0.0
    %1627 = vmatprep.subr.mxu0 0.0
    %1628 = vmatpush2.xpose.msra.mxu0 0.0
    %1629 = vmatprep.subr.mxu0 0.0
    %1630 = vmatpush2.xpose.msra.mxu0 0.0
    %1631 = vmatprep.subr.mxu0 0.0
    %1632 = vmatpush2.xpose.msra.mxu0 0.0
    %1633 = vmatprep.subr.mxu0 0.0
    %1634 = vmatpush2.xpose.msra.mxu0 0.0
    %1635 = vmatprep.subr.mxu0 0.0
    %1636 = vmatpush2.xpose.msra.mxu0 0.0
    %1637 = vmatprep.subr.mxu0 0.0
    %1638 = vmatpush2.xpose.msra.mxu0 0.0
    %1639 = vmatprep.subr.mxu0 0.0
    %1640 = vmatpush2.xpose.msra.mxu0 0.0
    %1641 = vmatprep.subr.mxu0 0.0
    %1642 = vmatpush2.xpose.msra.mxu0 0.0
    %1643 = vmatprep.subr.mxu0 0.0
    %1644 = vmatpush2.xpose.msra.mxu0 0.0
    %1645 = vmatprep.subr.mxu0 0.0
    %1646 = vmatpush2.xpose.msra.mxu0 0.0
    %1647 = vmatprep.subr.mxu0 0.0
    %1648 = vmatpush2.xpose.msra.mxu0 0.0
    %1649 = vmatprep.subr.mxu0 0.0
    %1650 = vmatpush2.xpose.msra.mxu0 0.0
    %1651 = vmatprep.subr.mxu0 0.0
    %1652 = vmatpush2.xpose.msra.mxu0 0.0
    %1653 = vmatprep.mubr.f32.mxu0 %v293
    %1654 = vmatmul.mubr.f32.gmra.mxu0 %v291
    %v1655 = vpop.f32.mrf.mxu0
    %v1656 = vadd.f32 %v1586, %v1655
    %v1657 = vpop.f32.mrf.mxu0
    %1658 = vdwg.mxu0
    %1659 = vmatprep.subr.mxu0 0.0
    %1660 = vmatpush1.xpose.msra.mxu0 0.0
    %1661 = vmatprep.subr.mxu0 0.0
    %1662 = vmatpush1.xpose.msra.mxu0 0.0
    %1663 = vmatprep.subr.mxu0 0.0
    %1664 = vmatpush1.xpose.msra.mxu0 0.0
    %1665 = vmatprep.subr.mxu0 0.0
    %1666 = vmatpush1.xpose.msra.mxu0 0.0
    %1667 = vmatprep.subr.mxu0 0.0
    %1668 = vmatpush1.xpose.msra.mxu0 0.0
    %1669 = vmatprep.subr.mxu0 0.0
    %1670 = vmatpush1.xpose.msra.mxu0 0.0
    %1671 = vmatprep.subr.mxu0 0.0
    %1672 = vmatpush1.xpose.msra.mxu0 0.0
    %1673 = vmatprep.subr.mxu0 0.0
    %1674 = vmatpush1.xpose.msra.mxu0 0.0
    %1675 = vmatprep.subr.mxu0 0.0
    %1676 = vmatpush1.xpose.msra.mxu0 0.0
    %1677 = vmatprep.subr.mxu0 0.0
    %1678 = vmatpush1.xpose.msra.mxu0 0.0
    %1679 = vmatprep.subr.mxu0 0.0
    %1680 = vmatpush1.xpose.msra.mxu0 0.0
    %1681 = vmatprep.subr.mxu0 0.0
    %1682 = vmatpush1.xpose.msra.mxu0 0.0
    %1683 = vmatprep.subr.mxu0 0.0
    %1684 = vmatpush1.xpose.msra.mxu0 0.0
    %1685 = vmatprep.subr.mxu0 0.0
    %1686 = vmatpush1.xpose.msra.mxu0 0.0
    %1687 = vmatprep.subr.mxu0 0.0
    %1688 = vmatpush1.xpose.msra.mxu0 0.0
    %1689 = vmatprep.subr.mxu0 %v83
    %1690 = vmatpush1.xpose.msra.mxu0 %v82
    %1691 = vmatprep.subr.mxu0 0.0
    %1692 = vmatpush2.xpose.msra.mxu0 0.0
    %1693 = vmatprep.subr.mxu0 0.0
    %1694 = vmatpush2.xpose.msra.mxu0 0.0
    %1695 = vmatprep.subr.mxu0 0.0
    %1696 = vmatpush2.xpose.msra.mxu0 0.0
    %1697 = vmatprep.subr.mxu0 0.0
    %1698 = vmatpush2.xpose.msra.mxu0 0.0
    %1699 = vmatprep.subr.mxu0 0.0
    %1700 = vmatpush2.xpose.msra.mxu0 0.0
    %1701 = vmatprep.subr.mxu0 0.0
    %1702 = vmatpush2.xpose.msra.mxu0 0.0
    %1703 = vmatprep.subr.mxu0 0.0
    %1704 = vmatpush2.xpose.msra.mxu0 0.0
    %1705 = vmatprep.subr.mxu0 0.0
    %1706 = vmatpush2.xpose.msra.mxu0 0.0
    %1707 = vmatprep.subr.mxu0 0.0
    %1708 = vmatpush2.xpose.msra.mxu0 0.0
    %1709 = vmatprep.subr.mxu0 0.0
    %1710 = vmatpush2.xpose.msra.mxu0 0.0
    %1711 = vmatprep.subr.mxu0 0.0
    %1712 = vmatpush2.xpose.msra.mxu0 0.0
    %1713 = vmatprep.subr.mxu0 0.0
    %1714 = vmatpush2.xpose.msra.mxu0 0.0
    %1715 = vmatprep.subr.mxu0 0.0
    %1716 = vmatpush2.xpose.msra.mxu0 0.0
    %1717 = vmatprep.subr.mxu0 0.0
    %1718 = vmatpush2.xpose.msra.mxu0 0.0
    %1719 = vmatprep.subr.mxu0 0.0
    %1720 = vmatpush2.xpose.msra.mxu0 0.0
    %1721 = vmatprep.subr.mxu0 0.0
    %1722 = vmatpush2.xpose.msra.mxu0 0.0
    %1723 = vmatprep.mubr.f32.mxu0 %v309
    %1724 = vmatmul.mubr.f32.gmra.mxu0 %v301
    %v1725 = vpop.f32.mrf.mxu0
    %v1726 = vadd.f32 %v1656, %v1725
    %v1727 = vpop.f32.mrf.mxu0
    %1728 = vdwg.mxu0
    %1729 = vmatprep.subr.mxu0 0.0
    %1730 = vmatpush1.xpose.msra.mxu0 0.0
    %1731 = vmatprep.subr.mxu0 0.0
    %1732 = vmatpush1.xpose.msra.mxu0 0.0
    %1733 = vmatprep.subr.mxu0 0.0
    %1734 = vmatpush1.xpose.msra.mxu0 0.0
    %1735 = vmatprep.subr.mxu0 0.0
    %1736 = vmatpush1.xpose.msra.mxu0 0.0
    %1737 = vmatprep.subr.mxu0 0.0
    %1738 = vmatpush1.xpose.msra.mxu0 0.0
    %1739 = vmatprep.subr.mxu0 0.0
    %1740 = vmatpush1.xpose.msra.mxu0 0.0
    %1741 = vmatprep.subr.mxu0 0.0
    %1742 = vmatpush1.xpose.msra.mxu0 0.0
    %1743 = vmatprep.subr.mxu0 0.0
    %1744 = vmatpush1.xpose.msra.mxu0 0.0
    %1745 = vmatprep.subr.mxu0 0.0
    %1746 = vmatpush1.xpose.msra.mxu0 0.0
    %1747 = vmatprep.subr.mxu0 0.0
    %1748 = vmatpush1.xpose.msra.mxu0 0.0
    %1749 = vmatprep.subr.mxu0 0.0
    %1750 = vmatpush1.xpose.msra.mxu0 0.0
    %1751 = vmatprep.subr.mxu0 0.0
    %1752 = vmatpush1.xpose.msra.mxu0 0.0
    %1753 = vmatprep.subr.mxu0 0.0
    %1754 = vmatpush1.xpose.msra.mxu0 0.0
    %1755 = vmatprep.subr.mxu0 0.0
    %1756 = vmatpush1.xpose.msra.mxu0 0.0
    %1757 = vmatprep.subr.mxu0 0.0
    %1758 = vmatpush1.xpose.msra.mxu0 0.0
    %1759 = vmatprep.subr.mxu0 %v85
    %1760 = vmatpush1.xpose.msra.mxu0 %v84
    %1761 = vmatprep.subr.mxu0 0.0
    %1762 = vmatpush2.xpose.msra.mxu0 0.0
    %1763 = vmatprep.subr.mxu0 0.0
    %1764 = vmatpush2.xpose.msra.mxu0 0.0
    %1765 = vmatprep.subr.mxu0 0.0
    %1766 = vmatpush2.xpose.msra.mxu0 0.0
    %1767 = vmatprep.subr.mxu0 0.0
    %1768 = vmatpush2.xpose.msra.mxu0 0.0
    %1769 = vmatprep.subr.mxu0 0.0
    %1770 = vmatpush2.xpose.msra.mxu0 0.0
    %1771 = vmatprep.subr.mxu0 0.0
    %1772 = vmatpush2.xpose.msra.mxu0 0.0
    %1773 = vmatprep.subr.mxu0 0.0
    %1774 = vmatpush2.xpose.msra.mxu0 0.0
    %1775 = vmatprep.subr.mxu0 0.0
    %1776 = vmatpush2.xpose.msra.mxu0 0.0
    %1777 = vmatprep.subr.mxu0 0.0
    %1778 = vmatpush2.xpose.msra.mxu0 0.0
    %1779 = vmatprep.subr.mxu0 0.0
    %1780 = vmatpush2.xpose.msra.mxu0 0.0
    %1781 = vmatprep.subr.mxu0 0.0
    %1782 = vmatpush2.xpose.msra.mxu0 0.0
    %1783 = vmatprep.subr.mxu0 0.0
    %1784 = vmatpush2.xpose.msra.mxu0 0.0
    %1785 = vmatprep.subr.mxu0 0.0
    %1786 = vmatpush2.xpose.msra.mxu0 0.0
    %1787 = vmatprep.subr.mxu0 0.0
    %1788 = vmatpush2.xpose.msra.mxu0 0.0
    %1789 = vmatprep.subr.mxu0 0.0
    %1790 = vmatpush2.xpose.msra.mxu0 0.0
    %1791 = vmatprep.subr.mxu0 0.0
    %1792 = vmatpush2.xpose.msra.mxu0 0.0
    %1793 = vmatprep.mubr.f32.mxu0 %v310
    %1794 = vmatmul.mubr.f32.gmra.mxu0 %v308
    %v1795 = vpop.f32.mrf.mxu0
    %v1796 = vadd.f32 %v1726, %v1795
    %v1797 = vpop.f32.mrf.mxu0
    %1798 = vdwg.mxu0
    %1799 = vmatprep.subr.mxu0 0.0
    %1800 = vmatpush1.xpose.msra.mxu0 0.0
    %1801 = vmatprep.subr.mxu0 0.0
    %1802 = vmatpush1.xpose.msra.mxu0 0.0
    %1803 = vmatprep.subr.mxu0 0.0
    %1804 = vmatpush1.xpose.msra.mxu0 0.0
    %1805 = vmatprep.subr.mxu0 0.0
    %1806 = vmatpush1.xpose.msra.mxu0 0.0
    %1807 = vmatprep.subr.mxu0 0.0
    %1808 = vmatpush1.xpose.msra.mxu0 0.0
    %1809 = vmatprep.subr.mxu0 0.0
    %1810 = vmatpush1.xpose.msra.mxu0 0.0
    %1811 = vmatprep.subr.mxu0 0.0
    %1812 = vmatpush1.xpose.msra.mxu0 0.0
    %1813 = vmatprep.subr.mxu0 0.0
    %1814 = vmatpush1.xpose.msra.mxu0 0.0
    %1815 = vmatprep.subr.mxu0 0.0
    %1816 = vmatpush1.xpose.msra.mxu0 0.0
    %1817 = vmatprep.subr.mxu0 0.0
    %1818 = vmatpush1.xpose.msra.mxu0 0.0
    %1819 = vmatprep.subr.mxu0 0.0
    %1820 = vmatpush1.xpose.msra.mxu0 0.0
    %1821 = vmatprep.subr.mxu0 0.0
    %1822 = vmatpush1.xpose.msra.mxu0 0.0
    %1823 = vmatprep.subr.mxu0 0.0
    %1824 = vmatpush1.xpose.msra.mxu0 0.0
    %1825 = vmatprep.subr.mxu0 0.0
    %1826 = vmatpush1.xpose.msra.mxu0 0.0
    %1827 = vmatprep.subr.mxu0 0.0
    %1828 = vmatpush1.xpose.msra.mxu0 0.0
    %1829 = vmatprep.subr.mxu0 %v87
    %1830 = vmatpush1.xpose.msra.mxu0 %v86
    %1831 = vmatprep.subr.mxu0 0.0
    %1832 = vmatpush2.xpose.msra.mxu0 0.0
    %1833 = vmatprep.subr.mxu0 0.0
    %1834 = vmatpush2.xpose.msra.mxu0 0.0
    %1835 = vmatprep.subr.mxu0 0.0
    %1836 = vmatpush2.xpose.msra.mxu0 0.0
    %1837 = vmatprep.subr.mxu0 0.0
    %1838 = vmatpush2.xpose.msra.mxu0 0.0
    %1839 = vmatprep.subr.mxu0 0.0
    %1840 = vmatpush2.xpose.msra.mxu0 0.0
    %1841 = vmatprep.subr.mxu0 0.0
    %1842 = vmatpush2.xpose.msra.mxu0 0.0
    %1843 = vmatprep.subr.mxu0 0.0
    %1844 = vmatpush2.xpose.msra.mxu0 0.0
    %1845 = vmatprep.subr.mxu0 0.0
    %1846 = vmatpush2.xpose.msra.mxu0 0.0
    %1847 = vmatprep.subr.mxu0 0.0
    %1848 = vmatpush2.xpose.msra.mxu0 0.0
    %1849 = vmatprep.subr.mxu0 0.0
    %1850 = vmatpush2.xpose.msra.mxu0 0.0
    %1851 = vmatprep.subr.mxu0 0.0
    %1852 = vmatpush2.xpose.msra.mxu0 0.0
    %1853 = vmatprep.subr.mxu0 0.0
    %1854 = vmatpush2.xpose.msra.mxu0 0.0
    %1855 = vmatprep.subr.mxu0 0.0
    %1856 = vmatpush2.xpose.msra.mxu0 0.0
    %1857 = vmatprep.subr.mxu0 0.0
    %1858 = vmatpush2.xpose.msra.mxu0 0.0
    %1859 = vmatprep.subr.mxu0 0.0
    %1860 = vmatpush2.xpose.msra.mxu0 0.0
    %1861 = vmatprep.subr.mxu0 0.0
    %1862 = vmatpush2.xpose.msra.mxu0 0.0
    %1863 = vmatprep.mubr.f32.mxu0 %v326
    %1864 = vmatmul.mubr.f32.gmra.mxu0 %v318
    %v1865 = vpop.f32.mrf.mxu0
    %v1866 = vadd.f32 %v1796, %v1865
    %v1867 = vpop.f32.mrf.mxu0
    %1868 = vdwg.mxu0
    %1869 = vmatprep.subr.mxu0 0.0
    %1870 = vmatpush1.xpose.msra.mxu0 0.0
    %1871 = vmatprep.subr.mxu0 0.0
    %1872 = vmatpush1.xpose.msra.mxu0 0.0
    %1873 = vmatprep.subr.mxu0 0.0
    %1874 = vmatpush1.xpose.msra.mxu0 0.0
    %1875 = vmatprep.subr.mxu0 0.0
    %1876 = vmatpush1.xpose.msra.mxu0 0.0
    %1877 = vmatprep.subr.mxu0 0.0
    %1878 = vmatpush1.xpose.msra.mxu0 0.0
    %1879 = vmatprep.subr.mxu0 0.0
    %1880 = vmatpush1.xpose.msra.mxu0 0.0
    %1881 = vmatprep.subr.mxu0 0.0
    %1882 = vmatpush1.xpose.msra.mxu0 0.0
    %1883 = vmatprep.subr.mxu0 0.0
    %1884 = vmatpush1.xpose.msra.mxu0 0.0
    %1885 = vmatprep.subr.mxu0 0.0
    %1886 = vmatpush1.xpose.msra.mxu0 0.0
    %1887 = vmatprep.subr.mxu0 0.0
    %1888 = vmatpush1.xpose.msra.mxu0 0.0
    %1889 = vmatprep.subr.mxu0 0.0
    %1890 = vmatpush1.xpose.msra.mxu0 0.0
    %1891 = vmatprep.subr.mxu0 0.0
    %1892 = vmatpush1.xpose.msra.mxu0 0.0
    %1893 = vmatprep.subr.mxu0 0.0
    %1894 = vmatpush1.xpose.msra.mxu0 0.0
    %1895 = vmatprep.subr.mxu0 0.0
    %1896 = vmatpush1.xpose.msra.mxu0 0.0
    %1897 = vmatprep.subr.mxu0 0.0
    %1898 = vmatpush1.xpose.msra.mxu0 0.0
    %1899 = vmatprep.subr.mxu0 %v89
    %1900 = vmatpush1.xpose.msra.mxu0 %v88
    %1901 = vmatprep.subr.mxu0 0.0
    %1902 = vmatpush2.xpose.msra.mxu0 0.0
    %1903 = vmatprep.subr.mxu0 0.0
    %1904 = vmatpush2.xpose.msra.mxu0 0.0
    %1905 = vmatprep.subr.mxu0 0.0
    %1906 = vmatpush2.xpose.msra.mxu0 0.0
    %1907 = vmatprep.subr.mxu0 0.0
    %1908 = vmatpush2.xpose.msra.mxu0 0.0
    %1909 = vmatprep.subr.mxu0 0.0
    %1910 = vmatpush2.xpose.msra.mxu0 0.0
    %1911 = vmatprep.subr.mxu0 0.0
    %1912 = vmatpush2.xpose.msra.mxu0 0.0
    %1913 = vmatprep.subr.mxu0 0.0
    %1914 = vmatpush2.xpose.msra.mxu0 0.0
    %1915 = vmatprep.subr.mxu0 0.0
    %1916 = vmatpush2.xpose.msra.mxu0 0.0
    %1917 = vmatprep.subr.mxu0 0.0
    %1918 = vmatpush2.xpose.msra.mxu0 0.0
    %1919 = vmatprep.subr.mxu0 0.0
    %1920 = vmatpush2.xpose.msra.mxu0 0.0
    %1921 = vmatprep.subr.mxu0 0.0
    %1922 = vmatpush2.xpose.msra.mxu0 0.0
    %1923 = vmatprep.subr.mxu0 0.0
    %1924 = vmatpush2.xpose.msra.mxu0 0.0
    %1925 = vmatprep.subr.mxu0 0.0
    %1926 = vmatpush2.xpose.msra.mxu0 0.0
    %1927 = vmatprep.subr.mxu0 0.0
    %1928 = vmatpush2.xpose.msra.mxu0 0.0
    %1929 = vmatprep.subr.mxu0 0.0
    %1930 = vmatpush2.xpose.msra.mxu0 0.0
    %1931 = vmatprep.subr.mxu0 0.0
    %1932 = vmatpush2.xpose.msra.mxu0 0.0
    %1933 = vmatprep.mubr.f32.mxu0 %v327
    %1934 = vmatmul.mubr.f32.gmra.mxu0 %v325
    %v1935 = vpop.f32.mrf.mxu0
    %v1936 = vadd.f32 %v1866, %v1935
    %v1937 = vpop.f32.mrf.mxu0
    %1938 = vdwg.mxu0
    %1939 = vmatprep.subr.mxu0 0.0
    %1940 = vmatpush1.xpose.msra.mxu0 0.0
    %1941 = vmatprep.subr.mxu0 0.0
    %1942 = vmatpush1.xpose.msra.mxu0 0.0
    %1943 = vmatprep.subr.mxu0 0.0
    %1944 = vmatpush1.xpose.msra.mxu0 0.0
    %1945 = vmatprep.subr.mxu0 0.0
    %1946 = vmatpush1.xpose.msra.mxu0 0.0
    %1947 = vmatprep.subr.mxu0 0.0
    %1948 = vmatpush1.xpose.msra.mxu0 0.0
    %1949 = vmatprep.subr.mxu0 0.0
    %1950 = vmatpush1.xpose.msra.mxu0 0.0
    %1951 = vmatprep.subr.mxu0 0.0
    %1952 = vmatpush1.xpose.msra.mxu0 0.0
    %1953 = vmatprep.subr.mxu0 0.0
    %1954 = vmatpush1.xpose.msra.mxu0 0.0
    %1955 = vmatprep.subr.mxu0 0.0
    %1956 = vmatpush1.xpose.msra.mxu0 0.0
    %1957 = vmatprep.subr.mxu0 0.0
    %1958 = vmatpush1.xpose.msra.mxu0 0.0
    %1959 = vmatprep.subr.mxu0 0.0
    %1960 = vmatpush1.xpose.msra.mxu0 0.0
    %1961 = vmatprep.subr.mxu0 0.0
    %1962 = vmatpush1.xpose.msra.mxu0 0.0
    %1963 = vmatprep.subr.mxu0 0.0
    %1964 = vmatpush1.xpose.msra.mxu0 0.0
    %1965 = vmatprep.subr.mxu0 0.0
    %1966 = vmatpush1.xpose.msra.mxu0 0.0
    %1967 = vmatprep.subr.mxu0 0.0
    %1968 = vmatpush1.xpose.msra.mxu0 0.0
    %1969 = vmatprep.subr.mxu0 %v91
    %1970 = vmatpush1.xpose.msra.mxu0 %v90
    %1971 = vmatprep.subr.mxu0 0.0
    %1972 = vmatpush2.xpose.msra.mxu0 0.0
    %1973 = vmatprep.subr.mxu0 0.0
    %1974 = vmatpush2.xpose.msra.mxu0 0.0
    %1975 = vmatprep.subr.mxu0 0.0
    %1976 = vmatpush2.xpose.msra.mxu0 0.0
    %1977 = vmatprep.subr.mxu0 0.0
    %1978 = vmatpush2.xpose.msra.mxu0 0.0
    %1979 = vmatprep.subr.mxu0 0.0
    %1980 = vmatpush2.xpose.msra.mxu0 0.0
    %1981 = vmatprep.subr.mxu0 0.0
    %1982 = vmatpush2.xpose.msra.mxu0 0.0
    %1983 = vmatprep.subr.mxu0 0.0
    %1984 = vmatpush2.xpose.msra.mxu0 0.0
    %1985 = vmatprep.subr.mxu0 0.0
    %1986 = vmatpush2.xpose.msra.mxu0 0.0
    %1987 = vmatprep.subr.mxu0 0.0
    %1988 = vmatpush2.xpose.msra.mxu0 0.0
    %1989 = vmatprep.subr.mxu0 0.0
    %1990 = vmatpush2.xpose.msra.mxu0 0.0
    %1991 = vmatprep.subr.mxu0 0.0
    %1992 = vmatpush2.xpose.msra.mxu0 0.0
    %1993 = vmatprep.subr.mxu0 0.0
    %1994 = vmatpush2.xpose.msra.mxu0 0.0
    %1995 = vmatprep.subr.mxu0 0.0
    %1996 = vmatpush2.xpose.msra.mxu0 0.0
    %1997 = vmatprep.subr.mxu0 0.0
    %1998 = vmatpush2.xpose.msra.mxu0 0.0
    %1999 = vmatprep.subr.mxu0 0.0
    %2000 = vmatpush2.xpose.msra.mxu0 0.0
    %2001 = vmatprep.subr.mxu0 0.0
    %2002 = vmatpush2.xpose.msra.mxu0 0.0
    %2003 = vmatprep.mubr.f32.mxu0 %v343
    %2004 = vmatmul.mubr.f32.gmra.mxu0 %v335
    %v2005 = vpop.f32.mrf.mxu0
    %v2006 = vadd.f32 %v1936, %v2005
    %v2007 = vpop.f32.mrf.mxu0
    %2008 = vdwg.mxu0
    %2009 = vmatprep.subr.mxu0 0.0
    %2010 = vmatpush1.xpose.msra.mxu0 0.0
    %2011 = vmatprep.subr.mxu0 0.0
    %2012 = vmatpush1.xpose.msra.mxu0 0.0
    %2013 = vmatprep.subr.mxu0 0.0
    %2014 = vmatpush1.xpose.msra.mxu0 0.0
    %2015 = vmatprep.subr.mxu0 0.0
    %2016 = vmatpush1.xpose.msra.mxu0 0.0
    %2017 = vmatprep.subr.mxu0 0.0
    %2018 = vmatpush1.xpose.msra.mxu0 0.0
    %2019 = vmatprep.subr.mxu0 0.0
    %2020 = vmatpush1.xpose.msra.mxu0 0.0
    %2021 = vmatprep.subr.mxu0 0.0
    %2022 = vmatpush1.xpose.msra.mxu0 0.0
    %2023 = vmatprep.subr.mxu0 0.0
    %2024 = vmatpush1.xpose.msra.mxu0 0.0
    %2025 = vmatprep.subr.mxu0 0.0
    %2026 = vmatpush1.xpose.msra.mxu0 0.0
    %2027 = vmatprep.subr.mxu0 0.0
    %2028 = vmatpush1.xpose.msra.mxu0 0.0
    %2029 = vmatprep.subr.mxu0 0.0
    %2030 = vmatpush1.xpose.msra.mxu0 0.0
    %2031 = vmatprep.subr.mxu0 0.0
    %2032 = vmatpush1.xpose.msra.mxu0 0.0
    %2033 = vmatprep.subr.mxu0 0.0
    %2034 = vmatpush1.xpose.msra.mxu0 0.0
    %2035 = vmatprep.subr.mxu0 0.0
    %2036 = vmatpush1.xpose.msra.mxu0 0.0
    %2037 = vmatprep.subr.mxu0 0.0
    %2038 = vmatpush1.xpose.msra.mxu0 0.0
    %2039 = vmatprep.subr.mxu0 %v93
    %2040 = vmatpush1.xpose.msra.mxu0 %v92
    %2041 = vmatprep.subr.mxu0 0.0
    %2042 = vmatpush2.xpose.msra.mxu0 0.0
    %2043 = vmatprep.subr.mxu0 0.0
    %2044 = vmatpush2.xpose.msra.mxu0 0.0
    %2045 = vmatprep.subr.mxu0 0.0
    %2046 = vmatpush2.xpose.msra.mxu0 0.0
    %2047 = vmatprep.subr.mxu0 0.0
    %2048 = vmatpush2.xpose.msra.mxu0 0.0
    %2049 = vmatprep.subr.mxu0 0.0
    %2050 = vmatpush2.xpose.msra.mxu0 0.0
    %2051 = vmatprep.subr.mxu0 0.0
    %2052 = vmatpush2.xpose.msra.mxu0 0.0
    %2053 = vmatprep.subr.mxu0 0.0
    %2054 = vmatpush2.xpose.msra.mxu0 0.0
    %2055 = vmatprep.subr.mxu0 0.0
    %2056 = vmatpush2.xpose.msra.mxu0 0.0
    %2057 = vmatprep.subr.mxu0 0.0
    %2058 = vmatpush2.xpose.msra.mxu0 0.0
    %2059 = vmatprep.subr.mxu0 0.0
    %2060 = vmatpush2.xpose.msra.mxu0 0.0
    %2061 = vmatprep.subr.mxu0 0.0
    %2062 = vmatpush2.xpose.msra.mxu0 0.0
    %2063 = vmatprep.subr.mxu0 0.0
    %2064 = vmatpush2.xpose.msra.mxu0 0.0
    %2065 = vmatprep.subr.mxu0 0.0
    %2066 = vmatpush2.xpose.msra.mxu0 0.0
    %2067 = vmatprep.subr.mxu0 0.0
    %2068 = vmatpush2.xpose.msra.mxu0 0.0
    %2069 = vmatprep.subr.mxu0 0.0
    %2070 = vmatpush2.xpose.msra.mxu0 0.0
    %2071 = vmatprep.subr.mxu0 0.0
    %2072 = vmatpush2.xpose.msra.mxu0 0.0
    %2073 = vmatprep.mubr.f32.mxu0 %v344
    %2074 = vmatmul.mubr.f32.gmra.mxu0 %v342
    %v2075 = vpop.f32.mrf.mxu0
    %v2076 = vadd.f32 %v2006, %v2075
    %v2077 = vpop.f32.mrf.mxu0
    %2078 = vdwg.mxu0
    %2079 = vmatprep.subr.mxu0 0.0
    %2080 = vmatpush1.xpose.msra.mxu0 0.0
    %2081 = vmatprep.subr.mxu0 0.0
    %2082 = vmatpush1.xpose.msra.mxu0 0.0
    %2083 = vmatprep.subr.mxu0 0.0
    %2084 = vmatpush1.xpose.msra.mxu0 0.0
    %2085 = vmatprep.subr.mxu0 0.0
    %2086 = vmatpush1.xpose.msra.mxu0 0.0
    %2087 = vmatprep.subr.mxu0 0.0
    %2088 = vmatpush1.xpose.msra.mxu0 0.0
    %2089 = vmatprep.subr.mxu0 0.0
    %2090 = vmatpush1.xpose.msra.mxu0 0.0
    %2091 = vmatprep.subr.mxu0 0.0
    %2092 = vmatpush1.xpose.msra.mxu0 0.0
    %2093 = vmatprep.subr.mxu0 0.0
    %2094 = vmatpush1.xpose.msra.mxu0 0.0
    %2095 = vmatprep.subr.mxu0 0.0
    %2096 = vmatpush1.xpose.msra.mxu0 0.0
    %2097 = vmatprep.subr.mxu0 0.0
    %2098 = vmatpush1.xpose.msra.mxu0 0.0
    %2099 = vmatprep.subr.mxu0 0.0
    %2100 = vmatpush1.xpose.msra.mxu0 0.0
    %2101 = vmatprep.subr.mxu0 0.0
    %2102 = vmatpush1.xpose.msra.mxu0 0.0
    %2103 = vmatprep.subr.mxu0 0.0
    %2104 = vmatpush1.xpose.msra.mxu0 0.0
    %2105 = vmatprep.subr.mxu0 0.0
    %2106 = vmatpush1.xpose.msra.mxu0 0.0
    %2107 = vmatprep.subr.mxu0 0.0
    %2108 = vmatpush1.xpose.msra.mxu0 0.0
    %2109 = vmatprep.subr.mxu0 %v95
    %2110 = vmatpush1.xpose.msra.mxu0 %v94
    %2111 = vmatprep.subr.mxu0 0.0
    %2112 = vmatpush2.xpose.msra.mxu0 0.0
    %2113 = vmatprep.subr.mxu0 0.0
    %2114 = vmatpush2.xpose.msra.mxu0 0.0
    %2115 = vmatprep.subr.mxu0 0.0
    %2116 = vmatpush2.xpose.msra.mxu0 0.0
    %2117 = vmatprep.subr.mxu0 0.0
    %2118 = vmatpush2.xpose.msra.mxu0 0.0
    %2119 = vmatprep.subr.mxu0 0.0
    %2120 = vmatpush2.xpose.msra.mxu0 0.0
    %2121 = vmatprep.subr.mxu0 0.0
    %2122 = vmatpush2.xpose.msra.mxu0 0.0
    %2123 = vmatprep.subr.mxu0 0.0
    %2124 = vmatpush2.xpose.msra.mxu0 0.0
    %2125 = vmatprep.subr.mxu0 0.0
    %2126 = vmatpush2.xpose.msra.mxu0 0.0
    %2127 = vmatprep.subr.mxu0 0.0
    %2128 = vmatpush2.xpose.msra.mxu0 0.0
    %2129 = vmatprep.subr.mxu0 0.0
    %2130 = vmatpush2.xpose.msra.mxu0 0.0
    %2131 = vmatprep.subr.mxu0 0.0
    %2132 = vmatpush2.xpose.msra.mxu0 0.0
    %2133 = vmatprep.subr.mxu0 0.0
    %2134 = vmatpush2.xpose.msra.mxu0 0.0
    %2135 = vmatprep.subr.mxu0 0.0
    %2136 = vmatpush2.xpose.msra.mxu0 0.0
    %2137 = vmatprep.subr.mxu0 0.0
    %2138 = vmatpush2.xpose.msra.mxu0 0.0
    %2139 = vmatprep.subr.mxu0 0.0
    %2140 = vmatpush2.xpose.msra.mxu0 0.0
    %2141 = vmatprep.subr.mxu0 0.0
    %2142 = vmatpush2.xpose.msra.mxu0 0.0
    %2143 = vmatprep.mubr.f32.mxu0 %v360
    %2144 = vmatmul.mubr.f32.gmra.mxu0 %v352
    %v2145 = vpop.f32.mrf.mxu0
    %v2146 = vadd.f32 %v2076, %v2145
    %v2147 = vpop.f32.mrf.mxu0
    %2148 = vdwg.mxu0
    %2149 = vmatprep.subr.mxu0 0.0
    %2150 = vmatpush1.xpose.msra.mxu0 0.0
    %2151 = vmatprep.subr.mxu0 0.0
    %2152 = vmatpush1.xpose.msra.mxu0 0.0
    %2153 = vmatprep.subr.mxu0 0.0
    %2154 = vmatpush1.xpose.msra.mxu0 0.0
    %2155 = vmatprep.subr.mxu0 0.0
    %2156 = vmatpush1.xpose.msra.mxu0 0.0
    %2157 = vmatprep.subr.mxu0 0.0
    %2158 = vmatpush1.xpose.msra.mxu0 0.0
    %2159 = vmatprep.subr.mxu0 0.0
    %2160 = vmatpush1.xpose.msra.mxu0 0.0
    %2161 = vmatprep.subr.mxu0 0.0
    %2162 = vmatpush1.xpose.msra.mxu0 0.0
    %2163 = vmatprep.subr.mxu0 0.0
    %2164 = vmatpush1.xpose.msra.mxu0 0.0
    %2165 = vmatprep.subr.mxu0 0.0
    %2166 = vmatpush1.xpose.msra.mxu0 0.0
    %2167 = vmatprep.subr.mxu0 0.0
    %2168 = vmatpush1.xpose.msra.mxu0 0.0
    %2169 = vmatprep.subr.mxu0 0.0
    %2170 = vmatpush1.xpose.msra.mxu0 0.0
    %2171 = vmatprep.subr.mxu0 0.0
    %2172 = vmatpush1.xpose.msra.mxu0 0.0
    %2173 = vmatprep.subr.mxu0 0.0
    %2174 = vmatpush1.xpose.msra.mxu0 0.0
    %2175 = vmatprep.subr.mxu0 0.0
    %2176 = vmatpush1.xpose.msra.mxu0 0.0
    %2177 = vmatprep.subr.mxu0 0.0
    %2178 = vmatpush1.xpose.msra.mxu0 0.0
    %2179 = vmatprep.subr.mxu0 %v97
    %2180 = vmatpush1.xpose.msra.mxu0 %v96
    %2181 = vmatprep.subr.mxu0 0.0
    %2182 = vmatpush2.xpose.msra.mxu0 0.0
    %2183 = vmatprep.subr.mxu0 0.0
    %2184 = vmatpush2.xpose.msra.mxu0 0.0
    %2185 = vmatprep.subr.mxu0 0.0
    %2186 = vmatpush2.xpose.msra.mxu0 0.0
    %2187 = vmatprep.subr.mxu0 0.0
    %2188 = vmatpush2.xpose.msra.mxu0 0.0
    %2189 = vmatprep.subr.mxu0 0.0
    %2190 = vmatpush2.xpose.msra.mxu0 0.0
    %2191 = vmatprep.subr.mxu0 0.0
    %2192 = vmatpush2.xpose.msra.mxu0 0.0
    %2193 = vmatprep.subr.mxu0 0.0
    %2194 = vmatpush2.xpose.msra.mxu0 0.0
    %2195 = vmatprep.subr.mxu0 0.0
    %2196 = vmatpush2.xpose.msra.mxu0 0.0
    %2197 = vmatprep.subr.mxu0 0.0
    %2198 = vmatpush2.xpose.msra.mxu0 0.0
    %2199 = vmatprep.subr.mxu0 0.0
    %2200 = vmatpush2.xpose.msra.mxu0 0.0
    %2201 = vmatprep.subr.mxu0 0.0
    %2202 = vmatpush2.xpose.msra.mxu0 0.0
    %2203 = vmatprep.subr.mxu0 0.0
    %2204 = vmatpush2.xpose.msra.mxu0 0.0
    %2205 = vmatprep.subr.mxu0 0.0
    %2206 = vmatpush2.xpose.msra.mxu0 0.0
    %2207 = vmatprep.subr.mxu0 0.0
    %2208 = vmatpush2.xpose.msra.mxu0 0.0
    %2209 = vmatprep.subr.mxu0 0.0
    %2210 = vmatpush2.xpose.msra.mxu0 0.0
    %2211 = vmatprep.subr.mxu0 0.0
    %2212 = vmatpush2.xpose.msra.mxu0 0.0
    %2213 = vmatprep.mubr.f32.mxu0 %v361
    %2214 = vmatmul.mubr.f32.gmra.mxu0 %v359
    %v2215 = vpop.f32.mrf.mxu0
    %v2216 = vadd.f32 %v2146, %v2215
    %v2217 = vpop.f32.mrf.mxu0
    %2218 = vdwg.mxu0
    %2219 = vmatprep.subr.mxu0 0.0
    %2220 = vmatpush1.xpose.msra.mxu0 0.0
    %2221 = vmatprep.subr.mxu0 0.0
    %2222 = vmatpush1.xpose.msra.mxu0 0.0
    %2223 = vmatprep.subr.mxu0 0.0
    %2224 = vmatpush1.xpose.msra.mxu0 0.0
    %2225 = vmatprep.subr.mxu0 0.0
    %2226 = vmatpush1.xpose.msra.mxu0 0.0
    %2227 = vmatprep.subr.mxu0 0.0
    %2228 = vmatpush1.xpose.msra.mxu0 0.0
    %2229 = vmatprep.subr.mxu0 0.0
    %2230 = vmatpush1.xpose.msra.mxu0 0.0
    %2231 = vmatprep.subr.mxu0 0.0
    %2232 = vmatpush1.xpose.msra.mxu0 0.0
    %2233 = vmatprep.subr.mxu0 0.0
    %2234 = vmatpush1.xpose.msra.mxu0 0.0
    %2235 = vmatprep.subr.mxu0 0.0
    %2236 = vmatpush1.xpose.msra.mxu0 0.0
    %2237 = vmatprep.subr.mxu0 0.0
    %2238 = vmatpush1.xpose.msra.mxu0 0.0
    %2239 = vmatprep.subr.mxu0 0.0
    %2240 = vmatpush1.xpose.msra.mxu0 0.0
    %2241 = vmatprep.subr.mxu0 0.0
    %2242 = vmatpush1.xpose.msra.mxu0 0.0
    %2243 = vmatprep.subr.mxu0 0.0
    %2244 = vmatpush1.xpose.msra.mxu0 0.0
    %2245 = vmatprep.subr.mxu0 0.0
    %2246 = vmatpush1.xpose.msra.mxu0 0.0
    %2247 = vmatprep.subr.mxu0 0.0
    %2248 = vmatpush1.xpose.msra.mxu0 0.0
    %2249 = vmatprep.subr.mxu0 %v99
    %2250 = vmatpush1.xpose.msra.mxu0 %v98
    %2251 = vmatprep.subr.mxu0 0.0
    %2252 = vmatpush2.xpose.msra.mxu0 0.0
    %2253 = vmatprep.subr.mxu0 0.0
    %2254 = vmatpush2.xpose.msra.mxu0 0.0
    %2255 = vmatprep.subr.mxu0 0.0
    %2256 = vmatpush2.xpose.msra.mxu0 0.0
    %2257 = vmatprep.subr.mxu0 0.0
    %2258 = vmatpush2.xpose.msra.mxu0 0.0
    %2259 = vmatprep.subr.mxu0 0.0
    %2260 = vmatpush2.xpose.msra.mxu0 0.0
    %2261 = vmatprep.subr.mxu0 0.0
    %2262 = vmatpush2.xpose.msra.mxu0 0.0
    %2263 = vmatprep.subr.mxu0 0.0
    %2264 = vmatpush2.xpose.msra.mxu0 0.0
    %2265 = vmatprep.subr.mxu0 0.0
    %2266 = vmatpush2.xpose.msra.mxu0 0.0
    %2267 = vmatprep.subr.mxu0 0.0
    %2268 = vmatpush2.xpose.msra.mxu0 0.0
    %2269 = vmatprep.subr.mxu0 0.0
    %2270 = vmatpush2.xpose.msra.mxu0 0.0
    %2271 = vmatprep.subr.mxu0 0.0
    %2272 = vmatpush2.xpose.msra.mxu0 0.0
    %2273 = vmatprep.subr.mxu0 0.0
    %2274 = vmatpush2.xpose.msra.mxu0 0.0
    %2275 = vmatprep.subr.mxu0 0.0
    %2276 = vmatpush2.xpose.msra.mxu0 0.0
    %2277 = vmatprep.subr.mxu0 0.0
    %2278 = vmatpush2.xpose.msra.mxu0 0.0
    %2279 = vmatprep.subr.mxu0 0.0
    %2280 = vmatpush2.xpose.msra.mxu0 0.0
    %2281 = vmatprep.subr.mxu0 0.0
    %2282 = vmatpush2.xpose.msra.mxu0 0.0
    %2283 = vmatprep.mubr.f32.mxu0 %v377
    %2284 = vmatmul.mubr.f32.gmra.mxu0 %v369
    %v2285 = vpop.f32.mrf.mxu0
    %v2286 = vadd.f32 %v2216, %v2285
    %v2287 = vpop.f32.mrf.mxu0
    %2288 = vdwg.mxu0
    %2289 = vmatprep.subr.mxu0 0.0
    %2290 = vmatpush1.xpose.msra.mxu0 0.0
    %2291 = vmatprep.subr.mxu0 0.0
    %2292 = vmatpush1.xpose.msra.mxu0 0.0
    %2293 = vmatprep.subr.mxu0 0.0
    %2294 = vmatpush1.xpose.msra.mxu0 0.0
    %2295 = vmatprep.subr.mxu0 0.0
    %2296 = vmatpush1.xpose.msra.mxu0 0.0
    %2297 = vmatprep.subr.mxu0 0.0
    %2298 = vmatpush1.xpose.msra.mxu0 0.0
    %2299 = vmatprep.subr.mxu0 0.0
    %2300 = vmatpush1.xpose.msra.mxu0 0.0
    %2301 = vmatprep.subr.mxu0 0.0
    %2302 = vmatpush1.xpose.msra.mxu0 0.0
    %2303 = vmatprep.subr.mxu0 0.0
    %2304 = vmatpush1.xpose.msra.mxu0 0.0
    %2305 = vmatprep.subr.mxu0 0.0
    %2306 = vmatpush1.xpose.msra.mxu0 0.0
    %2307 = vmatprep.subr.mxu0 0.0
    %2308 = vmatpush1.xpose.msra.mxu0 0.0
    %2309 = vmatprep.subr.mxu0 0.0
    %2310 = vmatpush1.xpose.msra.mxu0 0.0
    %2311 = vmatprep.subr.mxu0 0.0
    %2312 = vmatpush1.xpose.msra.mxu0 0.0
    %2313 = vmatprep.subr.mxu0 0.0
    %2314 = vmatpush1.xpose.msra.mxu0 0.0
    %2315 = vmatprep.subr.mxu0 0.0
    %2316 = vmatpush1.xpose.msra.mxu0 0.0
    %2317 = vmatprep.subr.mxu0 0.0
    %2318 = vmatpush1.xpose.msra.mxu0 0.0
    %2319 = vmatprep.subr.mxu0 %v101
    %2320 = vmatpush1.xpose.msra.mxu0 %v100
    %2321 = vmatprep.subr.mxu0 0.0
    %2322 = vmatpush2.xpose.msra.mxu0 0.0
    %2323 = vmatprep.subr.mxu0 0.0
    %2324 = vmatpush2.xpose.msra.mxu0 0.0
    %2325 = vmatprep.subr.mxu0 0.0
    %2326 = vmatpush2.xpose.msra.mxu0 0.0
    %2327 = vmatprep.subr.mxu0 0.0
    %2328 = vmatpush2.xpose.msra.mxu0 0.0
    %2329 = vmatprep.subr.mxu0 0.0
    %2330 = vmatpush2.xpose.msra.mxu0 0.0
    %2331 = vmatprep.subr.mxu0 0.0
    %2332 = vmatpush2.xpose.msra.mxu0 0.0
    %2333 = vmatprep.subr.mxu0 0.0
    %2334 = vmatpush2.xpose.msra.mxu0 0.0
    %2335 = vmatprep.subr.mxu0 0.0
    %2336 = vmatpush2.xpose.msra.mxu0 0.0
    %2337 = vmatprep.subr.mxu0 0.0
    %2338 = vmatpush2.xpose.msra.mxu0 0.0
    %2339 = vmatprep.subr.mxu0 0.0
    %2340 = vmatpush2.xpose.msra.mxu0 0.0
    %2341 = vmatprep.subr.mxu0 0.0
    %2342 = vmatpush2.xpose.msra.mxu0 0.0
    %2343 = vmatprep.subr.mxu0 0.0
    %2344 = vmatpush2.xpose.msra.mxu0 0.0
    %2345 = vmatprep.subr.mxu0 0.0
    %2346 = vmatpush2.xpose.msra.mxu0 0.0
    %2347 = vmatprep.subr.mxu0 0.0
    %2348 = vmatpush2.xpose.msra.mxu0 0.0
    %2349 = vmatprep.subr.mxu0 0.0
    %2350 = vmatpush2.xpose.msra.mxu0 0.0
    %2351 = vmatprep.subr.mxu0 0.0
    %2352 = vmatpush2.xpose.msra.mxu0 0.0
    %2353 = vmatprep.mubr.f32.mxu0 %v378
    %2354 = vmatmul.mubr.f32.gmra.mxu0 %v376
    %v2355 = vpop.f32.mrf.mxu0
    %v2356 = vadd.f32 %v2286, %v2355
    %v2357 = vpop.f32.mrf.mxu0
    %2358 = vdwg.mxu0
    %2359 = vmatprep.subr.mxu0 0.0
    %2360 = vmatpush1.xpose.msra.mxu0 0.0
    %2361 = vmatprep.subr.mxu0 0.0
    %2362 = vmatpush1.xpose.msra.mxu0 0.0
    %2363 = vmatprep.subr.mxu0 0.0
    %2364 = vmatpush1.xpose.msra.mxu0 0.0
    %2365 = vmatprep.subr.mxu0 0.0
    %2366 = vmatpush1.xpose.msra.mxu0 0.0
    %2367 = vmatprep.subr.mxu0 0.0
    %2368 = vmatpush1.xpose.msra.mxu0 0.0
    %2369 = vmatprep.subr.mxu0 0.0
    %2370 = vmatpush1.xpose.msra.mxu0 0.0
    %2371 = vmatprep.subr.mxu0 0.0
    %2372 = vmatpush1.xpose.msra.mxu0 0.0
    %2373 = vmatprep.subr.mxu0 0.0
    %2374 = vmatpush1.xpose.msra.mxu0 0.0
    %2375 = vmatprep.subr.mxu0 0.0
    %2376 = vmatpush1.xpose.msra.mxu0 0.0
    %2377 = vmatprep.subr.mxu0 0.0
    %2378 = vmatpush1.xpose.msra.mxu0 0.0
    %2379 = vmatprep.subr.mxu0 0.0
    %2380 = vmatpush1.xpose.msra.mxu0 0.0
    %2381 = vmatprep.subr.mxu0 0.0
    %2382 = vmatpush1.xpose.msra.mxu0 0.0
    %2383 = vmatprep.subr.mxu0 0.0
    %2384 = vmatpush1.xpose.msra.mxu0 0.0
    %2385 = vmatprep.subr.mxu0 0.0
    %2386 = vmatpush1.xpose.msra.mxu0 0.0
    %2387 = vmatprep.subr.mxu0 0.0
    %2388 = vmatpush1.xpose.msra.mxu0 0.0
    %2389 = vmatprep.subr.mxu0 %v103
    %2390 = vmatpush1.xpose.msra.mxu0 %v102
    %2391 = vmatprep.subr.mxu0 0.0
    %2392 = vmatpush2.xpose.msra.mxu0 0.0
    %2393 = vmatprep.subr.mxu0 0.0
    %2394 = vmatpush2.xpose.msra.mxu0 0.0
    %2395 = vmatprep.subr.mxu0 0.0
    %2396 = vmatpush2.xpose.msra.mxu0 0.0
    %2397 = vmatprep.subr.mxu0 0.0
    %2398 = vmatpush2.xpose.msra.mxu0 0.0
    %2399 = vmatprep.subr.mxu0 0.0
    %2400 = vmatpush2.xpose.msra.mxu0 0.0
    %2401 = vmatprep.subr.mxu0 0.0
    %2402 = vmatpush2.xpose.msra.mxu0 0.0
    %2403 = vmatprep.subr.mxu0 0.0
    %2404 = vmatpush2.xpose.msra.mxu0 0.0
    %2405 = vmatprep.subr.mxu0 0.0
    %2406 = vmatpush2.xpose.msra.mxu0 0.0
    %2407 = vmatprep.subr.mxu0 0.0
    %2408 = vmatpush2.xpose.msra.mxu0 0.0
    %2409 = vmatprep.subr.mxu0 0.0
    %2410 = vmatpush2.xpose.msra.mxu0 0.0
    %2411 = vmatprep.subr.mxu0 0.0
    %2412 = vmatpush2.xpose.msra.mxu0 0.0
    %2413 = vmatprep.subr.mxu0 0.0
    %2414 = vmatpush2.xpose.msra.mxu0 0.0
    %2415 = vmatprep.subr.mxu0 0.0
    %2416 = vmatpush2.xpose.msra.mxu0 0.0
    %2417 = vmatprep.subr.mxu0 0.0
    %2418 = vmatpush2.xpose.msra.mxu0 0.0
    %2419 = vmatprep.subr.mxu0 0.0
    %2420 = vmatpush2.xpose.msra.mxu0 0.0
    %2421 = vmatprep.subr.mxu0 0.0
    %2422 = vmatpush2.xpose.msra.mxu0 0.0
    %2423 = vmatprep.mubr.f32.mxu0 %v394
    %2424 = vmatmul.mubr.f32.gmra.mxu0 %v386
    %v2425 = vpop.f32.mrf.mxu0
    %v2426 = vadd.f32 %v2356, %v2425
    %v2427 = vpop.f32.mrf.mxu0
    %2428 = vdwg.mxu0
    %2429 = vmatprep.subr.mxu0 0.0
    %2430 = vmatpush1.xpose.msra.mxu0 0.0
    %2431 = vmatprep.subr.mxu0 0.0
    %2432 = vmatpush1.xpose.msra.mxu0 0.0
    %2433 = vmatprep.subr.mxu0 0.0
    %2434 = vmatpush1.xpose.msra.mxu0 0.0
    %2435 = vmatprep.subr.mxu0 0.0
    %2436 = vmatpush1.xpose.msra.mxu0 0.0
    %2437 = vmatprep.subr.mxu0 0.0
    %2438 = vmatpush1.xpose.msra.mxu0 0.0
    %2439 = vmatprep.subr.mxu0 0.0
    %2440 = vmatpush1.xpose.msra.mxu0 0.0
    %2441 = vmatprep.subr.mxu0 0.0
    %2442 = vmatpush1.xpose.msra.mxu0 0.0
    %2443 = vmatprep.subr.mxu0 0.0
    %2444 = vmatpush1.xpose.msra.mxu0 0.0
    %2445 = vmatprep.subr.mxu0 0.0
    %2446 = vmatpush1.xpose.msra.mxu0 0.0
    %2447 = vmatprep.subr.mxu0 0.0
    %2448 = vmatpush1.xpose.msra.mxu0 0.0
    %2449 = vmatprep.subr.mxu0 0.0
    %2450 = vmatpush1.xpose.msra.mxu0 0.0
    %2451 = vmatprep.subr.mxu0 0.0
    %2452 = vmatpush1.xpose.msra.mxu0 0.0
    %2453 = vmatprep.subr.mxu0 0.0
    %2454 = vmatpush1.xpose.msra.mxu0 0.0
    %2455 = vmatprep.subr.mxu0 0.0
    %2456 = vmatpush1.xpose.msra.mxu0 0.0
    %2457 = vmatprep.subr.mxu0 0.0
    %2458 = vmatpush1.xpose.msra.mxu0 0.0
    %2459 = vmatprep.subr.mxu0 %v105
    %2460 = vmatpush1.xpose.msra.mxu0 %v104
    %2461 = vmatprep.subr.mxu0 0.0
    %2462 = vmatpush2.xpose.msra.mxu0 0.0
    %2463 = vmatprep.subr.mxu0 0.0
    %2464 = vmatpush2.xpose.msra.mxu0 0.0
    %2465 = vmatprep.subr.mxu0 0.0
    %2466 = vmatpush2.xpose.msra.mxu0 0.0
    %2467 = vmatprep.subr.mxu0 0.0
    %2468 = vmatpush2.xpose.msra.mxu0 0.0
    %2469 = vmatprep.subr.mxu0 0.0
    %2470 = vmatpush2.xpose.msra.mxu0 0.0
    %2471 = vmatprep.subr.mxu0 0.0
    %2472 = vmatpush2.xpose.msra.mxu0 0.0
    %2473 = vmatprep.subr.mxu0 0.0
    %2474 = vmatpush2.xpose.msra.mxu0 0.0
    %2475 = vmatprep.subr.mxu0 0.0
    %2476 = vmatpush2.xpose.msra.mxu0 0.0
    %2477 = vmatprep.subr.mxu0 0.0
    %2478 = vmatpush2.xpose.msra.mxu0 0.0
    %2479 = vmatprep.subr.mxu0 0.0
    %2480 = vmatpush2.xpose.msra.mxu0 0.0
    %2481 = vmatprep.subr.mxu0 0.0
    %2482 = vmatpush2.xpose.msra.mxu0 0.0
    %2483 = vmatprep.subr.mxu0 0.0
    %2484 = vmatpush2.xpose.msra.mxu0 0.0
    %2485 = vmatprep.subr.mxu0 0.0
    %2486 = vmatpush2.xpose.msra.mxu0 0.0
    %2487 = vmatprep.subr.mxu0 0.0
    %2488 = vmatpush2.xpose.msra.mxu0 0.0
    %2489 = vmatprep.subr.mxu0 0.0
    %2490 = vmatpush2.xpose.msra.mxu0 0.0
    %2491 = vmatprep.subr.mxu0 0.0
    %2492 = vmatpush2.xpose.msra.mxu0 0.0
    %2493 = vmatprep.mubr.f32.mxu0 %v395
    %2494 = vmatmul.mubr.f32.gmra.mxu0 %v393
    %v2495 = vpop.f32.mrf.mxu0
    %v2496 = vadd.f32 %v2426, %v2495
    %v2497 = vpop.f32.mrf.mxu0
    %2498 = vdwg.mxu0
    %2499 = vmatprep.subr.mxu0 0.0
    %2500 = vmatpush1.xpose.msra.mxu0 0.0
    %2501 = vmatprep.subr.mxu0 0.0
    %2502 = vmatpush1.xpose.msra.mxu0 0.0
    %2503 = vmatprep.subr.mxu0 0.0
    %2504 = vmatpush1.xpose.msra.mxu0 0.0
    %2505 = vmatprep.subr.mxu0 0.0
    %2506 = vmatpush1.xpose.msra.mxu0 0.0
    %2507 = vmatprep.subr.mxu0 0.0
    %2508 = vmatpush1.xpose.msra.mxu0 0.0
    %2509 = vmatprep.subr.mxu0 0.0
    %2510 = vmatpush1.xpose.msra.mxu0 0.0
    %2511 = vmatprep.subr.mxu0 0.0
    %2512 = vmatpush1.xpose.msra.mxu0 0.0
    %2513 = vmatprep.subr.mxu0 0.0
    %2514 = vmatpush1.xpose.msra.mxu0 0.0
    %2515 = vmatprep.subr.mxu0 0.0
    %2516 = vmatpush1.xpose.msra.mxu0 0.0
    %2517 = vmatprep.subr.mxu0 0.0
    %2518 = vmatpush1.xpose.msra.mxu0 0.0
    %2519 = vmatprep.subr.mxu0 0.0
    %2520 = vmatpush1.xpose.msra.mxu0 0.0
    %2521 = vmatprep.subr.mxu0 0.0
    %2522 = vmatpush1.xpose.msra.mxu0 0.0
    %2523 = vmatprep.subr.mxu0 0.0
    %2524 = vmatpush1.xpose.msra.mxu0 0.0
    %2525 = vmatprep.subr.mxu0 0.0
    %2526 = vmatpush1.xpose.msra.mxu0 0.0
    %2527 = vmatprep.subr.mxu0 0.0
    %2528 = vmatpush1.xpose.msra.mxu0 0.0
    %2529 = vmatprep.subr.mxu0 %v107
    %2530 = vmatpush1.xpose.msra.mxu0 %v106
    %2531 = vmatprep.subr.mxu0 0.0
    %2532 = vmatpush2.xpose.msra.mxu0 0.0
    %2533 = vmatprep.subr.mxu0 0.0
    %2534 = vmatpush2.xpose.msra.mxu0 0.0
    %2535 = vmatprep.subr.mxu0 0.0
    %2536 = vmatpush2.xpose.msra.mxu0 0.0
    %2537 = vmatprep.subr.mxu0 0.0
    %2538 = vmatpush2.xpose.msra.mxu0 0.0
    %2539 = vmatprep.subr.mxu0 0.0
    %2540 = vmatpush2.xpose.msra.mxu0 0.0
    %2541 = vmatprep.subr.mxu0 0.0
    %2542 = vmatpush2.xpose.msra.mxu0 0.0
    %2543 = vmatprep.subr.mxu0 0.0
    %2544 = vmatpush2.xpose.msra.mxu0 0.0
    %2545 = vmatprep.subr.mxu0 0.0
    %2546 = vmatpush2.xpose.msra.mxu0 0.0
    %2547 = vmatprep.subr.mxu0 0.0
    %2548 = vmatpush2.xpose.msra.mxu0 0.0
    %2549 = vmatprep.subr.mxu0 0.0
    %2550 = vmatpush2.xpose.msra.mxu0 0.0
    %2551 = vmatprep.subr.mxu0 0.0
    %2552 = vmatpush2.xpose.msra.mxu0 0.0
    %2553 = vmatprep.subr.mxu0 0.0
    %2554 = vmatpush2.xpose.msra.mxu0 0.0
    %2555 = vmatprep.subr.mxu0 0.0
    %2556 = vmatpush2.xpose.msra.mxu0 0.0
    %2557 = vmatprep.subr.mxu0 0.0
    %2558 = vmatpush2.xpose.msra.mxu0 0.0
    %2559 = vmatprep.subr.mxu0 0.0
    %2560 = vmatpush2.xpose.msra.mxu0 0.0
    %2561 = vmatprep.subr.mxu0 0.0
    %2562 = vmatpush2.xpose.msra.mxu0 0.0
    %2563 = vmatprep.mubr.f32.mxu0 %v411
    %2564 = vmatmul.mubr.f32.gmra.mxu0 %v403
    %v2565 = vpop.f32.mrf.mxu0
    %v2566 = vadd.f32 %v2496, %v2565
    %v2567 = vpop.f32.mrf.mxu0
    %2568 = vdwg.mxu0
    %2569 = vmatprep.subr.mxu0 0.0
    %2570 = vmatpush1.xpose.msra.mxu0 0.0
    %2571 = vmatprep.subr.mxu0 0.0
    %2572 = vmatpush1.xpose.msra.mxu0 0.0
    %2573 = vmatprep.subr.mxu0 0.0
    %2574 = vmatpush1.xpose.msra.mxu0 0.0
    %2575 = vmatprep.subr.mxu0 0.0
    %2576 = vmatpush1.xpose.msra.mxu0 0.0
    %2577 = vmatprep.subr.mxu0 0.0
    %2578 = vmatpush1.xpose.msra.mxu0 0.0
    %2579 = vmatprep.subr.mxu0 0.0
    %2580 = vmatpush1.xpose.msra.mxu0 0.0
    %2581 = vmatprep.subr.mxu0 0.0
    %2582 = vmatpush1.xpose.msra.mxu0 0.0
    %2583 = vmatprep.subr.mxu0 0.0
    %2584 = vmatpush1.xpose.msra.mxu0 0.0
    %2585 = vmatprep.subr.mxu0 0.0
    %2586 = vmatpush1.xpose.msra.mxu0 0.0
    %2587 = vmatprep.subr.mxu0 0.0
    %2588 = vmatpush1.xpose.msra.mxu0 0.0
    %2589 = vmatprep.subr.mxu0 0.0
    %2590 = vmatpush1.xpose.msra.mxu0 0.0
    %2591 = vmatprep.subr.mxu0 0.0
    %2592 = vmatpush1.xpose.msra.mxu0 0.0
    %2593 = vmatprep.subr.mxu0 0.0
    %2594 = vmatpush1.xpose.msra.mxu0 0.0
    %2595 = vmatprep.subr.mxu0 0.0
    %2596 = vmatpush1.xpose.msra.mxu0 0.0
    %2597 = vmatprep.subr.mxu0 0.0
    %2598 = vmatpush1.xpose.msra.mxu0 0.0
    %2599 = vmatprep.subr.mxu0 %v109
    %2600 = vmatpush1.xpose.msra.mxu0 %v108
    %2601 = vmatprep.subr.mxu0 0.0
    %2602 = vmatpush2.xpose.msra.mxu0 0.0
    %2603 = vmatprep.subr.mxu0 0.0
    %2604 = vmatpush2.xpose.msra.mxu0 0.0
    %2605 = vmatprep.subr.mxu0 0.0
    %2606 = vmatpush2.xpose.msra.mxu0 0.0
    %2607 = vmatprep.subr.mxu0 0.0
    %2608 = vmatpush2.xpose.msra.mxu0 0.0
    %2609 = vmatprep.subr.mxu0 0.0
    %2610 = vmatpush2.xpose.msra.mxu0 0.0
    %2611 = vmatprep.subr.mxu0 0.0
    %2612 = vmatpush2.xpose.msra.mxu0 0.0
    %2613 = vmatprep.subr.mxu0 0.0
    %2614 = vmatpush2.xpose.msra.mxu0 0.0
    %2615 = vmatprep.subr.mxu0 0.0
    %2616 = vmatpush2.xpose.msra.mxu0 0.0
    %2617 = vmatprep.subr.mxu0 0.0
    %2618 = vmatpush2.xpose.msra.mxu0 0.0
    %2619 = vmatprep.subr.mxu0 0.0
    %2620 = vmatpush2.xpose.msra.mxu0 0.0
    %2621 = vmatprep.subr.mxu0 0.0
    %2622 = vmatpush2.xpose.msra.mxu0 0.0
    %2623 = vmatprep.subr.mxu0 0.0
    %2624 = vmatpush2.xpose.msra.mxu0 0.0
    %2625 = vmatprep.subr.mxu0 0.0
    %2626 = vmatpush2.xpose.msra.mxu0 0.0
    %2627 = vmatprep.subr.mxu0 0.0
    %2628 = vmatpush2.xpose.msra.mxu0 0.0
    %2629 = vmatprep.subr.mxu0 0.0
    %2630 = vmatpush2.xpose.msra.mxu0 0.0
    %2631 = vmatprep.subr.mxu0 0.0
    %2632 = vmatpush2.xpose.msra.mxu0 0.0
    %2633 = vmatprep.mubr.f32.mxu0 %v412
    %2634 = vmatmul.mubr.f32.gmra.mxu0 %v410
    %v2635 = vpop.f32.mrf.mxu0
    %v2636 = vadd.f32 %v2566, %v2635
    %v2637 = vpop.f32.mrf.mxu0
    %2638 = vdwg.mxu0
    %2639 = vmatprep.subr.mxu0 0.0
    %2640 = vmatpush1.xpose.msra.mxu0 0.0
    %2641 = vmatprep.subr.mxu0 0.0
    %2642 = vmatpush1.xpose.msra.mxu0 0.0
    %2643 = vmatprep.subr.mxu0 0.0
    %2644 = vmatpush1.xpose.msra.mxu0 0.0
    %2645 = vmatprep.subr.mxu0 0.0
    %2646 = vmatpush1.xpose.msra.mxu0 0.0
    %2647 = vmatprep.subr.mxu0 0.0
    %2648 = vmatpush1.xpose.msra.mxu0 0.0
    %2649 = vmatprep.subr.mxu0 0.0
    %2650 = vmatpush1.xpose.msra.mxu0 0.0
    %2651 = vmatprep.subr.mxu0 0.0
    %2652 = vmatpush1.xpose.msra.mxu0 0.0
    %2653 = vmatprep.subr.mxu0 0.0
    %2654 = vmatpush1.xpose.msra.mxu0 0.0
    %2655 = vmatprep.subr.mxu0 0.0
    %2656 = vmatpush1.xpose.msra.mxu0 0.0
    %2657 = vmatprep.subr.mxu0 0.0
    %2658 = vmatpush1.xpose.msra.mxu0 0.0
    %2659 = vmatprep.subr.mxu0 0.0
    %2660 = vmatpush1.xpose.msra.mxu0 0.0
    %2661 = vmatprep.subr.mxu0 0.0
    %2662 = vmatpush1.xpose.msra.mxu0 0.0
    %2663 = vmatprep.subr.mxu0 0.0
    %2664 = vmatpush1.xpose.msra.mxu0 0.0
    %2665 = vmatprep.subr.mxu0 0.0
    %2666 = vmatpush1.xpose.msra.mxu0 0.0
    %2667 = vmatprep.subr.mxu0 0.0
    %2668 = vmatpush1.xpose.msra.mxu0 0.0
    %2669 = vmatprep.subr.mxu0 %v111
    %2670 = vmatpush1.xpose.msra.mxu0 %v110
    %2671 = vmatprep.subr.mxu0 0.0
    %2672 = vmatpush2.xpose.msra.mxu0 0.0
    %2673 = vmatprep.subr.mxu0 0.0
    %2674 = vmatpush2.xpose.msra.mxu0 0.0
    %2675 = vmatprep.subr.mxu0 0.0
    %2676 = vmatpush2.xpose.msra.mxu0 0.0
    %2677 = vmatprep.subr.mxu0 0.0
    %2678 = vmatpush2.xpose.msra.mxu0 0.0
    %2679 = vmatprep.subr.mxu0 0.0
    %2680 = vmatpush2.xpose.msra.mxu0 0.0
    %2681 = vmatprep.subr.mxu0 0.0
    %2682 = vmatpush2.xpose.msra.mxu0 0.0
    %2683 = vmatprep.subr.mxu0 0.0
    %2684 = vmatpush2.xpose.msra.mxu0 0.0
    %2685 = vmatprep.subr.mxu0 0.0
    %2686 = vmatpush2.xpose.msra.mxu0 0.0
    %2687 = vmatprep.subr.mxu0 0.0
    %2688 = vmatpush2.xpose.msra.mxu0 0.0
    %2689 = vmatprep.subr.mxu0 0.0
    %2690 = vmatpush2.xpose.msra.mxu0 0.0
    %2691 = vmatprep.subr.mxu0 0.0
    %2692 = vmatpush2.xpose.msra.mxu0 0.0
    %2693 = vmatprep.subr.mxu0 0.0
    %2694 = vmatpush2.xpose.msra.mxu0 0.0
    %2695 = vmatprep.subr.mxu0 0.0
    %2696 = vmatpush2.xpose.msra.mxu0 0.0
    %2697 = vmatprep.subr.mxu0 0.0
    %2698 = vmatpush2.xpose.msra.mxu0 0.0
    %2699 = vmatprep.subr.mxu0 0.0
    %2700 = vmatpush2.xpose.msra.mxu0 0.0
    %2701 = vmatprep.subr.mxu0 0.0
    %2702 = vmatpush2.xpose.msra.mxu0 0.0
    %2703 = vmatprep.mubr.f32.mxu0 %v428
    %2704 = vmatmul.mubr.f32.gmra.mxu0 %v420
    %v2705 = vpop.f32.mrf.mxu0
    %v2706 = vadd.f32 %v2636, %v2705
    %v2707 = vpop.f32.mrf.mxu0
    %2708 = vdwg.mxu0
    %2709 = vmatprep.subr.mxu0 0.0
    %2710 = vmatpush1.xpose.msra.mxu0 0.0
    %2711 = vmatprep.subr.mxu0 0.0
    %2712 = vmatpush1.xpose.msra.mxu0 0.0
    %2713 = vmatprep.subr.mxu0 0.0
    %2714 = vmatpush1.xpose.msra.mxu0 0.0
    %2715 = vmatprep.subr.mxu0 0.0
    %2716 = vmatpush1.xpose.msra.mxu0 0.0
    %2717 = vmatprep.subr.mxu0 0.0
    %2718 = vmatpush1.xpose.msra.mxu0 0.0
    %2719 = vmatprep.subr.mxu0 0.0
    %2720 = vmatpush1.xpose.msra.mxu0 0.0
    %2721 = vmatprep.subr.mxu0 0.0
    %2722 = vmatpush1.xpose.msra.mxu0 0.0
    %2723 = vmatprep.subr.mxu0 0.0
    %2724 = vmatpush1.xpose.msra.mxu0 0.0
    %2725 = vmatprep.subr.mxu0 0.0
    %2726 = vmatpush1.xpose.msra.mxu0 0.0
    %2727 = vmatprep.subr.mxu0 0.0
    %2728 = vmatpush1.xpose.msra.mxu0 0.0
    %2729 = vmatprep.subr.mxu0 0.0
    %2730 = vmatpush1.xpose.msra.mxu0 0.0
    %2731 = vmatprep.subr.mxu0 0.0
    %2732 = vmatpush1.xpose.msra.mxu0 0.0
    %2733 = vmatprep.subr.mxu0 0.0
    %2734 = vmatpush1.xpose.msra.mxu0 0.0
    %2735 = vmatprep.subr.mxu0 0.0
    %2736 = vmatpush1.xpose.msra.mxu0 0.0
    %2737 = vmatprep.subr.mxu0 0.0
    %2738 = vmatpush1.xpose.msra.mxu0 0.0
    %2739 = vmatprep.subr.mxu0 %v113
    %2740 = vmatpush1.xpose.msra.mxu0 %v112
    %2741 = vmatprep.subr.mxu0 0.0
    %2742 = vmatpush2.xpose.msra.mxu0 0.0
    %2743 = vmatprep.subr.mxu0 0.0
    %2744 = vmatpush2.xpose.msra.mxu0 0.0
    %2745 = vmatprep.subr.mxu0 0.0
    %2746 = vmatpush2.xpose.msra.mxu0 0.0
    %2747 = vmatprep.subr.mxu0 0.0
    %2748 = vmatpush2.xpose.msra.mxu0 0.0
    %2749 = vmatprep.subr.mxu0 0.0
    %2750 = vmatpush2.xpose.msra.mxu0 0.0
    %2751 = vmatprep.subr.mxu0 0.0
    %2752 = vmatpush2.xpose.msra.mxu0 0.0
    %2753 = vmatprep.subr.mxu0 0.0
    %2754 = vmatpush2.xpose.msra.mxu0 0.0
    %2755 = vmatprep.subr.mxu0 0.0
    %2756 = vmatpush2.xpose.msra.mxu0 0.0
    %2757 = vmatprep.subr.mxu0 0.0
    %2758 = vmatpush2.xpose.msra.mxu0 0.0
    %2759 = vmatprep.subr.mxu0 0.0
    %2760 = vmatpush2.xpose.msra.mxu0 0.0
    %2761 = vmatprep.subr.mxu0 0.0
    %2762 = vmatpush2.xpose.msra.mxu0 0.0
    %2763 = vmatprep.subr.mxu0 0.0
    %2764 = vmatpush2.xpose.msra.mxu0 0.0
    %2765 = vmatprep.subr.mxu0 0.0
    %2766 = vmatpush2.xpose.msra.mxu0 0.0
    %2767 = vmatprep.subr.mxu0 0.0
    %2768 = vmatpush2.xpose.msra.mxu0 0.0
    %2769 = vmatprep.subr.mxu0 0.0
    %2770 = vmatpush2.xpose.msra.mxu0 0.0
    %2771 = vmatprep.subr.mxu0 0.0
    %2772 = vmatpush2.xpose.msra.mxu0 0.0
    %2773 = vmatprep.mubr.f32.mxu0 %v429
    %2774 = vmatmul.mubr.f32.gmra.mxu0 %v427
    %v2775 = vpop.f32.mrf.mxu0
    %v2776 = vadd.f32 %v2706, %v2775
    %v2777 = vpop.f32.mrf.mxu0
    %2778 = vdwg.mxu0
    %2779 = vmatprep.subr.mxu0 0.0
    %2780 = vmatpush1.xpose.msra.mxu0 0.0
    %2781 = vmatprep.subr.mxu0 0.0
    %2782 = vmatpush1.xpose.msra.mxu0 0.0
    %2783 = vmatprep.subr.mxu0 0.0
    %2784 = vmatpush1.xpose.msra.mxu0 0.0
    %2785 = vmatprep.subr.mxu0 0.0
    %2786 = vmatpush1.xpose.msra.mxu0 0.0
    %2787 = vmatprep.subr.mxu0 0.0
    %2788 = vmatpush1.xpose.msra.mxu0 0.0
    %2789 = vmatprep.subr.mxu0 0.0
    %2790 = vmatpush1.xpose.msra.mxu0 0.0
    %2791 = vmatprep.subr.mxu0 0.0
    %2792 = vmatpush1.xpose.msra.mxu0 0.0
    %2793 = vmatprep.subr.mxu0 0.0
    %2794 = vmatpush1.xpose.msra.mxu0 0.0
    %2795 = vmatprep.subr.mxu0 0.0
    %2796 = vmatpush1.xpose.msra.mxu0 0.0
    %2797 = vmatprep.subr.mxu0 0.0
    %2798 = vmatpush1.xpose.msra.mxu0 0.0
    %2799 = vmatprep.subr.mxu0 0.0
    %2800 = vmatpush1.xpose.msra.mxu0 0.0
    %2801 = vmatprep.subr.mxu0 0.0
    %2802 = vmatpush1.xpose.msra.mxu0 0.0
    %2803 = vmatprep.subr.mxu0 0.0
    %2804 = vmatpush1.xpose.msra.mxu0 0.0
    %2805 = vmatprep.subr.mxu0 0.0
    %2806 = vmatpush1.xpose.msra.mxu0 0.0
    %2807 = vmatprep.subr.mxu0 0.0
    %2808 = vmatpush1.xpose.msra.mxu0 0.0
    %2809 = vmatprep.subr.mxu0 %v115
    %2810 = vmatpush1.xpose.msra.mxu0 %v114
    %2811 = vmatprep.subr.mxu0 0.0
    %2812 = vmatpush2.xpose.msra.mxu0 0.0
    %2813 = vmatprep.subr.mxu0 0.0
    %2814 = vmatpush2.xpose.msra.mxu0 0.0
    %2815 = vmatprep.subr.mxu0 0.0
    %2816 = vmatpush2.xpose.msra.mxu0 0.0
    %2817 = vmatprep.subr.mxu0 0.0
    %2818 = vmatpush2.xpose.msra.mxu0 0.0
    %2819 = vmatprep.subr.mxu0 0.0
    %2820 = vmatpush2.xpose.msra.mxu0 0.0
    %2821 = vmatprep.subr.mxu0 0.0
    %2822 = vmatpush2.xpose.msra.mxu0 0.0
    %2823 = vmatprep.subr.mxu0 0.0
    %2824 = vmatpush2.xpose.msra.mxu0 0.0
    %2825 = vmatprep.subr.mxu0 0.0
    %2826 = vmatpush2.xpose.msra.mxu0 0.0
    %2827 = vmatprep.subr.mxu0 0.0
    %2828 = vmatpush2.xpose.msra.mxu0 0.0
    %2829 = vmatprep.subr.mxu0 0.0
    %2830 = vmatpush2.xpose.msra.mxu0 0.0
    %2831 = vmatprep.subr.mxu0 0.0
    %2832 = vmatpush2.xpose.msra.mxu0 0.0
    %2833 = vmatprep.subr.mxu0 0.0
    %2834 = vmatpush2.xpose.msra.mxu0 0.0
    %2835 = vmatprep.subr.mxu0 0.0
    %2836 = vmatpush2.xpose.msra.mxu0 0.0
    %2837 = vmatprep.subr.mxu0 0.0
    %2838 = vmatpush2.xpose.msra.mxu0 0.0
    %2839 = vmatprep.subr.mxu0 0.0
    %2840 = vmatpush2.xpose.msra.mxu0 0.0
    %2841 = vmatprep.subr.mxu0 0.0
    %2842 = vmatpush2.xpose.msra.mxu0 0.0
    %2843 = vmatprep.mubr.f32.mxu0 %v445
    %2844 = vmatmul.mubr.f32.gmra.mxu0 %v437
    %v2845 = vpop.f32.mrf.mxu0
    %v2846 = vadd.f32 %v2776, %v2845
    %v2847 = vpop.f32.mrf.mxu0
    %2848 = vdwg.mxu0
    %2849 = vmatprep.subr.mxu0 0.0
    %2850 = vmatpush1.xpose.msra.mxu0 0.0
    %2851 = vmatprep.subr.mxu0 0.0
    %2852 = vmatpush1.xpose.msra.mxu0 0.0
    %2853 = vmatprep.subr.mxu0 0.0
    %2854 = vmatpush1.xpose.msra.mxu0 0.0
    %2855 = vmatprep.subr.mxu0 0.0
    %2856 = vmatpush1.xpose.msra.mxu0 0.0
    %2857 = vmatprep.subr.mxu0 0.0
    %2858 = vmatpush1.xpose.msra.mxu0 0.0
    %2859 = vmatprep.subr.mxu0 0.0
    %2860 = vmatpush1.xpose.msra.mxu0 0.0
    %2861 = vmatprep.subr.mxu0 0.0
    %2862 = vmatpush1.xpose.msra.mxu0 0.0
    %2863 = vmatprep.subr.mxu0 0.0
    %2864 = vmatpush1.xpose.msra.mxu0 0.0
    %2865 = vmatprep.subr.mxu0 0.0
    %2866 = vmatpush1.xpose.msra.mxu0 0.0
    %2867 = vmatprep.subr.mxu0 0.0
    %2868 = vmatpush1.xpose.msra.mxu0 0.0
    %2869 = vmatprep.subr.mxu0 0.0
    %2870 = vmatpush1.xpose.msra.mxu0 0.0
    %2871 = vmatprep.subr.mxu0 0.0
    %2872 = vmatpush1.xpose.msra.mxu0 0.0
    %2873 = vmatprep.subr.mxu0 0.0
    %2874 = vmatpush1.xpose.msra.mxu0 0.0
    %2875 = vmatprep.subr.mxu0 0.0
    %2876 = vmatpush1.xpose.msra.mxu0 0.0
    %2877 = vmatprep.subr.mxu0 0.0
    %2878 = vmatpush1.xpose.msra.mxu0 0.0
    %2879 = vmatprep.subr.mxu0 %v117
    %2880 = vmatpush1.xpose.msra.mxu0 %v116
    %2881 = vmatprep.subr.mxu0 0.0
    %2882 = vmatpush2.xpose.msra.mxu0 0.0
    %2883 = vmatprep.subr.mxu0 0.0
    %2884 = vmatpush2.xpose.msra.mxu0 0.0
    %2885 = vmatprep.subr.mxu0 0.0
    %2886 = vmatpush2.xpose.msra.mxu0 0.0
    %2887 = vmatprep.subr.mxu0 0.0
    %2888 = vmatpush2.xpose.msra.mxu0 0.0
    %2889 = vmatprep.subr.mxu0 0.0
    %2890 = vmatpush2.xpose.msra.mxu0 0.0
    %2891 = vmatprep.subr.mxu0 0.0
    %2892 = vmatpush2.xpose.msra.mxu0 0.0
    %2893 = vmatprep.subr.mxu0 0.0
    %2894 = vmatpush2.xpose.msra.mxu0 0.0
    %2895 = vmatprep.subr.mxu0 0.0
    %2896 = vmatpush2.xpose.msra.mxu0 0.0
    %2897 = vmatprep.subr.mxu0 0.0
    %2898 = vmatpush2.xpose.msra.mxu0 0.0
    %2899 = vmatprep.subr.mxu0 0.0
    %2900 = vmatpush2.xpose.msra.mxu0 0.0
    %2901 = vmatprep.subr.mxu0 0.0
    %2902 = vmatpush2.xpose.msra.mxu0 0.0
    %2903 = vmatprep.subr.mxu0 0.0
    %2904 = vmatpush2.xpose.msra.mxu0 0.0
    %2905 = vmatprep.subr.mxu0 0.0
    %2906 = vmatpush2.xpose.msra.mxu0 0.0
    %2907 = vmatprep.subr.mxu0 0.0
    %2908 = vmatpush2.xpose.msra.mxu0 0.0
    %2909 = vmatprep.subr.mxu0 0.0
    %2910 = vmatpush2.xpose.msra.mxu0 0.0
    %2911 = vmatprep.subr.mxu0 0.0
    %2912 = vmatpush2.xpose.msra.mxu0 0.0
    %2913 = vmatprep.mubr.f32.mxu0 %v446
    %2914 = vmatmul.mubr.f32.gmra.mxu0 %v444
    %v2915 = vpop.f32.mrf.mxu0
    %v2916 = vadd.f32 %v2846, %v2915
    %v2917 = vpop.f32.mrf.mxu0
    %2918 = vdwg.mxu0
    %2919 = vmatprep.subr.mxu0 0.0
    %2920 = vmatpush1.xpose.msra.mxu0 0.0
    %2921 = vmatprep.subr.mxu0 0.0
    %2922 = vmatpush1.xpose.msra.mxu0 0.0
    %2923 = vmatprep.subr.mxu0 0.0
    %2924 = vmatpush1.xpose.msra.mxu0 0.0
    %2925 = vmatprep.subr.mxu0 0.0
    %2926 = vmatpush1.xpose.msra.mxu0 0.0
    %2927 = vmatprep.subr.mxu0 0.0
    %2928 = vmatpush1.xpose.msra.mxu0 0.0
    %2929 = vmatprep.subr.mxu0 0.0
    %2930 = vmatpush1.xpose.msra.mxu0 0.0
    %2931 = vmatprep.subr.mxu0 0.0
    %2932 = vmatpush1.xpose.msra.mxu0 0.0
    %2933 = vmatprep.subr.mxu0 0.0
    %2934 = vmatpush1.xpose.msra.mxu0 0.0
    %2935 = vmatprep.subr.mxu0 0.0
    %2936 = vmatpush1.xpose.msra.mxu0 0.0
    %2937 = vmatprep.subr.mxu0 0.0
    %2938 = vmatpush1.xpose.msra.mxu0 0.0
    %2939 = vmatprep.subr.mxu0 0.0
    %2940 = vmatpush1.xpose.msra.mxu0 0.0
    %2941 = vmatprep.subr.mxu0 0.0
    %2942 = vmatpush1.xpose.msra.mxu0 0.0
    %2943 = vmatprep.subr.mxu0 0.0
    %2944 = vmatpush1.xpose.msra.mxu0 0.0
    %2945 = vmatprep.subr.mxu0 0.0
    %2946 = vmatpush1.xpose.msra.mxu0 0.0
    %2947 = vmatprep.subr.mxu0 0.0
    %2948 = vmatpush1.xpose.msra.mxu0 0.0
    %2949 = vmatprep.subr.mxu0 %v119
    %2950 = vmatpush1.xpose.msra.mxu0 %v118
    %2951 = vmatprep.subr.mxu0 0.0
    %2952 = vmatpush2.xpose.msra.mxu0 0.0
    %2953 = vmatprep.subr.mxu0 0.0
    %2954 = vmatpush2.xpose.msra.mxu0 0.0
    %2955 = vmatprep.subr.mxu0 0.0
    %2956 = vmatpush2.xpose.msra.mxu0 0.0
    %2957 = vmatprep.subr.mxu0 0.0
    %2958 = vmatpush2.xpose.msra.mxu0 0.0
    %2959 = vmatprep.subr.mxu0 0.0
    %2960 = vmatpush2.xpose.msra.mxu0 0.0
    %2961 = vmatprep.subr.mxu0 0.0
    %2962 = vmatpush2.xpose.msra.mxu0 0.0
    %2963 = vmatprep.subr.mxu0 0.0
    %2964 = vmatpush2.xpose.msra.mxu0 0.0
    %2965 = vmatprep.subr.mxu0 0.0
    %2966 = vmatpush2.xpose.msra.mxu0 0.0
    %2967 = vmatprep.subr.mxu0 0.0
    %2968 = vmatpush2.xpose.msra.mxu0 0.0
    %2969 = vmatprep.subr.mxu0 0.0
    %2970 = vmatpush2.xpose.msra.mxu0 0.0
    %2971 = vmatprep.subr.mxu0 0.0
    %2972 = vmatpush2.xpose.msra.mxu0 0.0
    %2973 = vmatprep.subr.mxu0 0.0
    %2974 = vmatpush2.xpose.msra.mxu0 0.0
    %2975 = vmatprep.subr.mxu0 0.0
    %2976 = vmatpush2.xpose.msra.mxu0 0.0
    %2977 = vmatprep.subr.mxu0 0.0
    %2978 = vmatpush2.xpose.msra.mxu0 0.0
    %2979 = vmatprep.subr.mxu0 0.0
    %2980 = vmatpush2.xpose.msra.mxu0 0.0
    %2981 = vmatprep.subr.mxu0 0.0
    %2982 = vmatpush2.xpose.msra.mxu0 0.0
    %2983 = vmatprep.mubr.f32.mxu0 %v462
    %2984 = vmatmul.mubr.f32.gmra.mxu0 %v454
    %v2985 = vpop.f32.mrf.mxu0
    %v2986 = vadd.f32 %v2916, %v2985
    %v2987 = vpop.f32.mrf.mxu0
    %2988 = vdwg.mxu0
    %2989 = vmatprep.subr.mxu0 0.0
    %2990 = vmatpush1.xpose.msra.mxu0 0.0
    %2991 = vmatprep.subr.mxu0 0.0
    %2992 = vmatpush1.xpose.msra.mxu0 0.0
    %2993 = vmatprep.subr.mxu0 0.0
    %2994 = vmatpush1.xpose.msra.mxu0 0.0
    %2995 = vmatprep.subr.mxu0 0.0
    %2996 = vmatpush1.xpose.msra.mxu0 0.0
    %2997 = vmatprep.subr.mxu0 0.0
    %2998 = vmatpush1.xpose.msra.mxu0 0.0
    %2999 = vmatprep.subr.mxu0 0.0
    %3000 = vmatpush1.xpose.msra.mxu0 0.0
    %3001 = vmatprep.subr.mxu0 0.0
    %3002 = vmatpush1.xpose.msra.mxu0 0.0
    %3003 = vmatprep.subr.mxu0 0.0
    %3004 = vmatpush1.xpose.msra.mxu0 0.0
    %3005 = vmatprep.subr.mxu0 0.0
    %3006 = vmatpush1.xpose.msra.mxu0 0.0
    %3007 = vmatprep.subr.mxu0 0.0
    %3008 = vmatpush1.xpose.msra.mxu0 0.0
    %3009 = vmatprep.subr.mxu0 0.0
    %3010 = vmatpush1.xpose.msra.mxu0 0.0
    %3011 = vmatprep.subr.mxu0 0.0
    %3012 = vmatpush1.xpose.msra.mxu0 0.0
    %3013 = vmatprep.subr.mxu0 0.0
    %3014 = vmatpush1.xpose.msra.mxu0 0.0
    %3015 = vmatprep.subr.mxu0 0.0
    %3016 = vmatpush1.xpose.msra.mxu0 0.0
    %3017 = vmatprep.subr.mxu0 0.0
    %3018 = vmatpush1.xpose.msra.mxu0 0.0
    %3019 = vmatprep.subr.mxu0 %v121
    %3020 = vmatpush1.xpose.msra.mxu0 %v120
    %3021 = vmatprep.subr.mxu0 0.0
    %3022 = vmatpush2.xpose.msra.mxu0 0.0
    %3023 = vmatprep.subr.mxu0 0.0
    %3024 = vmatpush2.xpose.msra.mxu0 0.0
    %3025 = vmatprep.subr.mxu0 0.0
    %3026 = vmatpush2.xpose.msra.mxu0 0.0
    %3027 = vmatprep.subr.mxu0 0.0
    %3028 = vmatpush2.xpose.msra.mxu0 0.0
    %3029 = vmatprep.subr.mxu0 0.0
    %3030 = vmatpush2.xpose.msra.mxu0 0.0
    %3031 = vmatprep.subr.mxu0 0.0
    %3032 = vmatpush2.xpose.msra.mxu0 0.0
    %3033 = vmatprep.subr.mxu0 0.0
    %3034 = vmatpush2.xpose.msra.mxu0 0.0
    %3035 = vmatprep.subr.mxu0 0.0
    %3036 = vmatpush2.xpose.msra.mxu0 0.0
    %3037 = vmatprep.subr.mxu0 0.0
    %3038 = vmatpush2.xpose.msra.mxu0 0.0
    %3039 = vmatprep.subr.mxu0 0.0
    %3040 = vmatpush2.xpose.msra.mxu0 0.0
    %3041 = vmatprep.subr.mxu0 0.0
    %3042 = vmatpush2.xpose.msra.mxu0 0.0
    %3043 = vmatprep.subr.mxu0 0.0
    %3044 = vmatpush2.xpose.msra.mxu0 0.0
    %3045 = vmatprep.subr.mxu0 0.0
    %3046 = vmatpush2.xpose.msra.mxu0 0.0
    %3047 = vmatprep.subr.mxu0 0.0
    %3048 = vmatpush2.xpose.msra.mxu0 0.0
    %3049 = vmatprep.subr.mxu0 0.0
    %3050 = vmatpush2.xpose.msra.mxu0 0.0
    %3051 = vmatprep.subr.mxu0 0.0
    %3052 = vmatpush2.xpose.msra.mxu0 0.0
    %3053 = vmatprep.mubr.f32.mxu0 %v463
    %3054 = vmatmul.mubr.f32.gmra.mxu0 %v461
    %v3055 = vpop.f32.mrf.mxu0
    %v3056 = vadd.f32 %v2986, %v3055
    %v3057 = vpop.f32.mrf.mxu0
    %3058 = vdwg.mxu0
    %3059 = vmatprep.subr.mxu0 0.0
    %3060 = vmatpush1.xpose.msra.mxu0 0.0
    %3061 = vmatprep.subr.mxu0 0.0
    %3062 = vmatpush1.xpose.msra.mxu0 0.0
    %3063 = vmatprep.subr.mxu0 0.0
    %3064 = vmatpush1.xpose.msra.mxu0 0.0
    %3065 = vmatprep.subr.mxu0 0.0
    %3066 = vmatpush1.xpose.msra.mxu0 0.0
    %3067 = vmatprep.subr.mxu0 0.0
    %3068 = vmatpush1.xpose.msra.mxu0 0.0
    %3069 = vmatprep.subr.mxu0 0.0
    %3070 = vmatpush1.xpose.msra.mxu0 0.0
    %3071 = vmatprep.subr.mxu0 0.0
    %3072 = vmatpush1.xpose.msra.mxu0 0.0
    %3073 = vmatprep.subr.mxu0 0.0
    %3074 = vmatpush1.xpose.msra.mxu0 0.0
    %3075 = vmatprep.subr.mxu0 0.0
    %3076 = vmatpush1.xpose.msra.mxu0 0.0
    %3077 = vmatprep.subr.mxu0 0.0
    %3078 = vmatpush1.xpose.msra.mxu0 0.0
    %3079 = vmatprep.subr.mxu0 0.0
    %3080 = vmatpush1.xpose.msra.mxu0 0.0
    %3081 = vmatprep.subr.mxu0 0.0
    %3082 = vmatpush1.xpose.msra.mxu0 0.0
    %3083 = vmatprep.subr.mxu0 0.0
    %3084 = vmatpush1.xpose.msra.mxu0 0.0
    %3085 = vmatprep.subr.mxu0 0.0
    %3086 = vmatpush1.xpose.msra.mxu0 0.0
    %3087 = vmatprep.subr.mxu0 0.0
    %3088 = vmatpush1.xpose.msra.mxu0 0.0
    %3089 = vmatprep.subr.mxu0 %v123
    %3090 = vmatpush1.xpose.msra.mxu0 %v122
    %3091 = vmatprep.subr.mxu0 0.0
    %3092 = vmatpush2.xpose.msra.mxu0 0.0
    %3093 = vmatprep.subr.mxu0 0.0
    %3094 = vmatpush2.xpose.msra.mxu0 0.0
    %3095 = vmatprep.subr.mxu0 0.0
    %3096 = vmatpush2.xpose.msra.mxu0 0.0
    %3097 = vmatprep.subr.mxu0 0.0
    %3098 = vmatpush2.xpose.msra.mxu0 0.0
    %3099 = vmatprep.subr.mxu0 0.0
    %3100 = vmatpush2.xpose.msra.mxu0 0.0
    %3101 = vmatprep.subr.mxu0 0.0
    %3102 = vmatpush2.xpose.msra.mxu0 0.0
    %3103 = vmatprep.subr.mxu0 0.0
    %3104 = vmatpush2.xpose.msra.mxu0 0.0
    %3105 = vmatprep.subr.mxu0 0.0
    %3106 = vmatpush2.xpose.msra.mxu0 0.0
    %3107 = vmatprep.subr.mxu0 0.0
    %3108 = vmatpush2.xpose.msra.mxu0 0.0
    %3109 = vmatprep.subr.mxu0 0.0
    %3110 = vmatpush2.xpose.msra.mxu0 0.0
    %3111 = vmatprep.subr.mxu0 0.0
    %3112 = vmatpush2.xpose.msra.mxu0 0.0
    %3113 = vmatprep.subr.mxu0 0.0
    %3114 = vmatpush2.xpose.msra.mxu0 0.0
    %3115 = vmatprep.subr.mxu0 0.0
    %3116 = vmatpush2.xpose.msra.mxu0 0.0
    %3117 = vmatprep.subr.mxu0 0.0
    %3118 = vmatpush2.xpose.msra.mxu0 0.0
    %3119 = vmatprep.subr.mxu0 0.0
    %3120 = vmatpush2.xpose.msra.mxu0 0.0
    %3121 = vmatprep.subr.mxu0 0.0
    %3122 = vmatpush2.xpose.msra.mxu0 0.0
    %3123 = vmatprep.mubr.f32.mxu0 %v479
    %3124 = vmatmul.mubr.f32.gmra.mxu0 %v471
    %v3125 = vpop.f32.mrf.mxu0
    %v3126 = vadd.f32 %v3056, %v3125
    %v3127 = vpop.f32.mrf.mxu0
    %3128 = vdwg.mxu0
    %3129 = vmatprep.subr.mxu0 0.0
    %3130 = vmatpush1.xpose.msra.mxu0 0.0
    %3131 = vmatprep.subr.mxu0 0.0
    %3132 = vmatpush1.xpose.msra.mxu0 0.0
    %3133 = vmatprep.subr.mxu0 0.0
    %3134 = vmatpush1.xpose.msra.mxu0 0.0
    %3135 = vmatprep.subr.mxu0 0.0
    %3136 = vmatpush1.xpose.msra.mxu0 0.0
    %3137 = vmatprep.subr.mxu0 0.0
    %3138 = vmatpush1.xpose.msra.mxu0 0.0
    %3139 = vmatprep.subr.mxu0 0.0
    %3140 = vmatpush1.xpose.msra.mxu0 0.0
    %3141 = vmatprep.subr.mxu0 0.0
    %3142 = vmatpush1.xpose.msra.mxu0 0.0
    %3143 = vmatprep.subr.mxu0 0.0
    %3144 = vmatpush1.xpose.msra.mxu0 0.0
    %3145 = vmatprep.subr.mxu0 0.0
    %3146 = vmatpush1.xpose.msra.mxu0 0.0
    %3147 = vmatprep.subr.mxu0 0.0
    %3148 = vmatpush1.xpose.msra.mxu0 0.0
    %3149 = vmatprep.subr.mxu0 0.0
    %3150 = vmatpush1.xpose.msra.mxu0 0.0
    %3151 = vmatprep.subr.mxu0 0.0
    %3152 = vmatpush1.xpose.msra.mxu0 0.0
    %3153 = vmatprep.subr.mxu0 0.0
    %3154 = vmatpush1.xpose.msra.mxu0 0.0
    %3155 = vmatprep.subr.mxu0 0.0
    %3156 = vmatpush1.xpose.msra.mxu0 0.0
    %3157 = vmatprep.subr.mxu0 0.0
    %3158 = vmatpush1.xpose.msra.mxu0 0.0
    %3159 = vmatprep.subr.mxu0 %v125
    %3160 = vmatpush1.xpose.msra.mxu0 %v124
    %3161 = vmatprep.subr.mxu0 0.0
    %3162 = vmatpush2.xpose.msra.mxu0 0.0
    %3163 = vmatprep.subr.mxu0 0.0
    %3164 = vmatpush2.xpose.msra.mxu0 0.0
    %3165 = vmatprep.subr.mxu0 0.0
    %3166 = vmatpush2.xpose.msra.mxu0 0.0
    %3167 = vmatprep.subr.mxu0 0.0
    %3168 = vmatpush2.xpose.msra.mxu0 0.0
    %3169 = vmatprep.subr.mxu0 0.0
    %3170 = vmatpush2.xpose.msra.mxu0 0.0
    %3171 = vmatprep.subr.mxu0 0.0
    %3172 = vmatpush2.xpose.msra.mxu0 0.0
    %3173 = vmatprep.subr.mxu0 0.0
    %3174 = vmatpush2.xpose.msra.mxu0 0.0
    %3175 = vmatprep.subr.mxu0 0.0
    %3176 = vmatpush2.xpose.msra.mxu0 0.0
    %3177 = vmatprep.subr.mxu0 0.0
    %3178 = vmatpush2.xpose.msra.mxu0 0.0
    %3179 = vmatprep.subr.mxu0 0.0
    %3180 = vmatpush2.xpose.msra.mxu0 0.0
    %3181 = vmatprep.subr.mxu0 0.0
    %3182 = vmatpush2.xpose.msra.mxu0 0.0
    %3183 = vmatprep.subr.mxu0 0.0
    %3184 = vmatpush2.xpose.msra.mxu0 0.0
    %3185 = vmatprep.subr.mxu0 0.0
    %3186 = vmatpush2.xpose.msra.mxu0 0.0
    %3187 = vmatprep.subr.mxu0 0.0
    %3188 = vmatpush2.xpose.msra.mxu0 0.0
    %3189 = vmatprep.subr.mxu0 0.0
    %3190 = vmatpush2.xpose.msra.mxu0 0.0
    %3191 = vmatprep.subr.mxu0 0.0
    %3192 = vmatpush2.xpose.msra.mxu0 0.0
    %3193 = vmatprep.mubr.f32.mxu0 %v480
    %3194 = vmatmul.mubr.f32.gmra.mxu0 %v478
    %v3195 = vpop.f32.mrf.mxu0
    %v3196 = vadd.f32 %v3126, %v3195
    %v3197 = vpop.f32.mrf.mxu0
    %3198 = vdwg.mxu0
    %3199 = vmatprep.subr.mxu0 0.0
    %3200 = vmatpush1.xpose.msra.mxu0 0.0
    %3201 = vmatprep.subr.mxu0 0.0
    %3202 = vmatpush1.xpose.msra.mxu0 0.0
    %3203 = vmatprep.subr.mxu0 0.0
    %3204 = vmatpush1.xpose.msra.mxu0 0.0
    %3205 = vmatprep.subr.mxu0 0.0
    %3206 = vmatpush1.xpose.msra.mxu0 0.0
    %3207 = vmatprep.subr.mxu0 0.0
    %3208 = vmatpush1.xpose.msra.mxu0 0.0
    %3209 = vmatprep.subr.mxu0 0.0
    %3210 = vmatpush1.xpose.msra.mxu0 0.0
    %3211 = vmatprep.subr.mxu0 0.0
    %3212 = vmatpush1.xpose.msra.mxu0 0.0
    %3213 = vmatprep.subr.mxu0 0.0
    %3214 = vmatpush1.xpose.msra.mxu0 0.0
    %3215 = vmatprep.subr.mxu0 0.0
    %3216 = vmatpush1.xpose.msra.mxu0 0.0
    %3217 = vmatprep.subr.mxu0 0.0
    %3218 = vmatpush1.xpose.msra.mxu0 0.0
    %3219 = vmatprep.subr.mxu0 0.0
    %3220 = vmatpush1.xpose.msra.mxu0 0.0
    %3221 = vmatprep.subr.mxu0 0.0
    %3222 = vmatpush1.xpose.msra.mxu0 0.0
    %3223 = vmatprep.subr.mxu0 0.0
    %3224 = vmatpush1.xpose.msra.mxu0 0.0
    %3225 = vmatprep.subr.mxu0 0.0
    %3226 = vmatpush1.xpose.msra.mxu0 0.0
    %3227 = vmatprep.subr.mxu0 0.0
    %3228 = vmatpush1.xpose.msra.mxu0 0.0
    %3229 = vmatprep.subr.mxu0 %v127
    %3230 = vmatpush1.xpose.msra.mxu0 %v126
    %3231 = vmatprep.subr.mxu0 0.0
    %3232 = vmatpush2.xpose.msra.mxu0 0.0
    %3233 = vmatprep.subr.mxu0 0.0
    %3234 = vmatpush2.xpose.msra.mxu0 0.0
    %3235 = vmatprep.subr.mxu0 0.0
    %3236 = vmatpush2.xpose.msra.mxu0 0.0
    %3237 = vmatprep.subr.mxu0 0.0
    %3238 = vmatpush2.xpose.msra.mxu0 0.0
    %3239 = vmatprep.subr.mxu0 0.0
    %3240 = vmatpush2.xpose.msra.mxu0 0.0
    %3241 = vmatprep.subr.mxu0 0.0
    %3242 = vmatpush2.xpose.msra.mxu0 0.0
    %3243 = vmatprep.subr.mxu0 0.0
    %3244 = vmatpush2.xpose.msra.mxu0 0.0
    %3245 = vmatprep.subr.mxu0 0.0
    %3246 = vmatpush2.xpose.msra.mxu0 0.0
    %3247 = vmatprep.subr.mxu0 0.0
    %3248 = vmatpush2.xpose.msra.mxu0 0.0
    %3249 = vmatprep.subr.mxu0 0.0
    %3250 = vmatpush2.xpose.msra.mxu0 0.0
    %3251 = vmatprep.subr.mxu0 0.0
    %3252 = vmatpush2.xpose.msra.mxu0 0.0
    %3253 = vmatprep.subr.mxu0 0.0
    %3254 = vmatpush2.xpose.msra.mxu0 0.0
    %3255 = vmatprep.subr.mxu0 0.0
    %3256 = vmatpush2.xpose.msra.mxu0 0.0
    %3257 = vmatprep.subr.mxu0 0.0
    %3258 = vmatpush2.xpose.msra.mxu0 0.0
    %3259 = vmatprep.subr.mxu0 0.0
    %3260 = vmatpush2.xpose.msra.mxu0 0.0
    %3261 = vmatprep.subr.mxu0 0.0
    %3262 = vmatpush2.xpose.msra.mxu0 0.0
    %3263 = vmatprep.mubr.f32.mxu0 %v496
    %3264 = vmatmul.mubr.f32.gmra.mxu0 %v488
    %v3265 = vpop.f32.mrf.mxu0
    %v3266 = vadd.f32 %v3196, %v3265
    %v3267 = vpop.f32.mrf.mxu0
    %3268 = vdwg.mxu0
    %3269 = vmatprep.subr.mxu0 0.0
    %3270 = vmatpush1.xpose.msra.mxu0 0.0
    %3271 = vmatprep.subr.mxu0 0.0
    %3272 = vmatpush1.xpose.msra.mxu0 0.0
    %3273 = vmatprep.subr.mxu0 0.0
    %3274 = vmatpush1.xpose.msra.mxu0 0.0
    %3275 = vmatprep.subr.mxu0 0.0
    %3276 = vmatpush1.xpose.msra.mxu0 0.0
    %3277 = vmatprep.subr.mxu0 0.0
    %3278 = vmatpush1.xpose.msra.mxu0 0.0
    %3279 = vmatprep.subr.mxu0 0.0
    %3280 = vmatpush1.xpose.msra.mxu0 0.0
    %3281 = vmatprep.subr.mxu0 0.0
    %3282 = vmatpush1.xpose.msra.mxu0 0.0
    %3283 = vmatprep.subr.mxu0 0.0
    %3284 = vmatpush1.xpose.msra.mxu0 0.0
    %3285 = vmatprep.subr.mxu0 0.0
    %3286 = vmatpush1.xpose.msra.mxu0 0.0
    %3287 = vmatprep.subr.mxu0 0.0
    %3288 = vmatpush1.xpose.msra.mxu0 0.0
    %3289 = vmatprep.subr.mxu0 0.0
    %3290 = vmatpush1.xpose.msra.mxu0 0.0
    %3291 = vmatprep.subr.mxu0 0.0
    %3292 = vmatpush1.xpose.msra.mxu0 0.0
    %3293 = vmatprep.subr.mxu0 0.0
    %3294 = vmatpush1.xpose.msra.mxu0 0.0
    %3295 = vmatprep.subr.mxu0 0.0
    %3296 = vmatpush1.xpose.msra.mxu0 0.0
    %3297 = vmatprep.subr.mxu0 0.0
    %3298 = vmatpush1.xpose.msra.mxu0 0.0
    %3299 = vmatprep.subr.mxu0 %v129
    %3300 = vmatpush1.xpose.msra.mxu0 %v128
    %3301 = vmatprep.subr.mxu0 0.0
    %3302 = vmatpush2.xpose.msra.mxu0 0.0
    %3303 = vmatprep.subr.mxu0 0.0
    %3304 = vmatpush2.xpose.msra.mxu0 0.0
    %3305 = vmatprep.subr.mxu0 0.0
    %3306 = vmatpush2.xpose.msra.mxu0 0.0
    %3307 = vmatprep.subr.mxu0 0.0
    %3308 = vmatpush2.xpose.msra.mxu0 0.0
    %3309 = vmatprep.subr.mxu0 0.0
    %3310 = vmatpush2.xpose.msra.mxu0 0.0
    %3311 = vmatprep.subr.mxu0 0.0
    %3312 = vmatpush2.xpose.msra.mxu0 0.0
    %3313 = vmatprep.subr.mxu0 0.0
    %3314 = vmatpush2.xpose.msra.mxu0 0.0
    %3315 = vmatprep.subr.mxu0 0.0
    %3316 = vmatpush2.xpose.msra.mxu0 0.0
    %3317 = vmatprep.subr.mxu0 0.0
    %3318 = vmatpush2.xpose.msra.mxu0 0.0
    %3319 = vmatprep.subr.mxu0 0.0
    %3320 = vmatpush2.xpose.msra.mxu0 0.0
    %3321 = vmatprep.subr.mxu0 0.0
    %3322 = vmatpush2.xpose.msra.mxu0 0.0
    %3323 = vmatprep.subr.mxu0 0.0
    %3324 = vmatpush2.xpose.msra.mxu0 0.0
    %3325 = vmatprep.subr.mxu0 0.0
    %3326 = vmatpush2.xpose.msra.mxu0 0.0
    %3327 = vmatprep.subr.mxu0 0.0
    %3328 = vmatpush2.xpose.msra.mxu0 0.0
    %3329 = vmatprep.subr.mxu0 0.0
    %3330 = vmatpush2.xpose.msra.mxu0 0.0
    %3331 = vmatprep.subr.mxu0 0.0
    %3332 = vmatpush2.xpose.msra.mxu0 0.0
    %3333 = vmatprep.mubr.f32.mxu0 %v497
    %3334 = vmatmul.mubr.f32.gmra.mxu0 %v495
    %v3335 = vpop.f32.mrf.mxu0
    %v3336 = vadd.f32 %v3266, %v3335
    %v3337 = vpop.f32.mrf.mxu0
    %3338 = vdwg.mxu0
    %3339 = vmatprep.subr.mxu0 0.0
    %3340 = vmatpush1.xpose.msra.mxu0 0.0
    %3341 = vmatprep.subr.mxu0 0.0
    %3342 = vmatpush1.xpose.msra.mxu0 0.0
    %3343 = vmatprep.subr.mxu0 0.0
    %3344 = vmatpush1.xpose.msra.mxu0 0.0
    %3345 = vmatprep.subr.mxu0 0.0
    %3346 = vmatpush1.xpose.msra.mxu0 0.0
    %3347 = vmatprep.subr.mxu0 0.0
    %3348 = vmatpush1.xpose.msra.mxu0 0.0
    %3349 = vmatprep.subr.mxu0 0.0
    %3350 = vmatpush1.xpose.msra.mxu0 0.0
    %3351 = vmatprep.subr.mxu0 0.0
    %3352 = vmatpush1.xpose.msra.mxu0 0.0
    %3353 = vmatprep.subr.mxu0 0.0
    %3354 = vmatpush1.xpose.msra.mxu0 0.0
    %3355 = vmatprep.subr.mxu0 0.0
    %3356 = vmatpush1.xpose.msra.mxu0 0.0
    %3357 = vmatprep.subr.mxu0 0.0
    %3358 = vmatpush1.xpose.msra.mxu0 0.0
    %3359 = vmatprep.subr.mxu0 0.0
    %3360 = vmatpush1.xpose.msra.mxu0 0.0
    %3361 = vmatprep.subr.mxu0 0.0
    %3362 = vmatpush1.xpose.msra.mxu0 0.0
    %3363 = vmatprep.subr.mxu0 0.0
    %3364 = vmatpush1.xpose.msra.mxu0 0.0
    %3365 = vmatprep.subr.mxu0 0.0
    %3366 = vmatpush1.xpose.msra.mxu0 0.0
    %3367 = vmatprep.subr.mxu0 0.0
    %3368 = vmatpush1.xpose.msra.mxu0 0.0
    %3369 = vmatprep.subr.mxu0 %v131
    %3370 = vmatpush1.xpose.msra.mxu0 %v130
    %3371 = vmatprep.subr.mxu0 0.0
    %3372 = vmatpush2.xpose.msra.mxu0 0.0
    %3373 = vmatprep.subr.mxu0 0.0
    %3374 = vmatpush2.xpose.msra.mxu0 0.0
    %3375 = vmatprep.subr.mxu0 0.0
    %3376 = vmatpush2.xpose.msra.mxu0 0.0
    %3377 = vmatprep.subr.mxu0 0.0
    %3378 = vmatpush2.xpose.msra.mxu0 0.0
    %3379 = vmatprep.subr.mxu0 0.0
    %3380 = vmatpush2.xpose.msra.mxu0 0.0
    %3381 = vmatprep.subr.mxu0 0.0
    %3382 = vmatpush2.xpose.msra.mxu0 0.0
    %3383 = vmatprep.subr.mxu0 0.0
    %3384 = vmatpush2.xpose.msra.mxu0 0.0
    %3385 = vmatprep.subr.mxu0 0.0
    %3386 = vmatpush2.xpose.msra.mxu0 0.0
    %3387 = vmatprep.subr.mxu0 0.0
    %3388 = vmatpush2.xpose.msra.mxu0 0.0
    %3389 = vmatprep.subr.mxu0 0.0
    %3390 = vmatpush2.xpose.msra.mxu0 0.0
    %3391 = vmatprep.subr.mxu0 0.0
    %3392 = vmatpush2.xpose.msra.mxu0 0.0
    %3393 = vmatprep.subr.mxu0 0.0
    %3394 = vmatpush2.xpose.msra.mxu0 0.0
    %3395 = vmatprep.subr.mxu0 0.0
    %3396 = vmatpush2.xpose.msra.mxu0 0.0
    %3397 = vmatprep.subr.mxu0 0.0
    %3398 = vmatpush2.xpose.msra.mxu0 0.0
    %3399 = vmatprep.subr.mxu0 0.0
    %3400 = vmatpush2.xpose.msra.mxu0 0.0
    %3401 = vmatprep.subr.mxu0 0.0
    %3402 = vmatpush2.xpose.msra.mxu0 0.0
    %3403 = vmatprep.mubr.f32.mxu0 %v513
    %3404 = vmatmul.mubr.f32.gmra.mxu0 %v505
    %v3405 = vpop.f32.mrf.mxu0
    %v3406 = vadd.f32 %v3336, %v3405
    %v3407 = vpop.f32.mrf.mxu0
    %3408 = vdwg.mxu0
    %3409 = vmatprep.subr.mxu0 0.0
    %3410 = vmatpush1.xpose.msra.mxu0 0.0
    %3411 = vmatprep.subr.mxu0 0.0
    %3412 = vmatpush1.xpose.msra.mxu0 0.0
    %3413 = vmatprep.subr.mxu0 0.0
    %3414 = vmatpush1.xpose.msra.mxu0 0.0
    %3415 = vmatprep.subr.mxu0 0.0
    %3416 = vmatpush1.xpose.msra.mxu0 0.0
    %3417 = vmatprep.subr.mxu0 0.0
    %3418 = vmatpush1.xpose.msra.mxu0 0.0
    %3419 = vmatprep.subr.mxu0 0.0
    %3420 = vmatpush1.xpose.msra.mxu0 0.0
    %3421 = vmatprep.subr.mxu0 0.0
    %3422 = vmatpush1.xpose.msra.mxu0 0.0
    %3423 = vmatprep.subr.mxu0 0.0
    %3424 = vmatpush1.xpose.msra.mxu0 0.0
    %3425 = vmatprep.subr.mxu0 0.0
    %3426 = vmatpush1.xpose.msra.mxu0 0.0
    %3427 = vmatprep.subr.mxu0 0.0
    %3428 = vmatpush1.xpose.msra.mxu0 0.0
    %3429 = vmatprep.subr.mxu0 0.0
    %3430 = vmatpush1.xpose.msra.mxu0 0.0
    %3431 = vmatprep.subr.mxu0 0.0
    %3432 = vmatpush1.xpose.msra.mxu0 0.0
    %3433 = vmatprep.subr.mxu0 0.0
    %3434 = vmatpush1.xpose.msra.mxu0 0.0
    %3435 = vmatprep.subr.mxu0 0.0
    %3436 = vmatpush1.xpose.msra.mxu0 0.0
    %3437 = vmatprep.subr.mxu0 0.0
    %3438 = vmatpush1.xpose.msra.mxu0 0.0
    %3439 = vmatprep.subr.mxu0 %v133
    %3440 = vmatpush1.xpose.msra.mxu0 %v132
    %3441 = vmatprep.subr.mxu0 0.0
    %3442 = vmatpush2.xpose.msra.mxu0 0.0
    %3443 = vmatprep.subr.mxu0 0.0
    %3444 = vmatpush2.xpose.msra.mxu0 0.0
    %3445 = vmatprep.subr.mxu0 0.0
    %3446 = vmatpush2.xpose.msra.mxu0 0.0
    %3447 = vmatprep.subr.mxu0 0.0
    %3448 = vmatpush2.xpose.msra.mxu0 0.0
    %3449 = vmatprep.subr.mxu0 0.0
    %3450 = vmatpush2.xpose.msra.mxu0 0.0
    %3451 = vmatprep.subr.mxu0 0.0
    %3452 = vmatpush2.xpose.msra.mxu0 0.0
    %3453 = vmatprep.subr.mxu0 0.0
    %3454 = vmatpush2.xpose.msra.mxu0 0.0
    %3455 = vmatprep.subr.mxu0 0.0
    %3456 = vmatpush2.xpose.msra.mxu0 0.0
    %3457 = vmatprep.subr.mxu0 0.0
    %3458 = vmatpush2.xpose.msra.mxu0 0.0
    %3459 = vmatprep.subr.mxu0 0.0
    %3460 = vmatpush2.xpose.msra.mxu0 0.0
    %3461 = vmatprep.subr.mxu0 0.0
    %3462 = vmatpush2.xpose.msra.mxu0 0.0
    %3463 = vmatprep.subr.mxu0 0.0
    %3464 = vmatpush2.xpose.msra.mxu0 0.0
    %3465 = vmatprep.subr.mxu0 0.0
    %3466 = vmatpush2.xpose.msra.mxu0 0.0
    %3467 = vmatprep.subr.mxu0 0.0
    %3468 = vmatpush2.xpose.msra.mxu0 0.0
    %3469 = vmatprep.subr.mxu0 0.0
    %3470 = vmatpush2.xpose.msra.mxu0 0.0
    %3471 = vmatprep.subr.mxu0 0.0
    %3472 = vmatpush2.xpose.msra.mxu0 0.0
    %3473 = vmatprep.mubr.f32.mxu0 %v514
    %3474 = vmatmul.mubr.f32.gmra.mxu0 %v512
    %v3475 = vpop.f32.mrf.mxu0
    %v3476 = vadd.f32 %v3406, %v3475
    %v3477 = vpop.f32.mrf.mxu0
    %3478 = vdwg.mxu0
    %3479 = vmatprep.subr.mxu0 0.0
    %3480 = vmatpush1.xpose.msra.mxu0 0.0
    %3481 = vmatprep.subr.mxu0 0.0
    %3482 = vmatpush1.xpose.msra.mxu0 0.0
    %3483 = vmatprep.subr.mxu0 0.0
    %3484 = vmatpush1.xpose.msra.mxu0 0.0
    %3485 = vmatprep.subr.mxu0 0.0
    %3486 = vmatpush1.xpose.msra.mxu0 0.0
    %3487 = vmatprep.subr.mxu0 0.0
    %3488 = vmatpush1.xpose.msra.mxu0 0.0
    %3489 = vmatprep.subr.mxu0 0.0
    %3490 = vmatpush1.xpose.msra.mxu0 0.0
    %3491 = vmatprep.subr.mxu0 0.0
    %3492 = vmatpush1.xpose.msra.mxu0 0.0
    %3493 = vmatprep.subr.mxu0 0.0
    %3494 = vmatpush1.xpose.msra.mxu0 0.0
    %3495 = vmatprep.subr.mxu0 0.0
    %3496 = vmatpush1.xpose.msra.mxu0 0.0
    %3497 = vmatprep.subr.mxu0 0.0
    %3498 = vmatpush1.xpose.msra.mxu0 0.0
    %3499 = vmatprep.subr.mxu0 0.0
    %3500 = vmatpush1.xpose.msra.mxu0 0.0
    %3501 = vmatprep.subr.mxu0 0.0
    %3502 = vmatpush1.xpose.msra.mxu0 0.0
    %3503 = vmatprep.subr.mxu0 0.0
    %3504 = vmatpush1.xpose.msra.mxu0 0.0
    %3505 = vmatprep.subr.mxu0 0.0
    %3506 = vmatpush1.xpose.msra.mxu0 0.0
    %3507 = vmatprep.subr.mxu0 0.0
    %3508 = vmatpush1.xpose.msra.mxu0 0.0
    %3509 = vmatprep.subr.mxu0 %v135
    %3510 = vmatpush1.xpose.msra.mxu0 %v134
    %3511 = vmatprep.subr.mxu0 0.0
    %3512 = vmatpush2.xpose.msra.mxu0 0.0
    %3513 = vmatprep.subr.mxu0 0.0
    %3514 = vmatpush2.xpose.msra.mxu0 0.0
    %3515 = vmatprep.subr.mxu0 0.0
    %3516 = vmatpush2.xpose.msra.mxu0 0.0
    %3517 = vmatprep.subr.mxu0 0.0
    %3518 = vmatpush2.xpose.msra.mxu0 0.0
    %3519 = vmatprep.subr.mxu0 0.0
    %3520 = vmatpush2.xpose.msra.mxu0 0.0
    %3521 = vmatprep.subr.mxu0 0.0
    %3522 = vmatpush2.xpose.msra.mxu0 0.0
    %3523 = vmatprep.subr.mxu0 0.0
    %3524 = vmatpush2.xpose.msra.mxu0 0.0
    %3525 = vmatprep.subr.mxu0 0.0
    %3526 = vmatpush2.xpose.msra.mxu0 0.0
    %3527 = vmatprep.subr.mxu0 0.0
    %3528 = vmatpush2.xpose.msra.mxu0 0.0
    %3529 = vmatprep.subr.mxu0 0.0
    %3530 = vmatpush2.xpose.msra.mxu0 0.0
    %3531 = vmatprep.subr.mxu0 0.0
    %3532 = vmatpush2.xpose.msra.mxu0 0.0
    %3533 = vmatprep.subr.mxu0 0.0
    %3534 = vmatpush2.xpose.msra.mxu0 0.0
    %3535 = vmatprep.subr.mxu0 0.0
    %3536 = vmatpush2.xpose.msra.mxu0 0.0
    %3537 = vmatprep.subr.mxu0 0.0
    %3538 = vmatpush2.xpose.msra.mxu0 0.0
    %3539 = vmatprep.subr.mxu0 0.0
    %3540 = vmatpush2.xpose.msra.mxu0 0.0
    %3541 = vmatprep.subr.mxu0 0.0
    %3542 = vmatpush2.xpose.msra.mxu0 0.0
    %3543 = vmatprep.mubr.f32.mxu0 %v530
    %3544 = vmatmul.mubr.f32.gmra.mxu0 %v522
    %v3545 = vpop.f32.mrf.mxu0
    %v3546 = vadd.f32 %v3476, %v3545
    %v3547 = vpop.f32.mrf.mxu0
    %3548 = vdwg.mxu0
    %3549 = vmatprep.subr.mxu0 0.0
    %3550 = vmatpush1.xpose.msra.mxu0 0.0
    %3551 = vmatprep.subr.mxu0 0.0
    %3552 = vmatpush1.xpose.msra.mxu0 0.0
    %3553 = vmatprep.subr.mxu0 0.0
    %3554 = vmatpush1.xpose.msra.mxu0 0.0
    %3555 = vmatprep.subr.mxu0 0.0
    %3556 = vmatpush1.xpose.msra.mxu0 0.0
    %3557 = vmatprep.subr.mxu0 0.0
    %3558 = vmatpush1.xpose.msra.mxu0 0.0
    %3559 = vmatprep.subr.mxu0 0.0
    %3560 = vmatpush1.xpose.msra.mxu0 0.0
    %3561 = vmatprep.subr.mxu0 0.0
    %3562 = vmatpush1.xpose.msra.mxu0 0.0
    %3563 = vmatprep.subr.mxu0 0.0
    %3564 = vmatpush1.xpose.msra.mxu0 0.0
    %3565 = vmatprep.subr.mxu0 0.0
    %3566 = vmatpush1.xpose.msra.mxu0 0.0
    %3567 = vmatprep.subr.mxu0 0.0
    %3568 = vmatpush1.xpose.msra.mxu0 0.0
    %3569 = vmatprep.subr.mxu0 0.0
    %3570 = vmatpush1.xpose.msra.mxu0 0.0
    %3571 = vmatprep.subr.mxu0 0.0
    %3572 = vmatpush1.xpose.msra.mxu0 0.0
    %3573 = vmatprep.subr.mxu0 0.0
    %3574 = vmatpush1.xpose.msra.mxu0 0.0
    %3575 = vmatprep.subr.mxu0 0.0
    %3576 = vmatpush1.xpose.msra.mxu0 0.0
    %3577 = vmatprep.subr.mxu0 0.0
    %3578 = vmatpush1.xpose.msra.mxu0 0.0
    %3579 = vmatprep.subr.mxu0 %v137
    %3580 = vmatpush1.xpose.msra.mxu0 %v136
    %3581 = vmatprep.subr.mxu0 0.0
    %3582 = vmatpush2.xpose.msra.mxu0 0.0
    %3583 = vmatprep.subr.mxu0 0.0
    %3584 = vmatpush2.xpose.msra.mxu0 0.0
    %3585 = vmatprep.subr.mxu0 0.0
    %3586 = vmatpush2.xpose.msra.mxu0 0.0
    %3587 = vmatprep.subr.mxu0 0.0
    %3588 = vmatpush2.xpose.msra.mxu0 0.0
    %3589 = vmatprep.subr.mxu0 0.0
    %3590 = vmatpush2.xpose.msra.mxu0 0.0
    %3591 = vmatprep.subr.mxu0 0.0
    %3592 = vmatpush2.xpose.msra.mxu0 0.0
    %3593 = vmatprep.subr.mxu0 0.0
    %3594 = vmatpush2.xpose.msra.mxu0 0.0
    %3595 = vmatprep.subr.mxu0 0.0
    %3596 = vmatpush2.xpose.msra.mxu0 0.0
    %3597 = vmatprep.subr.mxu0 0.0
    %3598 = vmatpush2.xpose.msra.mxu0 0.0
    %3599 = vmatprep.subr.mxu0 0.0
    %3600 = vmatpush2.xpose.msra.mxu0 0.0
    %3601 = vmatprep.subr.mxu0 0.0
    %3602 = vmatpush2.xpose.msra.mxu0 0.0
    %3603 = vmatprep.subr.mxu0 0.0
    %3604 = vmatpush2.xpose.msra.mxu0 0.0
    %3605 = vmatprep.subr.mxu0 0.0
    %3606 = vmatpush2.xpose.msra.mxu0 0.0
    %3607 = vmatprep.subr.mxu0 0.0
    %3608 = vmatpush2.xpose.msra.mxu0 0.0
    %3609 = vmatprep.subr.mxu0 0.0
    %3610 = vmatpush2.xpose.msra.mxu0 0.0
    %3611 = vmatprep.subr.mxu0 0.0
    %3612 = vmatpush2.xpose.msra.mxu0 0.0
    %3613 = vmatprep.mubr.f32.mxu0 %v531
    %3614 = vmatmul.mubr.f32.gmra.mxu0 %v529
    %v3615 = vpop.f32.mrf.mxu0
    %v3616 = vadd.f32 %v3546, %v3615
    %v3617 = vpop.f32.mrf.mxu0
    %3618 = vdwg.mxu0
    %3619 = vmatprep.subr.mxu0 0.0
    %3620 = vmatpush1.xpose.msra.mxu0 0.0
    %3621 = vmatprep.subr.mxu0 0.0
    %3622 = vmatpush1.xpose.msra.mxu0 0.0
    %3623 = vmatprep.subr.mxu0 0.0
    %3624 = vmatpush1.xpose.msra.mxu0 0.0
    %3625 = vmatprep.subr.mxu0 0.0
    %3626 = vmatpush1.xpose.msra.mxu0 0.0
    %3627 = vmatprep.subr.mxu0 0.0
    %3628 = vmatpush1.xpose.msra.mxu0 0.0
    %3629 = vmatprep.subr.mxu0 0.0
    %3630 = vmatpush1.xpose.msra.mxu0 0.0
    %3631 = vmatprep.subr.mxu0 0.0
    %3632 = vmatpush1.xpose.msra.mxu0 0.0
    %3633 = vmatprep.subr.mxu0 0.0
    %3634 = vmatpush1.xpose.msra.mxu0 0.0
    %3635 = vmatprep.subr.mxu0 0.0
    %3636 = vmatpush1.xpose.msra.mxu0 0.0
    %3637 = vmatprep.subr.mxu0 0.0
    %3638 = vmatpush1.xpose.msra.mxu0 0.0
    %3639 = vmatprep.subr.mxu0 0.0
    %3640 = vmatpush1.xpose.msra.mxu0 0.0
    %3641 = vmatprep.subr.mxu0 0.0
    %3642 = vmatpush1.xpose.msra.mxu0 0.0
    %3643 = vmatprep.subr.mxu0 0.0
    %3644 = vmatpush1.xpose.msra.mxu0 0.0
    %3645 = vmatprep.subr.mxu0 0.0
    %3646 = vmatpush1.xpose.msra.mxu0 0.0
    %3647 = vmatprep.subr.mxu0 0.0
    %3648 = vmatpush1.xpose.msra.mxu0 0.0
    %3649 = vmatprep.subr.mxu0 %v139
    %3650 = vmatpush1.xpose.msra.mxu0 %v138
    %3651 = vmatprep.subr.mxu0 0.0
    %3652 = vmatpush2.xpose.msra.mxu0 0.0
    %3653 = vmatprep.subr.mxu0 0.0
    %3654 = vmatpush2.xpose.msra.mxu0 0.0
    %3655 = vmatprep.subr.mxu0 0.0
    %3656 = vmatpush2.xpose.msra.mxu0 0.0
    %3657 = vmatprep.subr.mxu0 0.0
    %3658 = vmatpush2.xpose.msra.mxu0 0.0
    %3659 = vmatprep.subr.mxu0 0.0
    %3660 = vmatpush2.xpose.msra.mxu0 0.0
    %3661 = vmatprep.subr.mxu0 0.0
    %3662 = vmatpush2.xpose.msra.mxu0 0.0
    %3663 = vmatprep.subr.mxu0 0.0
    %3664 = vmatpush2.xpose.msra.mxu0 0.0
    %3665 = vmatprep.subr.mxu0 0.0
    %3666 = vmatpush2.xpose.msra.mxu0 0.0
    %3667 = vmatprep.subr.mxu0 0.0
    %3668 = vmatpush2.xpose.msra.mxu0 0.0
    %3669 = vmatprep.subr.mxu0 0.0
    %3670 = vmatpush2.xpose.msra.mxu0 0.0
    %3671 = vmatprep.subr.mxu0 0.0
    %3672 = vmatpush2.xpose.msra.mxu0 0.0
    %3673 = vmatprep.subr.mxu0 0.0
    %3674 = vmatpush2.xpose.msra.mxu0 0.0
    %3675 = vmatprep.subr.mxu0 0.0
    %3676 = vmatpush2.xpose.msra.mxu0 0.0
    %3677 = vmatprep.subr.mxu0 0.0
    %3678 = vmatpush2.xpose.msra.mxu0 0.0
    %3679 = vmatprep.subr.mxu0 0.0
    %3680 = vmatpush2.xpose.msra.mxu0 0.0
    %3681 = vmatprep.subr.mxu0 0.0
    %3682 = vmatpush2.xpose.msra.mxu0 0.0
    %3683 = vmatprep.mubr.f32.mxu0 %v547
    %3684 = vmatmul.mubr.f32.gmra.mxu0 %v539
    %v3685 = vpop.f32.mrf.mxu0
    %v3686 = vadd.f32 %v3616, %v3685
    %v3687 = vpop.f32.mrf.mxu0
    %3688 = vdwg.mxu0
    %3689 = vmatprep.subr.mxu0 0.0
    %3690 = vmatpush1.xpose.msra.mxu0 0.0
    %3691 = vmatprep.subr.mxu0 0.0
    %3692 = vmatpush1.xpose.msra.mxu0 0.0
    %3693 = vmatprep.subr.mxu0 0.0
    %3694 = vmatpush1.xpose.msra.mxu0 0.0
    %3695 = vmatprep.subr.mxu0 0.0
    %3696 = vmatpush1.xpose.msra.mxu0 0.0
    %3697 = vmatprep.subr.mxu0 0.0
    %3698 = vmatpush1.xpose.msra.mxu0 0.0
    %3699 = vmatprep.subr.mxu0 0.0
    %3700 = vmatpush1.xpose.msra.mxu0 0.0
    %3701 = vmatprep.subr.mxu0 0.0
    %3702 = vmatpush1.xpose.msra.mxu0 0.0
    %3703 = vmatprep.subr.mxu0 0.0
    %3704 = vmatpush1.xpose.msra.mxu0 0.0
    %3705 = vmatprep.subr.mxu0 0.0
    %3706 = vmatpush1.xpose.msra.mxu0 0.0
    %3707 = vmatprep.subr.mxu0 0.0
    %3708 = vmatpush1.xpose.msra.mxu0 0.0
    %3709 = vmatprep.subr.mxu0 0.0
    %3710 = vmatpush1.xpose.msra.mxu0 0.0
    %3711 = vmatprep.subr.mxu0 0.0
    %3712 = vmatpush1.xpose.msra.mxu0 0.0
    %3713 = vmatprep.subr.mxu0 0.0
    %3714 = vmatpush1.xpose.msra.mxu0 0.0
    %3715 = vmatprep.subr.mxu0 0.0
    %3716 = vmatpush1.xpose.msra.mxu0 0.0
    %3717 = vmatprep.subr.mxu0 0.0
    %3718 = vmatpush1.xpose.msra.mxu0 0.0
    %3719 = vmatprep.subr.mxu0 %v141
    %3720 = vmatpush1.xpose.msra.mxu0 %v140
    %3721 = vmatprep.subr.mxu0 0.0
    %3722 = vmatpush2.xpose.msra.mxu0 0.0
    %3723 = vmatprep.subr.mxu0 0.0
    %3724 = vmatpush2.xpose.msra.mxu0 0.0
    %3725 = vmatprep.subr.mxu0 0.0
    %3726 = vmatpush2.xpose.msra.mxu0 0.0
    %3727 = vmatprep.subr.mxu0 0.0
    %3728 = vmatpush2.xpose.msra.mxu0 0.0
    %3729 = vmatprep.subr.mxu0 0.0
    %3730 = vmatpush2.xpose.msra.mxu0 0.0
    %3731 = vmatprep.subr.mxu0 0.0
    %3732 = vmatpush2.xpose.msra.mxu0 0.0
    %3733 = vmatprep.subr.mxu0 0.0
    %3734 = vmatpush2.xpose.msra.mxu0 0.0
    %3735 = vmatprep.subr.mxu0 0.0
    %3736 = vmatpush2.xpose.msra.mxu0 0.0
    %3737 = vmatprep.subr.mxu0 0.0
    %3738 = vmatpush2.xpose.msra.mxu0 0.0
    %3739 = vmatprep.subr.mxu0 0.0
    %3740 = vmatpush2.xpose.msra.mxu0 0.0
    %3741 = vmatprep.subr.mxu0 0.0
    %3742 = vmatpush2.xpose.msra.mxu0 0.0
    %3743 = vmatprep.subr.mxu0 0.0
    %3744 = vmatpush2.xpose.msra.mxu0 0.0
    %3745 = vmatprep.subr.mxu0 0.0
    %3746 = vmatpush2.xpose.msra.mxu0 0.0
    %3747 = vmatprep.subr.mxu0 0.0
    %3748 = vmatpush2.xpose.msra.mxu0 0.0
    %3749 = vmatprep.subr.mxu0 0.0
    %3750 = vmatpush2.xpose.msra.mxu0 0.0
    %3751 = vmatprep.subr.mxu0 0.0
    %3752 = vmatpush2.xpose.msra.mxu0 0.0
    %3753 = vmatprep.mubr.f32.mxu0 %v548
    %3754 = vmatmul.mubr.f32.gmra.mxu0 %v546
    %v3755 = vpop.f32.mrf.mxu0
    %v3756 = vadd.f32 %v3686, %v3755
    %v3757 = vpop.f32.mrf.mxu0
    %3758 = vdwg.mxu0
    %3759 = vmatprep.subr.mxu0 0.0
    %3760 = vmatpush1.xpose.msra.mxu0 0.0
    %3761 = vmatprep.subr.mxu0 0.0
    %3762 = vmatpush1.xpose.msra.mxu0 0.0
    %3763 = vmatprep.subr.mxu0 0.0
    %3764 = vmatpush1.xpose.msra.mxu0 0.0
    %3765 = vmatprep.subr.mxu0 0.0
    %3766 = vmatpush1.xpose.msra.mxu0 0.0
    %3767 = vmatprep.subr.mxu0 0.0
    %3768 = vmatpush1.xpose.msra.mxu0 0.0
    %3769 = vmatprep.subr.mxu0 0.0
    %3770 = vmatpush1.xpose.msra.mxu0 0.0
    %3771 = vmatprep.subr.mxu0 0.0
    %3772 = vmatpush1.xpose.msra.mxu0 0.0
    %3773 = vmatprep.subr.mxu0 0.0
    %3774 = vmatpush1.xpose.msra.mxu0 0.0
    %3775 = vmatprep.subr.mxu0 0.0
    %3776 = vmatpush1.xpose.msra.mxu0 0.0
    %3777 = vmatprep.subr.mxu0 0.0
    %3778 = vmatpush1.xpose.msra.mxu0 0.0
    %3779 = vmatprep.subr.mxu0 0.0
    %3780 = vmatpush1.xpose.msra.mxu0 0.0
    %3781 = vmatprep.subr.mxu0 0.0
    %3782 = vmatpush1.xpose.msra.mxu0 0.0
    %3783 = vmatprep.subr.mxu0 0.0
    %3784 = vmatpush1.xpose.msra.mxu0 0.0
    %3785 = vmatprep.subr.mxu0 0.0
    %3786 = vmatpush1.xpose.msra.mxu0 0.0
    %3787 = vmatprep.subr.mxu0 0.0
    %3788 = vmatpush1.xpose.msra.mxu0 0.0
    %3789 = vmatprep.subr.mxu0 %v143
    %3790 = vmatpush1.xpose.msra.mxu0 %v142
    %3791 = vmatprep.subr.mxu0 0.0
    %3792 = vmatpush2.xpose.msra.mxu0 0.0
    %3793 = vmatprep.subr.mxu0 0.0
    %3794 = vmatpush2.xpose.msra.mxu0 0.0
    %3795 = vmatprep.subr.mxu0 0.0
    %3796 = vmatpush2.xpose.msra.mxu0 0.0
    %3797 = vmatprep.subr.mxu0 0.0
    %3798 = vmatpush2.xpose.msra.mxu0 0.0
    %3799 = vmatprep.subr.mxu0 0.0
    %3800 = vmatpush2.xpose.msra.mxu0 0.0
    %3801 = vmatprep.subr.mxu0 0.0
    %3802 = vmatpush2.xpose.msra.mxu0 0.0
    %3803 = vmatprep.subr.mxu0 0.0
    %3804 = vmatpush2.xpose.msra.mxu0 0.0
    %3805 = vmatprep.subr.mxu0 0.0
    %3806 = vmatpush2.xpose.msra.mxu0 0.0
    %3807 = vmatprep.subr.mxu0 0.0
    %3808 = vmatpush2.xpose.msra.mxu0 0.0
    %3809 = vmatprep.subr.mxu0 0.0
    %3810 = vmatpush2.xpose.msra.mxu0 0.0
    %3811 = vmatprep.subr.mxu0 0.0
    %3812 = vmatpush2.xpose.msra.mxu0 0.0
    %3813 = vmatprep.subr.mxu0 0.0
    %3814 = vmatpush2.xpose.msra.mxu0 0.0
    %3815 = vmatprep.subr.mxu0 0.0
    %3816 = vmatpush2.xpose.msra.mxu0 0.0
    %3817 = vmatprep.subr.mxu0 0.0
    %3818 = vmatpush2.xpose.msra.mxu0 0.0
    %3819 = vmatprep.subr.mxu0 0.0
    %3820 = vmatpush2.xpose.msra.mxu0 0.0
    %3821 = vmatprep.subr.mxu0 0.0
    %3822 = vmatpush2.xpose.msra.mxu0 0.0
    %3823 = vmatprep.mubr.f32.mxu0 %v564
    %3824 = vmatmul.mubr.f32.gmra.mxu0 %v556
    %v3825 = vpop.f32.mrf.mxu0
    %v3826 = vadd.f32 %v3756, %v3825
    %v3827 = vpop.f32.mrf.mxu0
    %3828 = vdwg.mxu0
    %3829 = vmatprep.subr.mxu0 0.0
    %3830 = vmatpush1.xpose.msra.mxu0 0.0
    %3831 = vmatprep.subr.mxu0 0.0
    %3832 = vmatpush1.xpose.msra.mxu0 0.0
    %3833 = vmatprep.subr.mxu0 0.0
    %3834 = vmatpush1.xpose.msra.mxu0 0.0
    %3835 = vmatprep.subr.mxu0 0.0
    %3836 = vmatpush1.xpose.msra.mxu0 0.0
    %3837 = vmatprep.subr.mxu0 0.0
    %3838 = vmatpush1.xpose.msra.mxu0 0.0
    %3839 = vmatprep.subr.mxu0 0.0
    %3840 = vmatpush1.xpose.msra.mxu0 0.0
    %3841 = vmatprep.subr.mxu0 0.0
    %3842 = vmatpush1.xpose.msra.mxu0 0.0
    %3843 = vmatprep.subr.mxu0 0.0
    %3844 = vmatpush1.xpose.msra.mxu0 0.0
    %3845 = vmatprep.subr.mxu0 0.0
    %3846 = vmatpush1.xpose.msra.mxu0 0.0
    %3847 = vmatprep.subr.mxu0 0.0
    %3848 = vmatpush1.xpose.msra.mxu0 0.0
    %3849 = vmatprep.subr.mxu0 0.0
    %3850 = vmatpush1.xpose.msra.mxu0 0.0
    %3851 = vmatprep.subr.mxu0 0.0
    %3852 = vmatpush1.xpose.msra.mxu0 0.0
    %3853 = vmatprep.subr.mxu0 0.0
    %3854 = vmatpush1.xpose.msra.mxu0 0.0
    %3855 = vmatprep.subr.mxu0 0.0
    %3856 = vmatpush1.xpose.msra.mxu0 0.0
    %3857 = vmatprep.subr.mxu0 0.0
    %3858 = vmatpush1.xpose.msra.mxu0 0.0
    %3859 = vmatprep.subr.mxu0 %v145
    %3860 = vmatpush1.xpose.msra.mxu0 %v144
    %3861 = vmatprep.subr.mxu0 0.0
    %3862 = vmatpush2.xpose.msra.mxu0 0.0
    %3863 = vmatprep.subr.mxu0 0.0
    %3864 = vmatpush2.xpose.msra.mxu0 0.0
    %3865 = vmatprep.subr.mxu0 0.0
    %3866 = vmatpush2.xpose.msra.mxu0 0.0
    %3867 = vmatprep.subr.mxu0 0.0
    %3868 = vmatpush2.xpose.msra.mxu0 0.0
    %3869 = vmatprep.subr.mxu0 0.0
    %3870 = vmatpush2.xpose.msra.mxu0 0.0
    %3871 = vmatprep.subr.mxu0 0.0
    %3872 = vmatpush2.xpose.msra.mxu0 0.0
    %3873 = vmatprep.subr.mxu0 0.0
    %3874 = vmatpush2.xpose.msra.mxu0 0.0
    %3875 = vmatprep.subr.mxu0 0.0
    %3876 = vmatpush2.xpose.msra.mxu0 0.0
    %3877 = vmatprep.subr.mxu0 0.0
    %3878 = vmatpush2.xpose.msra.mxu0 0.0
    %3879 = vmatprep.subr.mxu0 0.0
    %3880 = vmatpush2.xpose.msra.mxu0 0.0
    %3881 = vmatprep.subr.mxu0 0.0
    %3882 = vmatpush2.xpose.msra.mxu0 0.0
    %3883 = vmatprep.subr.mxu0 0.0
    %3884 = vmatpush2.xpose.msra.mxu0 0.0
    %3885 = vmatprep.subr.mxu0 0.0
    %3886 = vmatpush2.xpose.msra.mxu0 0.0
    %3887 = vmatprep.subr.mxu0 0.0
    %3888 = vmatpush2.xpose.msra.mxu0 0.0
    %3889 = vmatprep.subr.mxu0 0.0
    %3890 = vmatpush2.xpose.msra.mxu0 0.0
    %3891 = vmatprep.subr.mxu0 0.0
    %3892 = vmatpush2.xpose.msra.mxu0 0.0
    %3893 = vmatprep.mubr.f32.mxu0 %v565
    %3894 = vmatmul.mubr.f32.gmra.mxu0 %v563
    %v3895 = vpop.f32.mrf.mxu0
    %v3896 = vadd.f32 %v3826, %v3895
    %v3897 = vpop.f32.mrf.mxu0
    %3898 = vdwg.mxu0
    %3899 = vmatprep.subr.mxu0 0.0
    %3900 = vmatpush1.xpose.msra.mxu0 0.0
    %3901 = vmatprep.subr.mxu0 0.0
    %3902 = vmatpush1.xpose.msra.mxu0 0.0
    %3903 = vmatprep.subr.mxu0 0.0
    %3904 = vmatpush1.xpose.msra.mxu0 0.0
    %3905 = vmatprep.subr.mxu0 0.0
    %3906 = vmatpush1.xpose.msra.mxu0 0.0
    %3907 = vmatprep.subr.mxu0 0.0
    %3908 = vmatpush1.xpose.msra.mxu0 0.0
    %3909 = vmatprep.subr.mxu0 0.0
    %3910 = vmatpush1.xpose.msra.mxu0 0.0
    %3911 = vmatprep.subr.mxu0 0.0
    %3912 = vmatpush1.xpose.msra.mxu0 0.0
    %3913 = vmatprep.subr.mxu0 0.0
    %3914 = vmatpush1.xpose.msra.mxu0 0.0
    %3915 = vmatprep.subr.mxu0 0.0
    %3916 = vmatpush1.xpose.msra.mxu0 0.0
    %3917 = vmatprep.subr.mxu0 0.0
    %3918 = vmatpush1.xpose.msra.mxu0 0.0
    %3919 = vmatprep.subr.mxu0 0.0
    %3920 = vmatpush1.xpose.msra.mxu0 0.0
    %3921 = vmatprep.subr.mxu0 0.0
    %3922 = vmatpush1.xpose.msra.mxu0 0.0
    %3923 = vmatprep.subr.mxu0 0.0
    %3924 = vmatpush1.xpose.msra.mxu0 0.0
    %3925 = vmatprep.subr.mxu0 0.0
    %3926 = vmatpush1.xpose.msra.mxu0 0.0
    %3927 = vmatprep.subr.mxu0 0.0
    %3928 = vmatpush1.xpose.msra.mxu0 0.0
    %3929 = vmatprep.subr.mxu0 %v147
    %3930 = vmatpush1.xpose.msra.mxu0 %v146
    %3931 = vmatprep.subr.mxu0 0.0
    %3932 = vmatpush2.xpose.msra.mxu0 0.0
    %3933 = vmatprep.subr.mxu0 0.0
    %3934 = vmatpush2.xpose.msra.mxu0 0.0
    %3935 = vmatprep.subr.mxu0 0.0
    %3936 = vmatpush2.xpose.msra.mxu0 0.0
    %3937 = vmatprep.subr.mxu0 0.0
    %3938 = vmatpush2.xpose.msra.mxu0 0.0
    %3939 = vmatprep.subr.mxu0 0.0
    %3940 = vmatpush2.xpose.msra.mxu0 0.0
    %3941 = vmatprep.subr.mxu0 0.0
    %3942 = vmatpush2.xpose.msra.mxu0 0.0
    %3943 = vmatprep.subr.mxu0 0.0
    %3944 = vmatpush2.xpose.msra.mxu0 0.0
    %3945 = vmatprep.subr.mxu0 0.0
    %3946 = vmatpush2.xpose.msra.mxu0 0.0
    %3947 = vmatprep.subr.mxu0 0.0
    %3948 = vmatpush2.xpose.msra.mxu0 0.0
    %3949 = vmatprep.subr.mxu0 0.0
    %3950 = vmatpush2.xpose.msra.mxu0 0.0
    %3951 = vmatprep.subr.mxu0 0.0
    %3952 = vmatpush2.xpose.msra.mxu0 0.0
    %3953 = vmatprep.subr.mxu0 0.0
    %3954 = vmatpush2.xpose.msra.mxu0 0.0
    %3955 = vmatprep.subr.mxu0 0.0
    %3956 = vmatpush2.xpose.msra.mxu0 0.0
    %3957 = vmatprep.subr.mxu0 0.0
    %3958 = vmatpush2.xpose.msra.mxu0 0.0
    %3959 = vmatprep.subr.mxu0 0.0
    %3960 = vmatpush2.xpose.msra.mxu0 0.0
    %3961 = vmatprep.subr.mxu0 0.0
    %3962 = vmatpush2.xpose.msra.mxu0 0.0
    %3963 = vmatprep.mubr.f32.mxu0 %v581
    %3964 = vmatmul.mubr.f32.gmra.mxu0 %v573
    %v3965 = vpop.f32.mrf.mxu0
    %v3966 = vadd.f32 %v3896, %v3965
    %v3967 = vpop.f32.mrf.mxu0
    %3968 = vdwg.mxu0
    %3969 = vmatprep.subr.mxu0 0.0
    %3970 = vmatpush1.xpose.msra.mxu0 0.0
    %3971 = vmatprep.subr.mxu0 0.0
    %3972 = vmatpush1.xpose.msra.mxu0 0.0
    %3973 = vmatprep.subr.mxu0 0.0
    %3974 = vmatpush1.xpose.msra.mxu0 0.0
    %3975 = vmatprep.subr.mxu0 0.0
    %3976 = vmatpush1.xpose.msra.mxu0 0.0
    %3977 = vmatprep.subr.mxu0 0.0
    %3978 = vmatpush1.xpose.msra.mxu0 0.0
    %3979 = vmatprep.subr.mxu0 0.0
    %3980 = vmatpush1.xpose.msra.mxu0 0.0
    %3981 = vmatprep.subr.mxu0 0.0
    %3982 = vmatpush1.xpose.msra.mxu0 0.0
    %3983 = vmatprep.subr.mxu0 0.0
    %3984 = vmatpush1.xpose.msra.mxu0 0.0
    %3985 = vmatprep.subr.mxu0 0.0
    %3986 = vmatpush1.xpose.msra.mxu0 0.0
    %3987 = vmatprep.subr.mxu0 0.0
    %3988 = vmatpush1.xpose.msra.mxu0 0.0
    %3989 = vmatprep.subr.mxu0 0.0
    %3990 = vmatpush1.xpose.msra.mxu0 0.0
    %3991 = vmatprep.subr.mxu0 0.0
    %3992 = vmatpush1.xpose.msra.mxu0 0.0
    %3993 = vmatprep.subr.mxu0 0.0
    %3994 = vmatpush1.xpose.msra.mxu0 0.0
    %3995 = vmatprep.subr.mxu0 0.0
    %3996 = vmatpush1.xpose.msra.mxu0 0.0
    %3997 = vmatprep.subr.mxu0 0.0
    %3998 = vmatpush1.xpose.msra.mxu0 0.0
    %3999 = vmatprep.subr.mxu0 %v149
    %4000 = vmatpush1.xpose.msra.mxu0 %v148
    %4001 = vmatprep.subr.mxu0 0.0
    %4002 = vmatpush2.xpose.msra.mxu0 0.0
    %4003 = vmatprep.subr.mxu0 0.0
    %4004 = vmatpush2.xpose.msra.mxu0 0.0
    %4005 = vmatprep.subr.mxu0 0.0
    %4006 = vmatpush2.xpose.msra.mxu0 0.0
    %4007 = vmatprep.subr.mxu0 0.0
    %4008 = vmatpush2.xpose.msra.mxu0 0.0
    %4009 = vmatprep.subr.mxu0 0.0
    %4010 = vmatpush2.xpose.msra.mxu0 0.0
    %4011 = vmatprep.subr.mxu0 0.0
    %4012 = vmatpush2.xpose.msra.mxu0 0.0
    %4013 = vmatprep.subr.mxu0 0.0
    %4014 = vmatpush2.xpose.msra.mxu0 0.0
    %4015 = vmatprep.subr.mxu0 0.0
    %4016 = vmatpush2.xpose.msra.mxu0 0.0
    %4017 = vmatprep.subr.mxu0 0.0
    %4018 = vmatpush2.xpose.msra.mxu0 0.0
    %4019 = vmatprep.subr.mxu0 0.0
    %4020 = vmatpush2.xpose.msra.mxu0 0.0
    %4021 = vmatprep.subr.mxu0 0.0
    %4022 = vmatpush2.xpose.msra.mxu0 0.0
    %4023 = vmatprep.subr.mxu0 0.0
    %4024 = vmatpush2.xpose.msra.mxu0 0.0
    %4025 = vmatprep.subr.mxu0 0.0
    %4026 = vmatpush2.xpose.msra.mxu0 0.0
    %4027 = vmatprep.subr.mxu0 0.0
    %4028 = vmatpush2.xpose.msra.mxu0 0.0
    %4029 = vmatprep.subr.mxu0 0.0
    %4030 = vmatpush2.xpose.msra.mxu0 0.0
    %4031 = vmatprep.subr.mxu0 0.0
    %4032 = vmatpush2.xpose.msra.mxu0 0.0
    %4033 = vmatprep.mubr.f32.mxu0 %v582
    %4034 = vmatmul.mubr.f32.gmra.mxu0 %v580
    %v4035 = vpop.f32.mrf.mxu0
    %v4036 = vadd.f32 %v3966, %v4035
    %v4037 = vpop.f32.mrf.mxu0
    %4038 = vdwg.mxu0
    %v4039 = vld [vmem:[%s3] sm:$0x1]
    %v4041 = vlaneseq
    %v4042 = vshrl.u32 %v4041, 7
    %v4043 = vsub.s32 0, %v4042
    %v4044 = vrot.slane %v4039, %v4043
    %v4046 = vadd.f32 %v4036, %v4044
    %vm4047 = vcmask 58368
    %4048 = vst.msk [vmem:[#allocation5] sm:$0x3] %vm4047, %v4046
    // Predicated region
    $region22: #{linear_add.1} parent=1 // pred_check
      _
    $region23: #{linear_add.1} parent=1 // pred_check_branch
      %4050 = sbr.rel (0) target = $region25
    $region24: #{linear_add.1} parent=1 // pred_region
      %s4052 = ssub.s32 32, 32
      %4053 = vsyncadd [#allocation4], %s4052
      %s4055 = sshll.u32 [#allocation5], 4
      %s4056 = int_to_ptr.vmem [resolvable:$true] %s4055
      %4058 = dma.vmem_to_hbm [thread:$0]  %s4056, 32, %s4, [#allocation4]
    $region25: #{linear_add.1} parent=1 // pred_fallthru
      _
    // Predicated region
    $region26: #{linear_add.1} parent=1 // pred_check
      _
    $region27: #{linear_add.1} parent=1 // pred_check_branch
      %4060 = sbr.rel (0) target = $region29
    $region28: #{linear_add.1} parent=1 // pred_region
      %4061 = dma.done [#allocation4], 32
    $region29: #{linear_add.1} parent=1 // pred_fallthru
      _
    %4062 = vsyncpa [#allocation3], 1
    %4063 = vsyncpa [#allocation4], 1

</llo_original>
